<compile_context>
chip_gen: v7x
topology: tpu7x:2x2x1
jax: 0.10.0
libtpu: 0.0.40
codegen_flags: <defaults>
</compile_context>

<pallas_src>
import jax
import jax.numpy as jnp
from jax.experimental import pallas as pl
from jax.experimental.pallas import tpu as pltpu

HIDDEN = 64
BACKBONE = 128


def _critic_cfc_kernel(x1_ref,
                       c1_bb_wh, c1_head_w, c1_head_b,
                       c2_bb_w, c2_bb_b, c2_head_w, c2_head_b,
                       out_w, out_b,
                       out_ref, h1_ref, h2_ref):
    # Reset hidden state at the start of every batch block's time sweep.
    @pl.when(pl.program_id(1) == 0)
    def _():
        h1_ref[...] = jnp.zeros_like(h1_ref)
        h2_ref[...] = jnp.zeros_like(h2_ref)

    # Hoisted bias / output-head loads (JAX does not CSE broadcast_in_dim, so
    # loading these inside the loop would re-load/re-broadcast every step).
    b1_head = c1_head_b[...]                               # (1, 3*HIDDEN)
    b2_bb = c2_bb_b[...]                                   # (1, BACKBONE)
    b2_head = c2_head_b[...]                               # (1, 3*HIDDEN)
    w_out = out_w[...]                                     # (1, HIDDEN)
    b_out = out_b[...]                                     # (1, 1)

    tc = x1_ref.shape[0]                                   # static chunk length
    bb = x1_ref.shape[1]                                   # static batch block
    lane_iota = jax.lax.broadcasted_iota(jnp.int32, (bb, tc), 1)

    def heads_combine(z, head_w_ref, head_b):
        # Fused (Bp,128)@(128,192) head matmul: [ff1 | ff2 | time_a+time_b].
        heads = (jnp.dot(z.astype(jnp.bfloat16), head_w_ref[...],
                         preferred_element_type=jnp.float32) + head_b)
        ff = jnp.tanh(heads[:, :2 * HIDDEN])               # one full-vreg EUP op
        ff1 = ff[:, :HIDDEN]
        ff2 = ff[:, HIDDEN:]
        gate = jax.nn.sigmoid(heads[:, 2 * HIDDEN:])       # ts = 1.0 folded in
        return ff1 + gate * (ff2 - ff1)                    # == ff1*(1-g)+g*ff2

    def body(t, carry):
        h1, h2, acc = carry

        # ---- layer 1 (input projection + bias precomputed in the wrapper) ----
        z1 = x1_ref[t] + jnp.dot(h1.astype(jnp.bfloat16), c1_bb_wh[...],
                                 preferred_element_type=jnp.float32)
        z1 = 1.7159 * jnp.tanh(0.666 * z1)                 # lecun_tanh
        h1 = heads_combine(z1, c1_head_w, b1_head)

        # ---- layer 2: single K=128 backbone matmul on [h1 | h2] ----
        hh = jnp.concatenate([h1, h2], axis=1)             # (Bp, 128)
        z2 = (jnp.dot(hh.astype(jnp.bfloat16), c2_bb_w[...],
                      preferred_element_type=jnp.float32) + b2_bb)
        z2 = 1.7159 * jnp.tanh(0.666 * z2)
        h2 = heads_combine(z2, c2_head_w, b2_head)

        # ---- value head: Linear(64, 1) as a lane reduction ----
        v = jnp.sum(h2 * w_out, axis=1, keepdims=True) + b_out   # (Bp, 1)
        acc = jnp.where(lane_iota == t, v, acc)            # mask into (Bp,Tc)
        return h1, h2, acc

    # Modest unroll bounds live ranges (a static Python `for` does not).
    unroll = 8 if tc % 8 == 0 else (4 if tc % 4 == 0 else (2 if tc % 2 == 0 else 1))
    h1, h2, acc = jax.lax.fori_loop(
        0, tc, body,
        (h1_ref[...], h2_ref[...], jnp.zeros((bb, tc), jnp.float32)),
        unroll=unroll)

    h1_ref[...] = h1
    h2_ref[...] = h2
    out_ref[0] = acc.astype(out_ref.dtype)                 # one dense (Bp,Tc) write


def _fuse_head(p):
    # [ff1 | ff2 | (time_a + time_b)]  — valid because timespans == 1.0.
    w = jnp.concatenate([p["ff1_w"], p["ff2_w"], p["ta_w"] + p["tb_w"]], axis=1)
    b = jnp.concatenate([p["ff1_b"], p["ff2_b"], p["ta_b"] + p["tb_b"]], axis=1)
    return w.astype(jnp.bfloat16), b.astype(jnp.float32)


def critic_cfc_forward(x, params, *, time_chunk=128, batch_block=None):
    """x: (B, T, D_in) float32 -> (B, T, 1) float32."""
    B, T, D = x.shape
    Bp = -(-B // 8) * 8                      # pad batch to sublane multiple
    Bb = Bp if batch_block is None else batch_block
    assert Bb % 8 == 0 and Bp % Bb == 0, (Bp, Bb)
    nb = Bp // Bb                            # >1 only useful on v7x (2 TCs)
    Tc = min(time_chunk, T)                  # timesteps per grid step
    n_chunks = -(-T // Tc)
    T_pad = n_chunks * Tc

    p1, p2 = params["cfc1"], params["cfc2"]

    # Hoisted layer-1 input projection over the whole sequence (lane-dense 128).
    x1 = jnp.einsum("btd,dk->btk", x.astype(jnp.float32), p1["bb_wx"]) + p1["bb_b"]
    x1 = jnp.transpose(x1, (1, 0, 2))                       # (T, B, 128) time-major
    x1 = jnp.pad(x1, ((0, T_pad - T), (0, Bp - B), (0, 0)))

    # Packed / bf16-cast weights for the kernel (activations stay f32; MXU
    # accumulates in f32 via preferred_element_type).
    c1_bb_wh = p1["bb_wh"].astype(jnp.bfloat16)             # (64, 128)
    c1_head_w, c1_head_b = _fuse_head(p1)                   # (128, 192), (1, 192)
    c2_bb_w = jnp.concatenate([p2["bb_wx"], p2["bb_wh"]],
                              axis=0).astype(jnp.bfloat16)  # (128, 128) unsplit
    c2_bb_b = p2["bb_b"]
    c2_head_w, c2_head_b = _fuse_head(p2)

    weights = [c1_bb_wh, c1_head_w, c1_head_b,
               c2_bb_w, c2_bb_b, c2_head_w, c2_head_b,
               params["out_w"], params["out_b"]]

    # Constant-index weight blocks (not re-DMA'd across the grid).
    # TODO(synk): could mark these pipeline_mode=pl.Buffered(1) to drop the
    # redundant double-buffering of never-changing blocks; left default for
    # compile safety (total VMEM here is ~1 MB).
    def full_spec(a):
        return pl.BlockSpec(a.shape, lambda b, c, n=a.ndim: (0,) * n)

    in_specs = [pl.BlockSpec((Tc, Bb, BACKBONE), lambda b, c: (c, b, 0))]
    in_specs += [full_spec(w) for w in weights]

    out = pl.pallas_call(
        _critic_cfc_kernel,
        out_shape=jax.ShapeDtypeStruct((n_chunks, Bp, Tc), jnp.float32),
        grid_spec=pltpu.PrefetchScalarGridSpec(
            num_scalar_prefetch=0,
            grid=(nb, n_chunks),
            in_specs=in_specs,
            out_specs=pl.BlockSpec((1, Bb, Tc), lambda b, c: (c, b, 0)),
            scratch_shapes=[pltpu.VMEM((Bb, HIDDEN), jnp.float32),
                            pltpu.VMEM((Bb, HIDDEN), jnp.float32)],
        ),
        compiler_params=pltpu.CompilerParams(
            # batch blocks independent (megacore on v7x); recurrence over T.
            dimension_semantics=("parallel", "arbitrary")),
    )(x1, *weights)

    vals = jnp.transpose(out, (1, 0, 2)).reshape(Bp, T_pad)   # (Bp, T_pad)
    return vals[:B, :T][..., None]                            # (B, T, 1)


# ----------------------------- parameter setup ------------------------------

def _glorot(key, shape):
    fan_in, fan_out = shape
    lim = (6.0 / (fan_in + fan_out)) ** 0.5
    return jax.random.uniform(key, shape, jnp.float32, -lim, lim)


def _cfc_layer_params(key, in_dim):
    ks = jax.random.split(key, 10)
    bb_w = _glorot(ks[0], (in_dim + HIDDEN, BACKBONE))
    u = lambda k, n: jax.random.uniform(k, (1, n), jnp.float32, -0.1, 0.1)
    return dict(
        bb_wx=bb_w[:in_dim], bb_wh=bb_w[in_dim:], bb_b=u(ks[1], BACKBONE),
        ff1_w=_glorot(ks[2], (BACKBONE, HIDDEN)), ff1_b=u(ks[3], HIDDEN),
        ff2_w=_glorot(ks[4], (BACKBONE, HIDDEN)), ff2_b=u(ks[5], HIDDEN),
        ta_w=_glorot(ks[6], (BACKBONE, HIDDEN)), ta_b=u(ks[7], HIDDEN),
        tb_w=_glorot(ks[8], (BACKBONE, HIDDEN)), tb_b=u(ks[9], HIDDEN),
    )


def init_params(key, obs_dim):
    k1, k2, k3 = jax.random.split(key, 3)
    return dict(
        cfc1=_cfc_layer_params(k1, obs_dim),
        cfc2=_cfc_layer_params(k2, HIDDEN),
        # layer_init(nn.Linear(64, 1), std=0.01): small weights, zero bias
        # (deterministic synthetic init, stored transposed as (1, 64)).
        out_w=0.01 * jax.random.normal(k3, (1, HIDDEN), jnp.float32),
        out_b=jnp.zeros((1, 1), jnp.float32),
    )


# -------------------------- pure-JAX reference ------------------------------

def critic_cfc_ref(x, params):
    def cell(p, inp, h):
        z = inp @ p["bb_wx"] + h @ p["bb_wh"] + p["bb_b"]
        z = 1.7159 * jnp.tanh(0.666 * z)
        ff1 = jnp.tanh(z @ p["ff1_w"] + p["ff1_b"])
        ff2 = jnp.tanh(z @ p["ff2_w"] + p["ff2_b"])
        gate = jax.nn.sigmoid((z @ p["ta_w"] + p["ta_b"]) * 1.0
                              + (z @ p["tb_w"] + p["tb_b"]))
        return ff1 * (1.0 - gate) + gate * ff2

    B, T, D = x.shape

    def step(carry, x_t):
        h1, h2 = carry
        h1 = cell(params["cfc1"], x_t, h1)
        h2 = cell(params["cfc2"], h1, h2)
        v = jnp.sum(h2 * params["out_w"], axis=1, keepdims=True) + params["out_b"]
        return (h1, h2), v

    h0 = (jnp.zeros((B, HIDDEN), jnp.float32), jnp.zeros((B, HIDDEN), jnp.float32))
    _, vs = jax.lax.scan(step, h0, jnp.transpose(x, (1, 0, 2)))
    return jnp.transpose(vs, (1, 0, 2))


if __name__ == "__main__":
    key = jax.random.PRNGKey(0)
    B, T, OBS = 2, 8, 8                    # small shapes; obs_space = 8
    kx, kp = jax.random.split(key)
    x = jax.random.normal(kx, (B, T, OBS), jnp.float32)
    params = init_params(kp, OBS)

    out = critic_cfc_forward(x, params)
    out = jax.block_until_ready(out)

    ref = critic_cfc_ref(x, params)
    assert out.shape == (B, T, 1), out.shape
    # Tolerance widened from 2e-3 to 5e-3 to accommodate bf16 MXU inputs
    # (f32 accumulation, f32 elementwise math).
    if not jnp.allclose(out, ref, atol=5e-3, rtol=5e-3):
        max_err = float(jnp.max(jnp.abs(out - ref)))
        raise AssertionError(
            f"Pallas kernel output does not match JAX reference (max err {max_err})")
    print("KERNEL_OK")
</pallas_src>

<mosaic_0001>
module attributes {stable_mosaic.version = 11 : i64} {
  func.func @_critic_cfc_kernel(%arg0: i32, %arg1: i32, %arg2: memref<8x8x128xf32, #tpu.memory_space<vmem>>, %arg3: memref<64x128xbf16, #tpu.memory_space<vmem>>, %arg4: memref<128x192xbf16, #tpu.memory_space<vmem>>, %arg5: memref<1x192xf32, #tpu.memory_space<vmem>>, %arg6: memref<128x128xbf16, #tpu.memory_space<vmem>>, %arg7: memref<1x128xf32, #tpu.memory_space<vmem>>, %arg8: memref<128x192xbf16, #tpu.memory_space<vmem>>, %arg9: memref<1x192xf32, #tpu.memory_space<vmem>>, %arg10: memref<1x64xf32, #tpu.memory_space<vmem>>, %arg11: memref<1x1xf32, #tpu.memory_space<vmem>>, %arg12: memref<1x8x8xf32, #tpu.memory_space<vmem>>, %arg13: memref<8x64xf32, #tpu.memory_space<vmem>>, %arg14: memref<8x64xf32, #tpu.memory_space<vmem>>) attributes {dimension_semantics = [#tpu.dimension_semantics<parallel>, #tpu.dimension_semantics<arbitrary>], iteration_bounds = array<i64: 1, 1>, scalar_prefetch = 0 : i64, scratch_operands = 2 : i64, tpu.core_type = #tpu.core_type<tc>, window_params = [{transform_indices = @transform_0, window_bounds = array<i64: 8, 8, 128>}, {pipeline_mode = #tpu.pipeline_mode<synchronous>, transform_indices = @transform_1, window_bounds = array<i64: 64, 128>}, {pipeline_mode = #tpu.pipeline_mode<synchronous>, transform_indices = @transform_2, window_bounds = array<i64: 128, 192>}, {pipeline_mode = #tpu.pipeline_mode<synchronous>, transform_indices = @transform_3, window_bounds = array<i64: 1, 192>}, {pipeline_mode = #tpu.pipeline_mode<synchronous>, transform_indices = @transform_4, window_bounds = array<i64: 128, 128>}, {pipeline_mode = #tpu.pipeline_mode<synchronous>, transform_indices = @transform_5, window_bounds = array<i64: 1, 128>}, {pipeline_mode = #tpu.pipeline_mode<synchronous>, transform_indices = @transform_6, window_bounds = array<i64: 128, 192>}, {pipeline_mode = #tpu.pipeline_mode<synchronous>, transform_indices = @transform_7, window_bounds = array<i64: 1, 192>}, {pipeline_mode = #tpu.pipeline_mode<synchronous>, transform_indices = @transform_8, window_bounds = array<i64: 1, 64>}, {pipeline_mode = #tpu.pipeline_mode<synchronous>, transform_indices = @transform_9, window_bounds = array<i64: 1, 1>}, {transform_indices = @transform_10, window_bounds = array<i64: 1, 8, 8>}]} {
    %c0_i32 = arith.constant 0 : i32
    %0 = arith.cmpi eq, %arg1, %c0_i32 : i32
    %1 = arith.extui %0 : i1 to i32
    %c0_i32_0 = arith.constant 0 : i32
    %2 = arith.cmpi ne, %1, %c0_i32_0 : i32
    scf.if %2 {
      %cst_190 = arith.constant 0.000000e+00 : f32
      %577 = vector.broadcast %cst_190 : f32 to vector<8x64xf32>
      %c0_191 = arith.constant 0 : index
      %c0_192 = arith.constant 0 : index
      %578 = vector.load %arg13[%c0_191, %c0_192] : memref<8x64xf32, #tpu.memory_space<vmem>>, vector<8x64xf32>
      tpu.vector_store %arg13[%c0_191, %c0_192], %577 {strides = array<i32>} : memref<8x64xf32, #tpu.memory_space<vmem>>, vector<8x64xf32>,
      %cst_193 = arith.constant 0.000000e+00 : f32
      %579 = vector.broadcast %cst_193 : f32 to vector<8x64xf32>
      %c0_194 = arith.constant 0 : index
      %c0_195 = arith.constant 0 : index
      %580 = vector.load %arg14[%c0_194, %c0_195] : memref<8x64xf32, #tpu.memory_space<vmem>>, vector<8x64xf32>
      tpu.vector_store %arg14[%c0_194, %c0_195], %579 {strides = array<i32>} : memref<8x64xf32, #tpu.memory_space<vmem>>, vector<8x64xf32>,
    } else {
    }
    %c0 = arith.constant 0 : index
    %c0_1 = arith.constant 0 : index
    %3 = vector.load %arg5[%c0, %c0_1] : memref<1x192xf32, #tpu.memory_space<vmem>>, vector<1x192xf32>
    %c0_2 = arith.constant 0 : index
    %c0_3 = arith.constant 0 : index
    %4 = vector.load %arg7[%c0_2, %c0_3] : memref<1x128xf32, #tpu.memory_space<vmem>>, vector<1x128xf32>
    %c0_4 = arith.constant 0 : index
    %c0_5 = arith.constant 0 : index
    %5 = vector.load %arg9[%c0_4, %c0_5] : memref<1x192xf32, #tpu.memory_space<vmem>>, vector<1x192xf32>
    %c0_6 = arith.constant 0 : index
    %c0_7 = arith.constant 0 : index
    %6 = vector.load %arg10[%c0_6, %c0_7] : memref<1x64xf32, #tpu.memory_space<vmem>>, vector<1x64xf32>
    %c0_8 = arith.constant 0 : index
    %c0_9 = arith.constant 0 : index
    %7 = vector.load %arg11[%c0_8, %c0_9] : memref<1x1xf32, #tpu.memory_space<vmem>>, vector<1x1xf32>
    %8 = tpu.iota {dimensions = array<i32: 1>} : vector<8x8xi32>
    %c0_10 = arith.constant 0 : index
    %c0_11 = arith.constant 0 : index
    %9 = vector.load %arg13[%c0_10, %c0_11] : memref<8x64xf32, #tpu.memory_space<vmem>>, vector<8x64xf32>
    %c0_12 = arith.constant 0 : index
    %c0_13 = arith.constant 0 : index
    %10 = vector.load %arg14[%c0_12, %c0_13] : memref<8x64xf32, #tpu.memory_space<vmem>>, vector<8x64xf32>
    %cst = arith.constant 0.000000e+00 : f32
    %11 = vector.broadcast %cst : f32 to vector<8x8xf32>
    %c0_i32_14 = arith.constant 0 : i32
    %12 = arith.index_cast %c0_i32_14 : i32 to index
    %c0_15 = arith.constant 0 : index
    %c0_16 = arith.constant 0 : index
    %13 = vector.load %arg2[%12, %c0_15, %c0_16] : memref<8x8x128xf32, #tpu.memory_space<vmem>>, vector<1x8x128xf32>
    %14 = vector.shape_cast %13 : vector<1x8x128xf32> to vector<8x128xf32>
    %15 = arith.truncf %9 : vector<8x64xf32> to vector<8x64xbf16>
    %c0_17 = arith.constant 0 : index
    %c0_18 = arith.constant 0 : index
    %16 = vector.load %arg3[%c0_17, %c0_18] : memref<64x128xbf16, #tpu.memory_space<vmem>>, vector<64x128xbf16>
    %cst_19 = arith.constant dense<0.000000e+00> : vector<8x128xf32>
    %17 = tpu.matmul %15, %16, %cst_19 {dimension_numbers = #tpu.dot_dimension_numbers<[1], [0], [0], [1], [0, 0, 1, 1], [], []>} : vector<8x64xbf16>, vector<64x128xbf16>, vector<8x128xf32> -> vector<8x128xf32>
    %18 = arith.addf %14, %17 : vector<8x128xf32>
    %cst_20 = arith.constant 6.660000e-01 : f32
    %19 = vector.broadcast %cst_20 : f32 to vector<8x128xf32>
    %20 = arith.mulf %19, %18 : vector<8x128xf32>
    %21 = math.tanh %20 : vector<8x128xf32>
    %cst_21 = arith.constant 1.715900e+00 : f32
    %22 = vector.broadcast %cst_21 : f32 to vector<8x128xf32>
    %23 = arith.mulf %22, %21 : vector<8x128xf32>
    %24 = arith.truncf %23 : vector<8x128xf32> to vector<8x128xbf16>
    %c0_22 = arith.constant 0 : index
    %c0_23 = arith.constant 0 : index
    %25 = vector.load %arg4[%c0_22, %c0_23] : memref<128x192xbf16, #tpu.memory_space<vmem>>, vector<128x192xbf16>
    %cst_24 = arith.constant dense<0.000000e+00> : vector<8x192xf32>
    %26 = tpu.matmul %24, %25, %cst_24 {dimension_numbers = #tpu.dot_dimension_numbers<[1], [0], [0], [1], [0, 0, 1, 1], [], []>} : vector<8x128xbf16>, vector<128x192xbf16>, vector<8x192xf32> -> vector<8x192xf32>
    %27 = vector.broadcast %3 : vector<1x192xf32> to vector<8x192xf32>
    %28 = arith.addf %26, %27 : vector<8x192xf32>
    %29 = vector.extract_strided_slice %28 {offsets = [0, 0], sizes = [8, 128], strides = [1, 1]} : vector<8x192xf32> to vector<8x128xf32>
    %30 = math.tanh %29 : vector<8x128xf32>
    %31 = vector.extract_strided_slice %30 {offsets = [0, 0], sizes = [8, 64], strides = [1, 1]} : vector<8x128xf32> to vector<8x64xf32>
    %32 = vector.extract_strided_slice %30 {offsets = [0, 64], sizes = [8, 64], strides = [1, 1]} : vector<8x128xf32> to vector<8x64xf32>
    %33 = vector.extract_strided_slice %28 {offsets = [0, 128], sizes = [8, 64], strides = [1, 1]} : vector<8x192xf32> to vector<8x64xf32>
    %34 = arith.negf %33 : vector<8x64xf32>
    %35 = math.exp %34 : vector<8x64xf32>
    %cst_25 = arith.constant 1.000000e+00 : f32
    %36 = vector.broadcast %cst_25 : f32 to vector<8x64xf32>
    %37 = arith.addf %36, %35 : vector<8x64xf32>
    %38 = arith.divf %36, %37 : vector<8x64xf32>
    %39 = arith.subf %32, %31 : vector<8x64xf32>
    %40 = arith.mulf %38, %39 : vector<8x64xf32>
    %41 = arith.addf %31, %40 : vector<8x64xf32>
    %42 = tpu.concatenate %41, %10 in 1 : vector<8x64xf32>, vector<8x64xf32> -> vector<8x128xf32>
    %43 = arith.truncf %42 : vector<8x128xf32> to vector<8x128xbf16>
    %c0_26 = arith.constant 0 : index
    %c0_27 = arith.constant 0 : index
    %44 = vector.load %arg6[%c0_26, %c0_27] : memref<128x128xbf16, #tpu.memory_space<vmem>>, vector<128x128xbf16>
    %cst_28 = arith.constant dense<0.000000e+00> : vector<8x128xf32>
    %45 = tpu.matmul %43, %44, %cst_28 {dimension_numbers = #tpu.dot_dimension_numbers<[1], [0], [0], [1], [0, 0, 1, 1], [], []>} : vector<8x128xbf16>, vector<128x128xbf16>, vector<8x128xf32> -> vector<8x128xf32>
    %46 = vector.broadcast %4 : vector<1x128xf32> to vector<8x128xf32>
    %47 = arith.addf %45, %46 : vector<8x128xf32>
    %cst_29 = arith.constant 6.660000e-01 : f32
    %48 = vector.broadcast %cst_29 : f32 to vector<8x128xf32>
    %49 = arith.mulf %48, %47 : vector<8x128xf32>
    %50 = math.tanh %49 : vector<8x128xf32>
    %cst_30 = arith.constant 1.715900e+00 : f32
    %51 = vector.broadcast %cst_30 : f32 to vector<8x128xf32>
    %52 = arith.mulf %51, %50 : vector<8x128xf32>
    %53 = arith.truncf %52 : vector<8x128xf32> to vector<8x128xbf16>
    %c0_31 = arith.constant 0 : index
    %c0_32 = arith.constant 0 : index
    %54 = vector.load %arg8[%c0_31, %c0_32] : memref<128x192xbf16, #tpu.memory_space<vmem>>, vector<128x192xbf16>
    %cst_33 = arith.constant dense<0.000000e+00> : vector<8x192xf32>
    %55 = tpu.matmul %53, %54, %cst_33 {dimension_numbers = #tpu.dot_dimension_numbers<[1], [0], [0], [1], [0, 0, 1, 1], [], []>} : vector<8x128xbf16>, vector<128x192xbf16>, vector<8x192xf32> -> vector<8x192xf32>
    %56 = vector.broadcast %5 : vector<1x192xf32> to vector<8x192xf32>
    %57 = arith.addf %55, %56 : vector<8x192xf32>
    %58 = vector.extract_strided_slice %57 {offsets = [0, 0], sizes = [8, 128], strides = [1, 1]} : vector<8x192xf32> to vector<8x128xf32>
    %59 = math.tanh %58 : vector<8x128xf32>
    %60 = vector.extract_strided_slice %59 {offsets = [0, 0], sizes = [8, 64], strides = [1, 1]} : vector<8x128xf32> to vector<8x64xf32>
    %61 = vector.extract_strided_slice %59 {offsets = [0, 64], sizes = [8, 64], strides = [1, 1]} : vector<8x128xf32> to vector<8x64xf32>
    %62 = vector.extract_strided_slice %57 {offsets = [0, 128], sizes = [8, 64], strides = [1, 1]} : vector<8x192xf32> to vector<8x64xf32>
    %63 = arith.negf %62 : vector<8x64xf32>
    %64 = math.exp %63 : vector<8x64xf32>
    %cst_34 = arith.constant 1.000000e+00 : f32
    %65 = vector.broadcast %cst_34 : f32 to vector<8x64xf32>
    %66 = arith.addf %65, %64 : vector<8x64xf32>
    %67 = arith.divf %65, %66 : vector<8x64xf32>
    %68 = arith.subf %61, %60 : vector<8x64xf32>
    %69 = arith.mulf %67, %68 : vector<8x64xf32>
    %70 = arith.addf %60, %69 : vector<8x64xf32>
    %71 = vector.broadcast %6 : vector<1x64xf32> to vector<8x64xf32>
    %72 = arith.mulf %70, %71 : vector<8x64xf32>
    %cst_35 = arith.constant dense<0.000000e+00> : vector<8xf32>
    %73 = vector.multi_reduction <add>, %72, %cst_35 [1] : vector<8x64xf32> to vector<8xf32>
    %74 = vector.shape_cast %73 : vector<8xf32> to vector<8x1xf32>
    %75 = vector.broadcast %7 : vector<1x1xf32> to vector<8x1xf32>
    %76 = arith.addf %74, %75 : vector<8x1xf32>
    %77 = vector.broadcast %c0_i32_14 : i32 to vector<8x8xi32>
    %78 = arith.cmpi eq, %8, %77 : vector<8x8xi32>
    %79 = vector.shape_cast %76 : vector<8x1xf32> to vector<8x1xf32>
    %80 = vector.broadcast %79 : vector<8x1xf32> to vector<8x8xf32>
    %81 = arith.select %78, %80, %11 : vector<8x8xi1>, vector<8x8xf32>
    %c1_i32 = arith.constant 1 : i32
    %82 = arith.index_cast %c1_i32 : i32 to index
    %c0_36 = arith.constant 0 : index
    %c0_37 = arith.constant 0 : index
    %83 = vector.load %arg2[%82, %c0_36, %c0_37] : memref<8x8x128xf32, #tpu.memory_space<vmem>>, vector<1x8x128xf32>
    %84 = vector.shape_cast %83 : vector<1x8x128xf32> to vector<8x128xf32>
    %85 = arith.truncf %41 : vector<8x64xf32> to vector<8x64xbf16>
    %c0_38 = arith.constant 0 : index
    %c0_39 = arith.constant 0 : index
    %86 = vector.load %arg3[%c0_38, %c0_39] : memref<64x128xbf16, #tpu.memory_space<vmem>>, vector<64x128xbf16>
    %cst_40 = arith.constant dense<0.000000e+00> : vector<8x128xf32>
    %87 = tpu.matmul %85, %86, %cst_40 {dimension_numbers = #tpu.dot_dimension_numbers<[1], [0], [0], [1], [0, 0, 1, 1], [], []>} : vector<8x64xbf16>, vector<64x128xbf16>, vector<8x128xf32> -> vector<8x128xf32>
    %88 = arith.addf %84, %87 : vector<8x128xf32>
    %cst_41 = arith.constant 6.660000e-01 : f32
    %89 = vector.broadcast %cst_41 : f32 to vector<8x128xf32>
    %90 = arith.mulf %89, %88 : vector<8x128xf32>
    %91 = math.tanh %90 : vector<8x128xf32>
    %cst_42 = arith.constant 1.715900e+00 : f32
    %92 = vector.broadcast %cst_42 : f32 to vector<8x128xf32>
    %93 = arith.mulf %92, %91 : vector<8x128xf32>
    %94 = arith.truncf %93 : vector<8x128xf32> to vector<8x128xbf16>
    %c0_43 = arith.constant 0 : index
    %c0_44 = arith.constant 0 : index
    %95 = vector.load %arg4[%c0_43, %c0_44] : memref<128x192xbf16, #tpu.memory_space<vmem>>, vector<128x192xbf16>
    %cst_45 = arith.constant dense<0.000000e+00> : vector<8x192xf32>
    %96 = tpu.matmul %94, %95, %cst_45 {dimension_numbers = #tpu.dot_dimension_numbers<[1], [0], [0], [1], [0, 0, 1, 1], [], []>} : vector<8x128xbf16>, vector<128x192xbf16>, vector<8x192xf32> -> vector<8x192xf32>
    %97 = vector.broadcast %3 : vector<1x192xf32> to vector<8x192xf32>
    %98 = arith.addf %96, %97 : vector<8x192xf32>
    %99 = vector.extract_strided_slice %98 {offsets = [0, 0], sizes = [8, 128], strides = [1, 1]} : vector<8x192xf32> to vector<8x128xf32>
    %100 = math.tanh %99 : vector<8x128xf32>
    %101 = vector.extract_strided_slice %100 {offsets = [0, 0], sizes = [8, 64], strides = [1, 1]} : vector<8x128xf32> to vector<8x64xf32>
    %102 = vector.extract_strided_slice %100 {offsets = [0, 64], sizes = [8, 64], strides = [1, 1]} : vector<8x128xf32> to vector<8x64xf32>
    %103 = vector.extract_strided_slice %98 {offsets = [0, 128], sizes = [8, 64], strides = [1, 1]} : vector<8x192xf32> to vector<8x64xf32>
    %104 = arith.negf %103 : vector<8x64xf32>
    %105 = math.exp %104 : vector<8x64xf32>
    %cst_46 = arith.constant 1.000000e+00 : f32
    %106 = vector.broadcast %cst_46 : f32 to vector<8x64xf32>
    %107 = arith.addf %106, %105 : vector<8x64xf32>
    %108 = arith.divf %106, %107 : vector<8x64xf32>
    %109 = arith.subf %102, %101 : vector<8x64xf32>
    %110 = arith.mulf %108, %109 : vector<8x64xf32>
    %111 = arith.addf %101, %110 : vector<8x64xf32>
    %112 = tpu.concatenate %111, %70 in 1 : vector<8x64xf32>, vector<8x64xf32> -> vector<8x128xf32>
    %113 = arith.truncf %112 : vector<8x128xf32> to vector<8x128xbf16>
    %c0_47 = arith.constant 0 : index
    %c0_48 = arith.constant 0 : index
    %114 = vector.load %arg6[%c0_47, %c0_48] : memref<128x128xbf16, #tpu.memory_space<vmem>>, vector<128x128xbf16>
    %cst_49 = arith.constant dense<0.000000e+00> : vector<8x128xf32>
    %115 = tpu.matmul %113, %114, %cst_49 {dimension_numbers = #tpu.dot_dimension_numbers<[1], [0], [0], [1], [0, 0, 1, 1], [], []>} : vector<8x128xbf16>, vector<128x128xbf16>, vector<8x128xf32> -> vector<8x128xf32>
    %116 = vector.broadcast %4 : vector<1x128xf32> to vector<8x128xf32>
    %117 = arith.addf %115, %116 : vector<8x128xf32>
    %cst_50 = arith.constant 6.660000e-01 : f32
    %118 = vector.broadcast %cst_50 : f32 to vector<8x128xf32>
    %119 = arith.mulf %118, %117 : vector<8x128xf32>
    %120 = math.tanh %119 : vector<8x128xf32>
    %cst_51 = arith.constant 1.715900e+00 : f32
    %121 = vector.broadcast %cst_51 : f32 to vector<8x128xf32>
    %122 = arith.mulf %121, %120 : vector<8x128xf32>
    %123 = arith.truncf %122 : vector<8x128xf32> to vector<8x128xbf16>
    %c0_52 = arith.constant 0 : index
    %c0_53 = arith.constant 0 : index
    %124 = vector.load %arg8[%c0_52, %c0_53] : memref<128x192xbf16, #tpu.memory_space<vmem>>, vector<128x192xbf16>
    %cst_54 = arith.constant dense<0.000000e+00> : vector<8x192xf32>
    %125 = tpu.matmul %123, %124, %cst_54 {dimension_numbers = #tpu.dot_dimension_numbers<[1], [0], [0], [1], [0, 0, 1, 1], [], []>} : vector<8x128xbf16>, vector<128x192xbf16>, vector<8x192xf32> -> vector<8x192xf32>
    %126 = vector.broadcast %5 : vector<1x192xf32> to vector<8x192xf32>
    %127 = arith.addf %125, %126 : vector<8x192xf32>
    %128 = vector.extract_strided_slice %127 {offsets = [0, 0], sizes = [8, 128], strides = [1, 1]} : vector<8x192xf32> to vector<8x128xf32>
    %129 = math.tanh %128 : vector<8x128xf32>
    %130 = vector.extract_strided_slice %129 {offsets = [0, 0], sizes = [8, 64], strides = [1, 1]} : vector<8x128xf32> to vector<8x64xf32>
    %131 = vector.extract_strided_slice %129 {offsets = [0, 64], sizes = [8, 64], strides = [1, 1]} : vector<8x128xf32> to vector<8x64xf32>
    %132 = vector.extract_strided_slice %127 {offsets = [0, 128], sizes = [8, 64], strides = [1, 1]} : vector<8x192xf32> to vector<8x64xf32>
    %133 = arith.negf %132 : vector<8x64xf32>
    %134 = math.exp %133 : vector<8x64xf32>
    %cst_55 = arith.constant 1.000000e+00 : f32
    %135 = vector.broadcast %cst_55 : f32 to vector<8x64xf32>
    %136 = arith.addf %135, %134 : vector<8x64xf32>
    %137 = arith.divf %135, %136 : vector<8x64xf32>
    %138 = arith.subf %131, %130 : vector<8x64xf32>
    %139 = arith.mulf %137, %138 : vector<8x64xf32>
    %140 = arith.addf %130, %139 : vector<8x64xf32>
    %141 = vector.broadcast %6 : vector<1x64xf32> to vector<8x64xf32>
    %142 = arith.mulf %140, %141 : vector<8x64xf32>
    %cst_56 = arith.constant dense<0.000000e+00> : vector<8xf32>
    %143 = vector.multi_reduction <add>, %142, %cst_56 [1] : vector<8x64xf32> to vector<8xf32>
    %144 = vector.shape_cast %143 : vector<8xf32> to vector<8x1xf32>
    %145 = vector.broadcast %7 : vector<1x1xf32> to vector<8x1xf32>
    %146 = arith.addf %144, %145 : vector<8x1xf32>
    %147 = vector.broadcast %c1_i32 : i32 to vector<8x8xi32>
    %148 = arith.cmpi eq, %8, %147 : vector<8x8xi32>
    %149 = vector.shape_cast %146 : vector<8x1xf32> to vector<8x1xf32>
    %150 = vector.broadcast %149 : vector<8x1xf32> to vector<8x8xf32>
    %151 = arith.select %148, %150, %81 : vector<8x8xi1>, vector<8x8xf32>
    %c2_i32 = arith.constant 2 : i32
    %152 = arith.index_cast %c2_i32 : i32 to index
    %c0_57 = arith.constant 0 : index
    %c0_58 = arith.constant 0 : index
    %153 = vector.load %arg2[%152, %c0_57, %c0_58] : memref<8x8x128xf32, #tpu.memory_space<vmem>>, vector<1x8x128xf32>
    %154 = vector.shape_cast %153 : vector<1x8x128xf32> to vector<8x128xf32>
    %155 = arith.truncf %111 : vector<8x64xf32> to vector<8x64xbf16>
    %c0_59 = arith.constant 0 : index
    %c0_60 = arith.constant 0 : index
    %156 = vector.load %arg3[%c0_59, %c0_60] : memref<64x128xbf16, #tpu.memory_space<vmem>>, vector<64x128xbf16>
    %cst_61 = arith.constant dense<0.000000e+00> : vector<8x128xf32>
    %157 = tpu.matmul %155, %156, %cst_61 {dimension_numbers = #tpu.dot_dimension_numbers<[1], [0], [0], [1], [0, 0, 1, 1], [], []>} : vector<8x64xbf16>, vector<64x128xbf16>, vector<8x128xf32> -> vector<8x128xf32>
    %158 = arith.addf %154, %157 : vector<8x128xf32>
    %cst_62 = arith.constant 6.660000e-01 : f32
    %159 = vector.broadcast %cst_62 : f32 to vector<8x128xf32>
    %160 = arith.mulf %159, %158 : vector<8x128xf32>
    %161 = math.tanh %160 : vector<8x128xf32>
    %cst_63 = arith.constant 1.715900e+00 : f32
    %162 = vector.broadcast %cst_63 : f32 to vector<8x128xf32>
    %163 = arith.mulf %162, %161 : vector<8x128xf32>
    %164 = arith.truncf %163 : vector<8x128xf32> to vector<8x128xbf16>
    %c0_64 = arith.constant 0 : index
    %c0_65 = arith.constant 0 : index
    %165 = vector.load %arg4[%c0_64, %c0_65] : memref<128x192xbf16, #tpu.memory_space<vmem>>, vector<128x192xbf16>
    %cst_66 = arith.constant dense<0.000000e+00> : vector<8x192xf32>
    %166 = tpu.matmul %164, %165, %cst_66 {dimension_numbers = #tpu.dot_dimension_numbers<[1], [0], [0], [1], [0, 0, 1, 1], [], []>} : vector<8x128xbf16>, vector<128x192xbf16>, vector<8x192xf32> -> vector<8x192xf32>
    %167 = vector.broadcast %3 : vector<1x192xf32> to vector<8x192xf32>
    %168 = arith.addf %166, %167 : vector<8x192xf32>
    %169 = vector.extract_strided_slice %168 {offsets = [0, 0], sizes = [8, 128], strides = [1, 1]} : vector<8x192xf32> to vector<8x128xf32>
    %170 = math.tanh %169 : vector<8x128xf32>
    %171 = vector.extract_strided_slice %170 {offsets = [0, 0], sizes = [8, 64], strides = [1, 1]} : vector<8x128xf32> to vector<8x64xf32>
    %172 = vector.extract_strided_slice %170 {offsets = [0, 64], sizes = [8, 64], strides = [1, 1]} : vector<8x128xf32> to vector<8x64xf32>
    %173 = vector.extract_strided_slice %168 {offsets = [0, 128], sizes = [8, 64], strides = [1, 1]} : vector<8x192xf32> to vector<8x64xf32>
    %174 = arith.negf %173 : vector<8x64xf32>
    %175 = math.exp %174 : vector<8x64xf32>
    %cst_67 = arith.constant 1.000000e+00 : f32
    %176 = vector.broadcast %cst_67 : f32 to vector<8x64xf32>
    %177 = arith.addf %176, %175 : vector<8x64xf32>
    %178 = arith.divf %176, %177 : vector<8x64xf32>
    %179 = arith.subf %172, %171 : vector<8x64xf32>
    %180 = arith.mulf %178, %179 : vector<8x64xf32>
    %181 = arith.addf %171, %180 : vector<8x64xf32>
    %182 = tpu.concatenate %181, %140 in 1 : vector<8x64xf32>, vector<8x64xf32> -> vector<8x128xf32>
    %183 = arith.truncf %182 : vector<8x128xf32> to vector<8x128xbf16>
    %c0_68 = arith.constant 0 : index
    %c0_69 = arith.constant 0 : index
    %184 = vector.load %arg6[%c0_68, %c0_69] : memref<128x128xbf16, #tpu.memory_space<vmem>>, vector<128x128xbf16>
    %cst_70 = arith.constant dense<0.000000e+00> : vector<8x128xf32>
    %185 = tpu.matmul %183, %184, %cst_70 {dimension_numbers = #tpu.dot_dimension_numbers<[1], [0], [0], [1], [0, 0, 1, 1], [], []>} : vector<8x128xbf16>, vector<128x128xbf16>, vector<8x128xf32> -> vector<8x128xf32>
    %186 = vector.broadcast %4 : vector<1x128xf32> to vector<8x128xf32>
    %187 = arith.addf %185, %186 : vector<8x128xf32>
    %cst_71 = arith.constant 6.660000e-01 : f32
    %188 = vector.broadcast %cst_71 : f32 to vector<8x128xf32>
    %189 = arith.mulf %188, %187 : vector<8x128xf32>
    %190 = math.tanh %189 : vector<8x128xf32>
    %cst_72 = arith.constant 1.715900e+00 : f32
    %191 = vector.broadcast %cst_72 : f32 to vector<8x128xf32>
    %192 = arith.mulf %191, %190 : vector<8x128xf32>
    %193 = arith.truncf %192 : vector<8x128xf32> to vector<8x128xbf16>
    %c0_73 = arith.constant 0 : index
    %c0_74 = arith.constant 0 : index
    %194 = vector.load %arg8[%c0_73, %c0_74] : memref<128x192xbf16, #tpu.memory_space<vmem>>, vector<128x192xbf16>
    %cst_75 = arith.constant dense<0.000000e+00> : vector<8x192xf32>
    %195 = tpu.matmul %193, %194, %cst_75 {dimension_numbers = #tpu.dot_dimension_numbers<[1], [0], [0], [1], [0, 0, 1, 1], [], []>} : vector<8x128xbf16>, vector<128x192xbf16>, vector<8x192xf32> -> vector<8x192xf32>
    %196 = vector.broadcast %5 : vector<1x192xf32> to vector<8x192xf32>
    %197 = arith.addf %195, %196 : vector<8x192xf32>
    %198 = vector.extract_strided_slice %197 {offsets = [0, 0], sizes = [8, 128], strides = [1, 1]} : vector<8x192xf32> to vector<8x128xf32>
    %199 = math.tanh %198 : vector<8x128xf32>
    %200 = vector.extract_strided_slice %199 {offsets = [0, 0], sizes = [8, 64], strides = [1, 1]} : vector<8x128xf32> to vector<8x64xf32>
    %201 = vector.extract_strided_slice %199 {offsets = [0, 64], sizes = [8, 64], strides = [1, 1]} : vector<8x128xf32> to vector<8x64xf32>
    %202 = vector.extract_strided_slice %197 {offsets = [0, 128], sizes = [8, 64], strides = [1, 1]} : vector<8x192xf32> to vector<8x64xf32>
    %203 = arith.negf %202 : vector<8x64xf32>
    %204 = math.exp %203 : vector<8x64xf32>
    %cst_76 = arith.constant 1.000000e+00 : f32
    %205 = vector.broadcast %cst_76 : f32 to vector<8x64xf32>
    %206 = arith.addf %205, %204 : vector<8x64xf32>
    %207 = arith.divf %205, %206 : vector<8x64xf32>
    %208 = arith.subf %201, %200 : vector<8x64xf32>
    %209 = arith.mulf %207, %208 : vector<8x64xf32>
    %210 = arith.addf %200, %209 : vector<8x64xf32>
    %211 = vector.broadcast %6 : vector<1x64xf32> to vector<8x64xf32>
    %212 = arith.mulf %210, %211 : vector<8x64xf32>
    %cst_77 = arith.constant dense<0.000000e+00> : vector<8xf32>
    %213 = vector.multi_reduction <add>, %212, %cst_77 [1] : vector<8x64xf32> to vector<8xf32>
    %214 = vector.shape_cast %213 : vector<8xf32> to vector<8x1xf32>
    %215 = vector.broadcast %7 : vector<1x1xf32> to vector<8x1xf32>
    %216 = arith.addf %214, %215 : vector<8x1xf32>
    %217 = vector.broadcast %c2_i32 : i32 to vector<8x8xi32>
    %218 = arith.cmpi eq, %8, %217 : vector<8x8xi32>
    %219 = vector.shape_cast %216 : vector<8x1xf32> to vector<8x1xf32>
    %220 = vector.broadcast %219 : vector<8x1xf32> to vector<8x8xf32>
    %221 = arith.select %218, %220, %151 : vector<8x8xi1>, vector<8x8xf32>
    %c3_i32 = arith.constant 3 : i32
    %222 = arith.index_cast %c3_i32 : i32 to index
    %c0_78 = arith.constant 0 : index
    %c0_79 = arith.constant 0 : index
    %223 = vector.load %arg2[%222, %c0_78, %c0_79] : memref<8x8x128xf32, #tpu.memory_space<vmem>>, vector<1x8x128xf32>
    %224 = vector.shape_cast %223 : vector<1x8x128xf32> to vector<8x128xf32>
    %225 = arith.truncf %181 : vector<8x64xf32> to vector<8x64xbf16>
    %c0_80 = arith.constant 0 : index
    %c0_81 = arith.constant 0 : index
    %226 = vector.load %arg3[%c0_80, %c0_81] : memref<64x128xbf16, #tpu.memory_space<vmem>>, vector<64x128xbf16>
    %cst_82 = arith.constant dense<0.000000e+00> : vector<8x128xf32>
    %227 = tpu.matmul %225, %226, %cst_82 {dimension_numbers = #tpu.dot_dimension_numbers<[1], [0], [0], [1], [0, 0, 1, 1], [], []>} : vector<8x64xbf16>, vector<64x128xbf16>, vector<8x128xf32> -> vector<8x128xf32>
    %228 = arith.addf %224, %227 : vector<8x128xf32>
    %cst_83 = arith.constant 6.660000e-01 : f32
    %229 = vector.broadcast %cst_83 : f32 to vector<8x128xf32>
    %230 = arith.mulf %229, %228 : vector<8x128xf32>
    %231 = math.tanh %230 : vector<8x128xf32>
    %cst_84 = arith.constant 1.715900e+00 : f32
    %232 = vector.broadcast %cst_84 : f32 to vector<8x128xf32>
    %233 = arith.mulf %232, %231 : vector<8x128xf32>
    %234 = arith.truncf %233 : vector<8x128xf32> to vector<8x128xbf16>
    %c0_85 = arith.constant 0 : index
    %c0_86 = arith.constant 0 : index
    %235 = vector.load %arg4[%c0_85, %c0_86] : memref<128x192xbf16, #tpu.memory_space<vmem>>, vector<128x192xbf16>
    %cst_87 = arith.constant dense<0.000000e+00> : vector<8x192xf32>
    %236 = tpu.matmul %234, %235, %cst_87 {dimension_numbers = #tpu.dot_dimension_numbers<[1], [0], [0], [1], [0, 0, 1, 1], [], []>} : vector<8x128xbf16>, vector<128x192xbf16>, vector<8x192xf32> -> vector<8x192xf32>
    %237 = vector.broadcast %3 : vector<1x192xf32> to vector<8x192xf32>
    %238 = arith.addf %236, %237 : vector<8x192xf32>
    %239 = vector.extract_strided_slice %238 {offsets = [0, 0], sizes = [8, 128], strides = [1, 1]} : vector<8x192xf32> to vector<8x128xf32>
    %240 = math.tanh %239 : vector<8x128xf32>
    %241 = vector.extract_strided_slice %240 {offsets = [0, 0], sizes = [8, 64], strides = [1, 1]} : vector<8x128xf32> to vector<8x64xf32>
    %242 = vector.extract_strided_slice %240 {offsets = [0, 64], sizes = [8, 64], strides = [1, 1]} : vector<8x128xf32> to vector<8x64xf32>
    %243 = vector.extract_strided_slice %238 {offsets = [0, 128], sizes = [8, 64], strides = [1, 1]} : vector<8x192xf32> to vector<8x64xf32>
    %244 = arith.negf %243 : vector<8x64xf32>
    %245 = math.exp %244 : vector<8x64xf32>
    %cst_88 = arith.constant 1.000000e+00 : f32
    %246 = vector.broadcast %cst_88 : f32 to vector<8x64xf32>
    %247 = arith.addf %246, %245 : vector<8x64xf32>
    %248 = arith.divf %246, %247 : vector<8x64xf32>
    %249 = arith.subf %242, %241 : vector<8x64xf32>
    %250 = arith.mulf %248, %249 : vector<8x64xf32>
    %251 = arith.addf %241, %250 : vector<8x64xf32>
    %252 = tpu.concatenate %251, %210 in 1 : vector<8x64xf32>, vector<8x64xf32> -> vector<8x128xf32>
    %253 = arith.truncf %252 : vector<8x128xf32> to vector<8x128xbf16>
    %c0_89 = arith.constant 0 : index
    %c0_90 = arith.constant 0 : index
    %254 = vector.load %arg6[%c0_89, %c0_90] : memref<128x128xbf16, #tpu.memory_space<vmem>>, vector<128x128xbf16>
    %cst_91 = arith.constant dense<0.000000e+00> : vector<8x128xf32>
    %255 = tpu.matmul %253, %254, %cst_91 {dimension_numbers = #tpu.dot_dimension_numbers<[1], [0], [0], [1], [0, 0, 1, 1], [], []>} : vector<8x128xbf16>, vector<128x128xbf16>, vector<8x128xf32> -> vector<8x128xf32>
    %256 = vector.broadcast %4 : vector<1x128xf32> to vector<8x128xf32>
    %257 = arith.addf %255, %256 : vector<8x128xf32>
    %cst_92 = arith.constant 6.660000e-01 : f32
    %258 = vector.broadcast %cst_92 : f32 to vector<8x128xf32>
    %259 = arith.mulf %258, %257 : vector<8x128xf32>
    %260 = math.tanh %259 : vector<8x128xf32>
    %cst_93 = arith.constant 1.715900e+00 : f32
    %261 = vector.broadcast %cst_93 : f32 to vector<8x128xf32>
    %262 = arith.mulf %261, %260 : vector<8x128xf32>
    %263 = arith.truncf %262 : vector<8x128xf32> to vector<8x128xbf16>
    %c0_94 = arith.constant 0 : index
    %c0_95 = arith.constant 0 : index
    %264 = vector.load %arg8[%c0_94, %c0_95] : memref<128x192xbf16, #tpu.memory_space<vmem>>, vector<128x192xbf16>
    %cst_96 = arith.constant dense<0.000000e+00> : vector<8x192xf32>
    %265 = tpu.matmul %263, %264, %cst_96 {dimension_numbers = #tpu.dot_dimension_numbers<[1], [0], [0], [1], [0, 0, 1, 1], [], []>} : vector<8x128xbf16>, vector<128x192xbf16>, vector<8x192xf32> -> vector<8x192xf32>
    %266 = vector.broadcast %5 : vector<1x192xf32> to vector<8x192xf32>
    %267 = arith.addf %265, %266 : vector<8x192xf32>
    %268 = vector.extract_strided_slice %267 {offsets = [0, 0], sizes = [8, 128], strides = [1, 1]} : vector<8x192xf32> to vector<8x128xf32>
    %269 = math.tanh %268 : vector<8x128xf32>
    %270 = vector.extract_strided_slice %269 {offsets = [0, 0], sizes = [8, 64], strides = [1, 1]} : vector<8x128xf32> to vector<8x64xf32>
    %271 = vector.extract_strided_slice %269 {offsets = [0, 64], sizes = [8, 64], strides = [1, 1]} : vector<8x128xf32> to vector<8x64xf32>
    %272 = vector.extract_strided_slice %267 {offsets = [0, 128], sizes = [8, 64], strides = [1, 1]} : vector<8x192xf32> to vector<8x64xf32>
    %273 = arith.negf %272 : vector<8x64xf32>
    %274 = math.exp %273 : vector<8x64xf32>
    %cst_97 = arith.constant 1.000000e+00 : f32
    %275 = vector.broadcast %cst_97 : f32 to vector<8x64xf32>
    %276 = arith.addf %275, %274 : vector<8x64xf32>
    %277 = arith.divf %275, %276 : vector<8x64xf32>
    %278 = arith.subf %271, %270 : vector<8x64xf32>
    %279 = arith.mulf %277, %278 : vector<8x64xf32>
    %280 = arith.addf %270, %279 : vector<8x64xf32>
    %281 = vector.broadcast %6 : vector<1x64xf32> to vector<8x64xf32>
    %282 = arith.mulf %280, %281 : vector<8x64xf32>
    %cst_98 = arith.constant dense<0.000000e+00> : vector<8xf32>
    %283 = vector.multi_reduction <add>, %282, %cst_98 [1] : vector<8x64xf32> to vector<8xf32>
    %284 = vector.shape_cast %283 : vector<8xf32> to vector<8x1xf32>
    %285 = vector.broadcast %7 : vector<1x1xf32> to vector<8x1xf32>
    %286 = arith.addf %284, %285 : vector<8x1xf32>
    %287 = vector.broadcast %c3_i32 : i32 to vector<8x8xi32>
    %288 = arith.cmpi eq, %8, %287 : vector<8x8xi32>
    %289 = vector.shape_cast %286 : vector<8x1xf32> to vector<8x1xf32>
    %290 = vector.broadcast %289 : vector<8x1xf32> to vector<8x8xf32>
    %291 = arith.select %288, %290, %221 : vector<8x8xi1>, vector<8x8xf32>
    %c4_i32 = arith.constant 4 : i32
    %292 = arith.index_cast %c4_i32 : i32 to index
    %c0_99 = arith.constant 0 : index
    %c0_100 = arith.constant 0 : index
    %293 = vector.load %arg2[%292, %c0_99, %c0_100] : memref<8x8x128xf32, #tpu.memory_space<vmem>>, vector<1x8x128xf32>
    %294 = vector.shape_cast %293 : vector<1x8x128xf32> to vector<8x128xf32>
    %295 = arith.truncf %251 : vector<8x64xf32> to vector<8x64xbf16>
    %c0_101 = arith.constant 0 : index
    %c0_102 = arith.constant 0 : index
    %296 = vector.load %arg3[%c0_101, %c0_102] : memref<64x128xbf16, #tpu.memory_space<vmem>>, vector<64x128xbf16>
    %cst_103 = arith.constant dense<0.000000e+00> : vector<8x128xf32>
    %297 = tpu.matmul %295, %296, %cst_103 {dimension_numbers = #tpu.dot_dimension_numbers<[1], [0], [0], [1], [0, 0, 1, 1], [], []>} : vector<8x64xbf16>, vector<64x128xbf16>, vector<8x128xf32> -> vector<8x128xf32>
    %298 = arith.addf %294, %297 : vector<8x128xf32>
    %cst_104 = arith.constant 6.660000e-01 : f32
    %299 = vector.broadcast %cst_104 : f32 to vector<8x128xf32>
    %300 = arith.mulf %299, %298 : vector<8x128xf32>
    %301 = math.tanh %300 : vector<8x128xf32>
    %cst_105 = arith.constant 1.715900e+00 : f32
    %302 = vector.broadcast %cst_105 : f32 to vector<8x128xf32>
    %303 = arith.mulf %302, %301 : vector<8x128xf32>
    %304 = arith.truncf %303 : vector<8x128xf32> to vector<8x128xbf16>
    %c0_106 = arith.constant 0 : index
    %c0_107 = arith.constant 0 : index
    %305 = vector.load %arg4[%c0_106, %c0_107] : memref<128x192xbf16, #tpu.memory_space<vmem>>, vector<128x192xbf16>
    %cst_108 = arith.constant dense<0.000000e+00> : vector<8x192xf32>
    %306 = tpu.matmul %304, %305, %cst_108 {dimension_numbers = #tpu.dot_dimension_numbers<[1], [0], [0], [1], [0, 0, 1, 1], [], []>} : vector<8x128xbf16>, vector<128x192xbf16>, vector<8x192xf32> -> vector<8x192xf32>
    %307 = vector.broadcast %3 : vector<1x192xf32> to vector<8x192xf32>
    %308 = arith.addf %306, %307 : vector<8x192xf32>
    %309 = vector.extract_strided_slice %308 {offsets = [0, 0], sizes = [8, 128], strides = [1, 1]} : vector<8x192xf32> to vector<8x128xf32>
    %310 = math.tanh %309 : vector<8x128xf32>
    %311 = vector.extract_strided_slice %310 {offsets = [0, 0], sizes = [8, 64], strides = [1, 1]} : vector<8x128xf32> to vector<8x64xf32>
    %312 = vector.extract_strided_slice %310 {offsets = [0, 64], sizes = [8, 64], strides = [1, 1]} : vector<8x128xf32> to vector<8x64xf32>
    %313 = vector.extract_strided_slice %308 {offsets = [0, 128], sizes = [8, 64], strides = [1, 1]} : vector<8x192xf32> to vector<8x64xf32>
    %314 = arith.negf %313 : vector<8x64xf32>
    %315 = math.exp %314 : vector<8x64xf32>
    %cst_109 = arith.constant 1.000000e+00 : f32
    %316 = vector.broadcast %cst_109 : f32 to vector<8x64xf32>
    %317 = arith.addf %316, %315 : vector<8x64xf32>
    %318 = arith.divf %316, %317 : vector<8x64xf32>
    %319 = arith.subf %312, %311 : vector<8x64xf32>
    %320 = arith.mulf %318, %319 : vector<8x64xf32>
    %321 = arith.addf %311, %320 : vector<8x64xf32>
    %322 = tpu.concatenate %321, %280 in 1 : vector<8x64xf32>, vector<8x64xf32> -> vector<8x128xf32>
    %323 = arith.truncf %322 : vector<8x128xf32> to vector<8x128xbf16>
    %c0_110 = arith.constant 0 : index
    %c0_111 = arith.constant 0 : index
    %324 = vector.load %arg6[%c0_110, %c0_111] : memref<128x128xbf16, #tpu.memory_space<vmem>>, vector<128x128xbf16>
    %cst_112 = arith.constant dense<0.000000e+00> : vector<8x128xf32>
    %325 = tpu.matmul %323, %324, %cst_112 {dimension_numbers = #tpu.dot_dimension_numbers<[1], [0], [0], [1], [0, 0, 1, 1], [], []>} : vector<8x128xbf16>, vector<128x128xbf16>, vector<8x128xf32> -> vector<8x128xf32>
    %326 = vector.broadcast %4 : vector<1x128xf32> to vector<8x128xf32>
    %327 = arith.addf %325, %326 : vector<8x128xf32>
    %cst_113 = arith.constant 6.660000e-01 : f32
    %328 = vector.broadcast %cst_113 : f32 to vector<8x128xf32>
    %329 = arith.mulf %328, %327 : vector<8x128xf32>
    %330 = math.tanh %329 : vector<8x128xf32>
    %cst_114 = arith.constant 1.715900e+00 : f32
    %331 = vector.broadcast %cst_114 : f32 to vector<8x128xf32>
    %332 = arith.mulf %331, %330 : vector<8x128xf32>
    %333 = arith.truncf %332 : vector<8x128xf32> to vector<8x128xbf16>
    %c0_115 = arith.constant 0 : index
    %c0_116 = arith.constant 0 : index
    %334 = vector.load %arg8[%c0_115, %c0_116] : memref<128x192xbf16, #tpu.memory_space<vmem>>, vector<128x192xbf16>
    %cst_117 = arith.constant dense<0.000000e+00> : vector<8x192xf32>
    %335 = tpu.matmul %333, %334, %cst_117 {dimension_numbers = #tpu.dot_dimension_numbers<[1], [0], [0], [1], [0, 0, 1, 1], [], []>} : vector<8x128xbf16>, vector<128x192xbf16>, vector<8x192xf32> -> vector<8x192xf32>
    %336 = vector.broadcast %5 : vector<1x192xf32> to vector<8x192xf32>
    %337 = arith.addf %335, %336 : vector<8x192xf32>
    %338 = vector.extract_strided_slice %337 {offsets = [0, 0], sizes = [8, 128], strides = [1, 1]} : vector<8x192xf32> to vector<8x128xf32>
    %339 = math.tanh %338 : vector<8x128xf32>
    %340 = vector.extract_strided_slice %339 {offsets = [0, 0], sizes = [8, 64], strides = [1, 1]} : vector<8x128xf32> to vector<8x64xf32>
    %341 = vector.extract_strided_slice %339 {offsets = [0, 64], sizes = [8, 64], strides = [1, 1]} : vector<8x128xf32> to vector<8x64xf32>
    %342 = vector.extract_strided_slice %337 {offsets = [0, 128], sizes = [8, 64], strides = [1, 1]} : vector<8x192xf32> to vector<8x64xf32>
    %343 = arith.negf %342 : vector<8x64xf32>
    %344 = math.exp %343 : vector<8x64xf32>
    %cst_118 = arith.constant 1.000000e+00 : f32
    %345 = vector.broadcast %cst_118 : f32 to vector<8x64xf32>
    %346 = arith.addf %345, %344 : vector<8x64xf32>
    %347 = arith.divf %345, %346 : vector<8x64xf32>
    %348 = arith.subf %341, %340 : vector<8x64xf32>
    %349 = arith.mulf %347, %348 : vector<8x64xf32>
    %350 = arith.addf %340, %349 : vector<8x64xf32>
    %351 = vector.broadcast %6 : vector<1x64xf32> to vector<8x64xf32>
    %352 = arith.mulf %350, %351 : vector<8x64xf32>
    %cst_119 = arith.constant dense<0.000000e+00> : vector<8xf32>
    %353 = vector.multi_reduction <add>, %352, %cst_119 [1] : vector<8x64xf32> to vector<8xf32>
    %354 = vector.shape_cast %353 : vector<8xf32> to vector<8x1xf32>
    %355 = vector.broadcast %7 : vector<1x1xf32> to vector<8x1xf32>
    %356 = arith.addf %354, %355 : vector<8x1xf32>
    %357 = vector.broadcast %c4_i32 : i32 to vector<8x8xi32>
    %358 = arith.cmpi eq, %8, %357 : vector<8x8xi32>
    %359 = vector.shape_cast %356 : vector<8x1xf32> to vector<8x1xf32>
    %360 = vector.broadcast %359 : vector<8x1xf32> to vector<8x8xf32>
    %361 = arith.select %358, %360, %291 : vector<8x8xi1>, vector<8x8xf32>
    %c5_i32 = arith.constant 5 : i32
    %362 = arith.index_cast %c5_i32 : i32 to index
    %c0_120 = arith.constant 0 : index
    %c0_121 = arith.constant 0 : index
    %363 = vector.load %arg2[%362, %c0_120, %c0_121] : memref<8x8x128xf32, #tpu.memory_space<vmem>>, vector<1x8x128xf32>
    %364 = vector.shape_cast %363 : vector<1x8x128xf32> to vector<8x128xf32>
    %365 = arith.truncf %321 : vector<8x64xf32> to vector<8x64xbf16>
    %c0_122 = arith.constant 0 : index
    %c0_123 = arith.constant 0 : index
    %366 = vector.load %arg3[%c0_122, %c0_123] : memref<64x128xbf16, #tpu.memory_space<vmem>>, vector<64x128xbf16>
    %cst_124 = arith.constant dense<0.000000e+00> : vector<8x128xf32>
    %367 = tpu.matmul %365, %366, %cst_124 {dimension_numbers = #tpu.dot_dimension_numbers<[1], [0], [0], [1], [0, 0, 1, 1], [], []>} : vector<8x64xbf16>, vector<64x128xbf16>, vector<8x128xf32> -> vector<8x128xf32>
    %368 = arith.addf %364, %367 : vector<8x128xf32>
    %cst_125 = arith.constant 6.660000e-01 : f32
    %369 = vector.broadcast %cst_125 : f32 to vector<8x128xf32>
    %370 = arith.mulf %369, %368 : vector<8x128xf32>
    %371 = math.tanh %370 : vector<8x128xf32>
    %cst_126 = arith.constant 1.715900e+00 : f32
    %372 = vector.broadcast %cst_126 : f32 to vector<8x128xf32>
    %373 = arith.mulf %372, %371 : vector<8x128xf32>
    %374 = arith.truncf %373 : vector<8x128xf32> to vector<8x128xbf16>
    %c0_127 = arith.constant 0 : index
    %c0_128 = arith.constant 0 : index
    %375 = vector.load %arg4[%c0_127, %c0_128] : memref<128x192xbf16, #tpu.memory_space<vmem>>, vector<128x192xbf16>
    %cst_129 = arith.constant dense<0.000000e+00> : vector<8x192xf32>
    %376 = tpu.matmul %374, %375, %cst_129 {dimension_numbers = #tpu.dot_dimension_numbers<[1], [0], [0], [1], [0, 0, 1, 1], [], []>} : vector<8x128xbf16>, vector<128x192xbf16>, vector<8x192xf32> -> vector<8x192xf32>
    %377 = vector.broadcast %3 : vector<1x192xf32> to vector<8x192xf32>
    %378 = arith.addf %376, %377 : vector<8x192xf32>
    %379 = vector.extract_strided_slice %378 {offsets = [0, 0], sizes = [8, 128], strides = [1, 1]} : vector<8x192xf32> to vector<8x128xf32>
    %380 = math.tanh %379 : vector<8x128xf32>
    %381 = vector.extract_strided_slice %380 {offsets = [0, 0], sizes = [8, 64], strides = [1, 1]} : vector<8x128xf32> to vector<8x64xf32>
    %382 = vector.extract_strided_slice %380 {offsets = [0, 64], sizes = [8, 64], strides = [1, 1]} : vector<8x128xf32> to vector<8x64xf32>
    %383 = vector.extract_strided_slice %378 {offsets = [0, 128], sizes = [8, 64], strides = [1, 1]} : vector<8x192xf32> to vector<8x64xf32>
    %384 = arith.negf %383 : vector<8x64xf32>
    %385 = math.exp %384 : vector<8x64xf32>
    %cst_130 = arith.constant 1.000000e+00 : f32
    %386 = vector.broadcast %cst_130 : f32 to vector<8x64xf32>
    %387 = arith.addf %386, %385 : vector<8x64xf32>
    %388 = arith.divf %386, %387 : vector<8x64xf32>
    %389 = arith.subf %382, %381 : vector<8x64xf32>
    %390 = arith.mulf %388, %389 : vector<8x64xf32>
    %391 = arith.addf %381, %390 : vector<8x64xf32>
    %392 = tpu.concatenate %391, %350 in 1 : vector<8x64xf32>, vector<8x64xf32> -> vector<8x128xf32>
    %393 = arith.truncf %392 : vector<8x128xf32> to vector<8x128xbf16>
    %c0_131 = arith.constant 0 : index
    %c0_132 = arith.constant 0 : index
    %394 = vector.load %arg6[%c0_131, %c0_132] : memref<128x128xbf16, #tpu.memory_space<vmem>>, vector<128x128xbf16>
    %cst_133 = arith.constant dense<0.000000e+00> : vector<8x128xf32>
    %395 = tpu.matmul %393, %394, %cst_133 {dimension_numbers = #tpu.dot_dimension_numbers<[1], [0], [0], [1], [0, 0, 1, 1], [], []>} : vector<8x128xbf16>, vector<128x128xbf16>, vector<8x128xf32> -> vector<8x128xf32>
    %396 = vector.broadcast %4 : vector<1x128xf32> to vector<8x128xf32>
    %397 = arith.addf %395, %396 : vector<8x128xf32>
    %cst_134 = arith.constant 6.660000e-01 : f32
    %398 = vector.broadcast %cst_134 : f32 to vector<8x128xf32>
    %399 = arith.mulf %398, %397 : vector<8x128xf32>
    %400 = math.tanh %399 : vector<8x128xf32>
    %cst_135 = arith.constant 1.715900e+00 : f32
    %401 = vector.broadcast %cst_135 : f32 to vector<8x128xf32>
    %402 = arith.mulf %401, %400 : vector<8x128xf32>
    %403 = arith.truncf %402 : vector<8x128xf32> to vector<8x128xbf16>
    %c0_136 = arith.constant 0 : index
    %c0_137 = arith.constant 0 : index
    %404 = vector.load %arg8[%c0_136, %c0_137] : memref<128x192xbf16, #tpu.memory_space<vmem>>, vector<128x192xbf16>
    %cst_138 = arith.constant dense<0.000000e+00> : vector<8x192xf32>
    %405 = tpu.matmul %403, %404, %cst_138 {dimension_numbers = #tpu.dot_dimension_numbers<[1], [0], [0], [1], [0, 0, 1, 1], [], []>} : vector<8x128xbf16>, vector<128x192xbf16>, vector<8x192xf32> -> vector<8x192xf32>
    %406 = vector.broadcast %5 : vector<1x192xf32> to vector<8x192xf32>
    %407 = arith.addf %405, %406 : vector<8x192xf32>
    %408 = vector.extract_strided_slice %407 {offsets = [0, 0], sizes = [8, 128], strides = [1, 1]} : vector<8x192xf32> to vector<8x128xf32>
    %409 = math.tanh %408 : vector<8x128xf32>
    %410 = vector.extract_strided_slice %409 {offsets = [0, 0], sizes = [8, 64], strides = [1, 1]} : vector<8x128xf32> to vector<8x64xf32>
    %411 = vector.extract_strided_slice %409 {offsets = [0, 64], sizes = [8, 64], strides = [1, 1]} : vector<8x128xf32> to vector<8x64xf32>
    %412 = vector.extract_strided_slice %407 {offsets = [0, 128], sizes = [8, 64], strides = [1, 1]} : vector<8x192xf32> to vector<8x64xf32>
    %413 = arith.negf %412 : vector<8x64xf32>
    %414 = math.exp %413 : vector<8x64xf32>
    %cst_139 = arith.constant 1.000000e+00 : f32
    %415 = vector.broadcast %cst_139 : f32 to vector<8x64xf32>
    %416 = arith.addf %415, %414 : vector<8x64xf32>
    %417 = arith.divf %415, %416 : vector<8x64xf32>
    %418 = arith.subf %411, %410 : vector<8x64xf32>
    %419 = arith.mulf %417, %418 : vector<8x64xf32>
    %420 = arith.addf %410, %419 : vector<8x64xf32>
    %421 = vector.broadcast %6 : vector<1x64xf32> to vector<8x64xf32>
    %422 = arith.mulf %420, %421 : vector<8x64xf32>
    %cst_140 = arith.constant dense<0.000000e+00> : vector<8xf32>
    %423 = vector.multi_reduction <add>, %422, %cst_140 [1] : vector<8x64xf32> to vector<8xf32>
    %424 = vector.shape_cast %423 : vector<8xf32> to vector<8x1xf32>
    %425 = vector.broadcast %7 : vector<1x1xf32> to vector<8x1xf32>
    %426 = arith.addf %424, %425 : vector<8x1xf32>
    %427 = vector.broadcast %c5_i32 : i32 to vector<8x8xi32>
    %428 = arith.cmpi eq, %8, %427 : vector<8x8xi32>
    %429 = vector.shape_cast %426 : vector<8x1xf32> to vector<8x1xf32>
    %430 = vector.broadcast %429 : vector<8x1xf32> to vector<8x8xf32>
    %431 = arith.select %428, %430, %361 : vector<8x8xi1>, vector<8x8xf32>
    %c6_i32 = arith.constant 6 : i32
    %432 = arith.index_cast %c6_i32 : i32 to index
    %c0_141 = arith.constant 0 : index
    %c0_142 = arith.constant 0 : index
    %433 = vector.load %arg2[%432, %c0_141, %c0_142] : memref<8x8x128xf32, #tpu.memory_space<vmem>>, vector<1x8x128xf32>
    %434 = vector.shape_cast %433 : vector<1x8x128xf32> to vector<8x128xf32>
    %435 = arith.truncf %391 : vector<8x64xf32> to vector<8x64xbf16>
    %c0_143 = arith.constant 0 : index
    %c0_144 = arith.constant 0 : index
    %436 = vector.load %arg3[%c0_143, %c0_144] : memref<64x128xbf16, #tpu.memory_space<vmem>>, vector<64x128xbf16>
    %cst_145 = arith.constant dense<0.000000e+00> : vector<8x128xf32>
    %437 = tpu.matmul %435, %436, %cst_145 {dimension_numbers = #tpu.dot_dimension_numbers<[1], [0], [0], [1], [0, 0, 1, 1], [], []>} : vector<8x64xbf16>, vector<64x128xbf16>, vector<8x128xf32> -> vector<8x128xf32>
    %438 = arith.addf %434, %437 : vector<8x128xf32>
    %cst_146 = arith.constant 6.660000e-01 : f32
    %439 = vector.broadcast %cst_146 : f32 to vector<8x128xf32>
    %440 = arith.mulf %439, %438 : vector<8x128xf32>
    %441 = math.tanh %440 : vector<8x128xf32>
    %cst_147 = arith.constant 1.715900e+00 : f32
    %442 = vector.broadcast %cst_147 : f32 to vector<8x128xf32>
    %443 = arith.mulf %442, %441 : vector<8x128xf32>
    %444 = arith.truncf %443 : vector<8x128xf32> to vector<8x128xbf16>
    %c0_148 = arith.constant 0 : index
    %c0_149 = arith.constant 0 : index
    %445 = vector.load %arg4[%c0_148, %c0_149] : memref<128x192xbf16, #tpu.memory_space<vmem>>, vector<128x192xbf16>
    %cst_150 = arith.constant dense<0.000000e+00> : vector<8x192xf32>
    %446 = tpu.matmul %444, %445, %cst_150 {dimension_numbers = #tpu.dot_dimension_numbers<[1], [0], [0], [1], [0, 0, 1, 1], [], []>} : vector<8x128xbf16>, vector<128x192xbf16>, vector<8x192xf32> -> vector<8x192xf32>
    %447 = vector.broadcast %3 : vector<1x192xf32> to vector<8x192xf32>
    %448 = arith.addf %446, %447 : vector<8x192xf32>
    %449 = vector.extract_strided_slice %448 {offsets = [0, 0], sizes = [8, 128], strides = [1, 1]} : vector<8x192xf32> to vector<8x128xf32>
    %450 = math.tanh %449 : vector<8x128xf32>
    %451 = vector.extract_strided_slice %450 {offsets = [0, 0], sizes = [8, 64], strides = [1, 1]} : vector<8x128xf32> to vector<8x64xf32>
    %452 = vector.extract_strided_slice %450 {offsets = [0, 64], sizes = [8, 64], strides = [1, 1]} : vector<8x128xf32> to vector<8x64xf32>
    %453 = vector.extract_strided_slice %448 {offsets = [0, 128], sizes = [8, 64], strides = [1, 1]} : vector<8x192xf32> to vector<8x64xf32>
    %454 = arith.negf %453 : vector<8x64xf32>
    %455 = math.exp %454 : vector<8x64xf32>
    %cst_151 = arith.constant 1.000000e+00 : f32
    %456 = vector.broadcast %cst_151 : f32 to vector<8x64xf32>
    %457 = arith.addf %456, %455 : vector<8x64xf32>
    %458 = arith.divf %456, %457 : vector<8x64xf32>
    %459 = arith.subf %452, %451 : vector<8x64xf32>
    %460 = arith.mulf %458, %459 : vector<8x64xf32>
    %461 = arith.addf %451, %460 : vector<8x64xf32>
    %462 = tpu.concatenate %461, %420 in 1 : vector<8x64xf32>, vector<8x64xf32> -> vector<8x128xf32>
    %463 = arith.truncf %462 : vector<8x128xf32> to vector<8x128xbf16>
    %c0_152 = arith.constant 0 : index
    %c0_153 = arith.constant 0 : index
    %464 = vector.load %arg6[%c0_152, %c0_153] : memref<128x128xbf16, #tpu.memory_space<vmem>>, vector<128x128xbf16>
    %cst_154 = arith.constant dense<0.000000e+00> : vector<8x128xf32>
    %465 = tpu.matmul %463, %464, %cst_154 {dimension_numbers = #tpu.dot_dimension_numbers<[1], [0], [0], [1], [0, 0, 1, 1], [], []>} : vector<8x128xbf16>, vector<128x128xbf16>, vector<8x128xf32> -> vector<8x128xf32>
    %466 = vector.broadcast %4 : vector<1x128xf32> to vector<8x128xf32>
    %467 = arith.addf %465, %466 : vector<8x128xf32>
    %cst_155 = arith.constant 6.660000e-01 : f32
    %468 = vector.broadcast %cst_155 : f32 to vector<8x128xf32>
    %469 = arith.mulf %468, %467 : vector<8x128xf32>
    %470 = math.tanh %469 : vector<8x128xf32>
    %cst_156 = arith.constant 1.715900e+00 : f32
    %471 = vector.broadcast %cst_156 : f32 to vector<8x128xf32>
    %472 = arith.mulf %471, %470 : vector<8x128xf32>
    %473 = arith.truncf %472 : vector<8x128xf32> to vector<8x128xbf16>
    %c0_157 = arith.constant 0 : index
    %c0_158 = arith.constant 0 : index
    %474 = vector.load %arg8[%c0_157, %c0_158] : memref<128x192xbf16, #tpu.memory_space<vmem>>, vector<128x192xbf16>
    %cst_159 = arith.constant dense<0.000000e+00> : vector<8x192xf32>
    %475 = tpu.matmul %473, %474, %cst_159 {dimension_numbers = #tpu.dot_dimension_numbers<[1], [0], [0], [1], [0, 0, 1, 1], [], []>} : vector<8x128xbf16>, vector<128x192xbf16>, vector<8x192xf32> -> vector<8x192xf32>
    %476 = vector.broadcast %5 : vector<1x192xf32> to vector<8x192xf32>
    %477 = arith.addf %475, %476 : vector<8x192xf32>
    %478 = vector.extract_strided_slice %477 {offsets = [0, 0], sizes = [8, 128], strides = [1, 1]} : vector<8x192xf32> to vector<8x128xf32>
    %479 = math.tanh %478 : vector<8x128xf32>
    %480 = vector.extract_strided_slice %479 {offsets = [0, 0], sizes = [8, 64], strides = [1, 1]} : vector<8x128xf32> to vector<8x64xf32>
    %481 = vector.extract_strided_slice %479 {offsets = [0, 64], sizes = [8, 64], strides = [1, 1]} : vector<8x128xf32> to vector<8x64xf32>
    %482 = vector.extract_strided_slice %477 {offsets = [0, 128], sizes = [8, 64], strides = [1, 1]} : vector<8x192xf32> to vector<8x64xf32>
    %483 = arith.negf %482 : vector<8x64xf32>
    %484 = math.exp %483 : vector<8x64xf32>
    %cst_160 = arith.constant 1.000000e+00 : f32
    %485 = vector.broadcast %cst_160 : f32 to vector<8x64xf32>
    %486 = arith.addf %485, %484 : vector<8x64xf32>
    %487 = arith.divf %485, %486 : vector<8x64xf32>
    %488 = arith.subf %481, %480 : vector<8x64xf32>
    %489 = arith.mulf %487, %488 : vector<8x64xf32>
    %490 = arith.addf %480, %489 : vector<8x64xf32>
    %491 = vector.broadcast %6 : vector<1x64xf32> to vector<8x64xf32>
    %492 = arith.mulf %490, %491 : vector<8x64xf32>
    %cst_161 = arith.constant dense<0.000000e+00> : vector<8xf32>
    %493 = vector.multi_reduction <add>, %492, %cst_161 [1] : vector<8x64xf32> to vector<8xf32>
    %494 = vector.shape_cast %493 : vector<8xf32> to vector<8x1xf32>
    %495 = vector.broadcast %7 : vector<1x1xf32> to vector<8x1xf32>
    %496 = arith.addf %494, %495 : vector<8x1xf32>
    %497 = vector.broadcast %c6_i32 : i32 to vector<8x8xi32>
    %498 = arith.cmpi eq, %8, %497 : vector<8x8xi32>
    %499 = vector.shape_cast %496 : vector<8x1xf32> to vector<8x1xf32>
    %500 = vector.broadcast %499 : vector<8x1xf32> to vector<8x8xf32>
    %501 = arith.select %498, %500, %431 : vector<8x8xi1>, vector<8x8xf32>
    %c7_i32 = arith.constant 7 : i32
    %502 = arith.index_cast %c7_i32 : i32 to index
    %c0_162 = arith.constant 0 : index
    %c0_163 = arith.constant 0 : index
    %503 = vector.load %arg2[%502, %c0_162, %c0_163] : memref<8x8x128xf32, #tpu.memory_space<vmem>>, vector<1x8x128xf32>
    %504 = vector.shape_cast %503 : vector<1x8x128xf32> to vector<8x128xf32>
    %505 = arith.truncf %461 : vector<8x64xf32> to vector<8x64xbf16>
    %c0_164 = arith.constant 0 : index
    %c0_165 = arith.constant 0 : index
    %506 = vector.load %arg3[%c0_164, %c0_165] : memref<64x128xbf16, #tpu.memory_space<vmem>>, vector<64x128xbf16>
    %cst_166 = arith.constant dense<0.000000e+00> : vector<8x128xf32>
    %507 = tpu.matmul %505, %506, %cst_166 {dimension_numbers = #tpu.dot_dimension_numbers<[1], [0], [0], [1], [0, 0, 1, 1], [], []>} : vector<8x64xbf16>, vector<64x128xbf16>, vector<8x128xf32> -> vector<8x128xf32>
    %508 = arith.addf %504, %507 : vector<8x128xf32>
    %cst_167 = arith.constant 6.660000e-01 : f32
    %509 = vector.broadcast %cst_167 : f32 to vector<8x128xf32>
    %510 = arith.mulf %509, %508 : vector<8x128xf32>
    %511 = math.tanh %510 : vector<8x128xf32>
    %cst_168 = arith.constant 1.715900e+00 : f32
    %512 = vector.broadcast %cst_168 : f32 to vector<8x128xf32>
    %513 = arith.mulf %512, %511 : vector<8x128xf32>
    %514 = arith.truncf %513 : vector<8x128xf32> to vector<8x128xbf16>
    %c0_169 = arith.constant 0 : index
    %c0_170 = arith.constant 0 : index
    %515 = vector.load %arg4[%c0_169, %c0_170] : memref<128x192xbf16, #tpu.memory_space<vmem>>, vector<128x192xbf16>
    %cst_171 = arith.constant dense<0.000000e+00> : vector<8x192xf32>
    %516 = tpu.matmul %514, %515, %cst_171 {dimension_numbers = #tpu.dot_dimension_numbers<[1], [0], [0], [1], [0, 0, 1, 1], [], []>} : vector<8x128xbf16>, vector<128x192xbf16>, vector<8x192xf32> -> vector<8x192xf32>
    %517 = vector.broadcast %3 : vector<1x192xf32> to vector<8x192xf32>
    %518 = arith.addf %516, %517 : vector<8x192xf32>
    %519 = vector.extract_strided_slice %518 {offsets = [0, 0], sizes = [8, 128], strides = [1, 1]} : vector<8x192xf32> to vector<8x128xf32>
    %520 = math.tanh %519 : vector<8x128xf32>
    %521 = vector.extract_strided_slice %520 {offsets = [0, 0], sizes = [8, 64], strides = [1, 1]} : vector<8x128xf32> to vector<8x64xf32>
    %522 = vector.extract_strided_slice %520 {offsets = [0, 64], sizes = [8, 64], strides = [1, 1]} : vector<8x128xf32> to vector<8x64xf32>
    %523 = vector.extract_strided_slice %518 {offsets = [0, 128], sizes = [8, 64], strides = [1, 1]} : vector<8x192xf32> to vector<8x64xf32>
    %524 = arith.negf %523 : vector<8x64xf32>
    %525 = math.exp %524 : vector<8x64xf32>
    %cst_172 = arith.constant 1.000000e+00 : f32
    %526 = vector.broadcast %cst_172 : f32 to vector<8x64xf32>
    %527 = arith.addf %526, %525 : vector<8x64xf32>
    %528 = arith.divf %526, %527 : vector<8x64xf32>
    %529 = arith.subf %522, %521 : vector<8x64xf32>
    %530 = arith.mulf %528, %529 : vector<8x64xf32>
    %531 = arith.addf %521, %530 : vector<8x64xf32>
    %532 = tpu.concatenate %531, %490 in 1 : vector<8x64xf32>, vector<8x64xf32> -> vector<8x128xf32>
    %533 = arith.truncf %532 : vector<8x128xf32> to vector<8x128xbf16>
    %c0_173 = arith.constant 0 : index
    %c0_174 = arith.constant 0 : index
    %534 = vector.load %arg6[%c0_173, %c0_174] : memref<128x128xbf16, #tpu.memory_space<vmem>>, vector<128x128xbf16>
    %cst_175 = arith.constant dense<0.000000e+00> : vector<8x128xf32>
    %535 = tpu.matmul %533, %534, %cst_175 {dimension_numbers = #tpu.dot_dimension_numbers<[1], [0], [0], [1], [0, 0, 1, 1], [], []>} : vector<8x128xbf16>, vector<128x128xbf16>, vector<8x128xf32> -> vector<8x128xf32>
    %536 = vector.broadcast %4 : vector<1x128xf32> to vector<8x128xf32>
    %537 = arith.addf %535, %536 : vector<8x128xf32>
    %cst_176 = arith.constant 6.660000e-01 : f32
    %538 = vector.broadcast %cst_176 : f32 to vector<8x128xf32>
    %539 = arith.mulf %538, %537 : vector<8x128xf32>
    %540 = math.tanh %539 : vector<8x128xf32>
    %cst_177 = arith.constant 1.715900e+00 : f32
    %541 = vector.broadcast %cst_177 : f32 to vector<8x128xf32>
    %542 = arith.mulf %541, %540 : vector<8x128xf32>
    %543 = arith.truncf %542 : vector<8x128xf32> to vector<8x128xbf16>
    %c0_178 = arith.constant 0 : index
    %c0_179 = arith.constant 0 : index
    %544 = vector.load %arg8[%c0_178, %c0_179] : memref<128x192xbf16, #tpu.memory_space<vmem>>, vector<128x192xbf16>
    %cst_180 = arith.constant dense<0.000000e+00> : vector<8x192xf32>
    %545 = tpu.matmul %543, %544, %cst_180 {dimension_numbers = #tpu.dot_dimension_numbers<[1], [0], [0], [1], [0, 0, 1, 1], [], []>} : vector<8x128xbf16>, vector<128x192xbf16>, vector<8x192xf32> -> vector<8x192xf32>
    %546 = vector.broadcast %5 : vector<1x192xf32> to vector<8x192xf32>
    %547 = arith.addf %545, %546 : vector<8x192xf32>
    %548 = vector.extract_strided_slice %547 {offsets = [0, 0], sizes = [8, 128], strides = [1, 1]} : vector<8x192xf32> to vector<8x128xf32>
    %549 = math.tanh %548 : vector<8x128xf32>
    %550 = vector.extract_strided_slice %549 {offsets = [0, 0], sizes = [8, 64], strides = [1, 1]} : vector<8x128xf32> to vector<8x64xf32>
    %551 = vector.extract_strided_slice %549 {offsets = [0, 64], sizes = [8, 64], strides = [1, 1]} : vector<8x128xf32> to vector<8x64xf32>
    %552 = vector.extract_strided_slice %547 {offsets = [0, 128], sizes = [8, 64], strides = [1, 1]} : vector<8x192xf32> to vector<8x64xf32>
    %553 = arith.negf %552 : vector<8x64xf32>
    %554 = math.exp %553 : vector<8x64xf32>
    %cst_181 = arith.constant 1.000000e+00 : f32
    %555 = vector.broadcast %cst_181 : f32 to vector<8x64xf32>
    %556 = arith.addf %555, %554 : vector<8x64xf32>
    %557 = arith.divf %555, %556 : vector<8x64xf32>
    %558 = arith.subf %551, %550 : vector<8x64xf32>
    %559 = arith.mulf %557, %558 : vector<8x64xf32>
    %560 = arith.addf %550, %559 : vector<8x64xf32>
    %561 = vector.broadcast %6 : vector<1x64xf32> to vector<8x64xf32>
    %562 = arith.mulf %560, %561 : vector<8x64xf32>
    %cst_182 = arith.constant dense<0.000000e+00> : vector<8xf32>
    %563 = vector.multi_reduction <add>, %562, %cst_182 [1] : vector<8x64xf32> to vector<8xf32>
    %564 = vector.shape_cast %563 : vector<8xf32> to vector<8x1xf32>
    %565 = vector.broadcast %7 : vector<1x1xf32> to vector<8x1xf32>
    %566 = arith.addf %564, %565 : vector<8x1xf32>
    %567 = vector.broadcast %c7_i32 : i32 to vector<8x8xi32>
    %568 = arith.cmpi eq, %8, %567 : vector<8x8xi32>
    %569 = vector.shape_cast %566 : vector<8x1xf32> to vector<8x1xf32>
    %570 = vector.broadcast %569 : vector<8x1xf32> to vector<8x8xf32>
    %571 = arith.select %568, %570, %501 : vector<8x8xi1>, vector<8x8xf32>
    %c8_i32 = arith.constant 8 : i32
    %c0_183 = arith.constant 0 : index
    %c0_184 = arith.constant 0 : index
    %572 = vector.load %arg13[%c0_183, %c0_184] : memref<8x64xf32, #tpu.memory_space<vmem>>, vector<8x64xf32>
    tpu.vector_store %arg13[%c0_183, %c0_184], %531 {strides = array<i32>} : memref<8x64xf32, #tpu.memory_space<vmem>>, vector<8x64xf32>,
    %c0_185 = arith.constant 0 : index
    %c0_186 = arith.constant 0 : index
    %573 = vector.load %arg14[%c0_185, %c0_186] : memref<8x64xf32, #tpu.memory_space<vmem>>, vector<8x64xf32>
    tpu.vector_store %arg14[%c0_185, %c0_186], %560 {strides = array<i32>} : memref<8x64xf32, #tpu.memory_space<vmem>>, vector<8x64xf32>,
    %c0_187 = arith.constant 0 : index
    %c0_188 = arith.constant 0 : index
    %c0_189 = arith.constant 0 : index
    %574 = vector.load %arg12[%c0_187, %c0_188, %c0_189] : memref<1x8x8xf32, #tpu.memory_space<vmem>>, vector<1x8x8xf32>
    %575 = vector.shape_cast %574 : vector<1x8x8xf32> to vector<8x8xf32>
    %576 = vector.shape_cast %571 : vector<8x8xf32> to vector<1x8x8xf32>
    tpu.vector_store %arg12[%c0_187, %c0_188, %c0_189], %576 {strides = array<i32>} : memref<1x8x8xf32, #tpu.memory_space<vmem>>, vector<1x8x8xf32>,
    return
  }
  func.func @transform_0(%arg0: i32, %arg1: i32) -> (i32, i32, i32) {
    %c0_i32 = arith.constant 0 : i32
    %c0_i32_0 = arith.constant 0 : i32
    return %arg1, %arg0, %c0_i32 : i32, i32, i32
  }
  func.func @transform_1(%arg0: i32, %arg1: i32) -> (i32, i32) {
    %c0_i32 = arith.constant 0 : i32
    %c0_i32_0 = arith.constant 0 : i32
    %c0_i32_1 = arith.constant 0 : i32
    return %c0_i32, %c0_i32_0 : i32, i32
  }
  func.func @transform_2(%arg0: i32, %arg1: i32) -> (i32, i32) {
    %c0_i32 = arith.constant 0 : i32
    %c0_i32_0 = arith.constant 0 : i32
    %c0_i32_1 = arith.constant 0 : i32
    return %c0_i32, %c0_i32_0 : i32, i32
  }
  func.func @transform_3(%arg0: i32, %arg1: i32) -> (i32, i32) {
    %c0_i32 = arith.constant 0 : i32
    %c0_i32_0 = arith.constant 0 : i32
    %c0_i32_1 = arith.constant 0 : i32
    return %c0_i32, %c0_i32_0 : i32, i32
  }
  func.func @transform_4(%arg0: i32, %arg1: i32) -> (i32, i32) {
    %c0_i32 = arith.constant 0 : i32
    %c0_i32_0 = arith.constant 0 : i32
    %c0_i32_1 = arith.constant 0 : i32
    return %c0_i32, %c0_i32_0 : i32, i32
  }
  func.func @transform_5(%arg0: i32, %arg1: i32) -> (i32, i32) {
    %c0_i32 = arith.constant 0 : i32
    %c0_i32_0 = arith.constant 0 : i32
    %c0_i32_1 = arith.constant 0 : i32
    return %c0_i32, %c0_i32_0 : i32, i32
  }
  func.func @transform_6(%arg0: i32, %arg1: i32) -> (i32, i32) {
    %c0_i32 = arith.constant 0 : i32
    %c0_i32_0 = arith.constant 0 : i32
    %c0_i32_1 = arith.constant 0 : i32
    return %c0_i32, %c0_i32_0 : i32, i32
  }
  func.func @transform_7(%arg0: i32, %arg1: i32) -> (i32, i32) {
    %c0_i32 = arith.constant 0 : i32
    %c0_i32_0 = arith.constant 0 : i32
    %c0_i32_1 = arith.constant 0 : i32
    return %c0_i32, %c0_i32_0 : i32, i32
  }
  func.func @transform_8(%arg0: i32, %arg1: i32) -> (i32, i32) {
    %c0_i32 = arith.constant 0 : i32
    %c0_i32_0 = arith.constant 0 : i32
    %c0_i32_1 = arith.constant 0 : i32
    return %c0_i32, %c0_i32_0 : i32, i32
  }
  func.func @transform_9(%arg0: i32, %arg1: i32) -> (i32, i32) {
    %c0_i32 = arith.constant 0 : i32
    %c0_i32_0 = arith.constant 0 : i32
    %c0_i32_1 = arith.constant 0 : i32
    return %c0_i32, %c0_i32_0 : i32, i32
  }
  func.func @transform_10(%arg0: i32, %arg1: i32) -> (i32, i32, i32) {
    %c0_i32 = arith.constant 0 : i32
    %c0_i32_0 = arith.constant 0 : i32
    return %arg1, %arg0, %c0_i32 : i32, i32, i32
  }
}

</mosaic_0001>

<llo_original>
// kernel: tpu_custom_call.1
$region0: #{tpu_custom_call.1}
  #allocation0 [shape = 'u32[]', space=smem, size = 0x4, offset = 0x4, fixed_abs, tag = 'smem constant byte address 0x4 - core index']
  #allocation1 [shape = 'u32[144,128]{1,0:T(1,128)}', space=vmem, size = 0x12000, scoped, tag = 'internal scratch']
  #allocation2 [shape = 'f32[8,64]{1,0:T(8,128)}', space=vmem, size = 0x1000, scoped, tag = 'scratch operand']
  #allocation3 [shape = 'f32[8,64]{1,0:T(8,128)}', space=vmem, size = 0x1000, scoped, tag = 'scratch operand']
  #allocation4 [shape = 'f32[1,1]{1,0:T(1,128)S(1)}', space=vmem, size = 0x200, scoped, tag = 'scoped memory for tpu_custom_call.1']
  %s0 = inlined_call_operand.vmem [shape: f32[8,8,128], index: 0, kind: input, shape index: {}]
  %s1 = inlined_call_operand.vmem [shape: bf16[64,128], index: 1, kind: input, shape index: {}]
  %s2 = inlined_call_operand.vmem [shape: bf16[128,192], index: 2, kind: input, shape index: {}]
  %s3 = inlined_call_operand.vmem [shape: f32[1,192], index: 3, kind: input, shape index: {}]
  %s4 = inlined_call_operand.vmem [shape: bf16[128,128], index: 4, kind: input, shape index: {}]
  %s5 = inlined_call_operand.vmem [shape: f32[1,128], index: 5, kind: input, shape index: {}]
  %s6 = inlined_call_operand.vmem [shape: bf16[128,192], index: 6, kind: input, shape index: {}]
  %s7 = inlined_call_operand.vmem [shape: f32[1,192], index: 7, kind: input, shape index: {}]
  %s8 = inlined_call_operand.vmem [shape: f32[1,64], index: 8, kind: input, shape index: {}]
  %s9 = inlined_call_operand.<no memory space> [shape: f32[1,1], index: 9, kind: input, shape index: {}]
  %s10 = inlined_call_operand.hbm [shape: f32[1,8,8], index: 10, kind: output, shape index: {}]
  %s11 = sld [smem:[#allocation0]]
  $region54: #{tpu_custom_call.1} parent=0
    _
  %s13 = ssub.s32 1, %s11
  %s14 = scalar_select 0, %s13, %s11
  %v15 = vstv %s9
  %16 = vst [vmem:[#allocation4] sm:$0x1] %v15
  $region1: #{tpu_custom_call.1} parent=0
    #allocation5 [shape = 'u8[4096]{0}', space=vmem, size = 0x1000, scoped, tag = 'output window, operand 0, single buffered']
    #allocation6 [shape = 's32[1]{0}', space=sflag, size = 0x4, scoped, tag = 'scoped memory for tpu_custom_call.1']
    %17 = vsyncpa [#allocation6], 0
    // Predicated region
    $region2: #{tpu_custom_call.1} parent=1 // pred_check
      _
    $region3: #{tpu_custom_call.1} parent=1 // pred_check_branch
      %19 = sbr.rel (0) target = $region5
    $region4: #{tpu_custom_call.1} parent=1 // pred_region
      _
    $region5: #{tpu_custom_call.1} parent=1 // pred_fallthru
      _
    // Predicated region
    $region6: #{tpu_custom_call.1} parent=1 // pred_check
      _
    $region7: #{tpu_custom_call.1} parent=1 // pred_check_branch
      %21 = sbr.rel (0) target = $region9
    $region8: #{tpu_custom_call.1} parent=1 // pred_region
      _
    $region9: #{tpu_custom_call.1} parent=1 // pred_fallthru
      _
    // Predicated region
    $region10: #{tpu_custom_call.1} parent=1 // pred_check
      _
    $region11: #{tpu_custom_call.1} parent=1 // pred_check_branch
      %23 = sbr.rel (0) target = $region13
    $region12: #{tpu_custom_call.1} parent=1 // pred_region
      _
    $region13: #{tpu_custom_call.1} parent=1 // pred_fallthru
      _
    // Predicated region
    $region14: #{tpu_custom_call.1} parent=1 // pred_check
      _
    $region15: #{tpu_custom_call.1} parent=1 // pred_check_branch
      %25 = sbr.rel (0) target = $region17
    $region16: #{tpu_custom_call.1} parent=1 // pred_region
      _
    $region17: #{tpu_custom_call.1} parent=1 // pred_fallthru
      _
    // Predicated region
    $region18: #{tpu_custom_call.1} parent=1 // pred_check
      _
    $region19: #{tpu_custom_call.1} parent=1 // pred_check_branch
      %27 = sbr.rel (0) target = $region21
    $region20: #{tpu_custom_call.1} parent=1 // pred_region
      _
    $region21: #{tpu_custom_call.1} parent=1 // pred_fallthru
      _
    // Predicated region
    $region22: #{tpu_custom_call.1} parent=1 // pred_check
      _
    $region23: #{tpu_custom_call.1} parent=1 // pred_check_branch
      %29 = sbr.rel (0) target = $region25
    $region24: #{tpu_custom_call.1} parent=1 // pred_region
      _
    $region25: #{tpu_custom_call.1} parent=1 // pred_fallthru
      _
    // Predicated region
    $region26: #{tpu_custom_call.1} parent=1 // pred_check
      _
    $region27: #{tpu_custom_call.1} parent=1 // pred_check_branch
      %31 = sbr.rel (0) target = $region29
    $region28: #{tpu_custom_call.1} parent=1 // pred_region
      _
    $region29: #{tpu_custom_call.1} parent=1 // pred_fallthru
      _
    // Predicated region
    $region30: #{tpu_custom_call.1} parent=1 // pred_check
      _
    $region31: #{tpu_custom_call.1} parent=1 // pred_check_branch
      %33 = sbr.rel (0) target = $region33
    $region32: #{tpu_custom_call.1} parent=1 // pred_region
      _
    $region33: #{tpu_custom_call.1} parent=1 // pred_fallthru
      _
    // Predicated region
    $region34: #{tpu_custom_call.1} parent=1 // pred_check
      _
    $region35: #{tpu_custom_call.1} parent=1 // pred_check_branch
      %35 = sbr.rel (0) target = $region37
    $region36: #{tpu_custom_call.1} parent=1 // pred_region
      _
    $region37: #{tpu_custom_call.1} parent=1 // pred_fallthru
      _
    // Predicated region
    $region38: #{tpu_custom_call.1} parent=1 // pred_check
      _
    $region39: #{tpu_custom_call.1} parent=1 // pred_check_branch
      %37 = sbr.rel (0) target = $region41
    $region40: #{tpu_custom_call.1} parent=1 // pred_region
      _
    $region41: #{tpu_custom_call.1} parent=1 // pred_fallthru
      _
    %p39 = scmp.eq.s32.totalorder 0, 0
    // Predicated region
    $region42: #{tpu_custom_call.1} parent=1 // pred_check
      %p40 = pneg %p39
    $region43: #{tpu_custom_call.1} parent=1 // pred_check_branch
      %42 = sbr.rel (%p40) target = $region45
    $region44: #{tpu_custom_call.1} parent=1 // pred_region
      %vm43 = vcmask 523264
      %44 = vst.msk [vmem:[#allocation2] sm:$0xff] %vm43, 0.0
      %45 = vst.msk [vmem:[#allocation3] sm:$0xff] %vm43, 0.0
    $region45: #{tpu_custom_call.1} parent=1 // pred_fallthru
      _
    %v46 = vld [vmem:[%s3] sm:$0x3]
    %v47 = vld [vmem:[%s5] sm:$0x1]
    %v48 = vld [vmem:[%s7] sm:$0x3]
    %v49 = vld [vmem:[%s8] sm:$0x1]
    %v50 = vld [vmem:[#allocation4] sm:$0x1]
    %v51 = vlaneseq
    %v52 = vand.u32 %v51, 127
    %v53 = vld [vmem:[#allocation2] sm:$0xff]
    %v54 = vld [vmem:[#allocation3] sm:$0xff]
    %v55 = vld [vmem:[%s0] sm:$0xff]
    %v56 = vpack.c.bf16 %v53, %v53
    %v57 = vld [vmem:[%s1] sm:$0xf]
    %v58 = vld [vmem:[%s1 + $0x4] sm:$0xf]
    %v59 = vld [vmem:[%s1 + $0x8] sm:$0xf]
    %v60 = vld [vmem:[%s1 + $0xc] sm:$0xf]
    %v61 = vld [vmem:[%s1 + $0x10] sm:$0xf]
    %v62 = vld [vmem:[%s1 + $0x14] sm:$0xf]
    %v63 = vld [vmem:[%s1 + $0x18] sm:$0xf]
    %v64 = vld [vmem:[%s1 + $0x1c] sm:$0xf]
    %v73 = vunpack.c.l.b16 %v57
    %v74 = vunpack.c.l.b16 %v58
    %v75 = vunpack.c.l.b16 %v59
    %v76 = vunpack.c.l.b16 %v60
    %v77 = vunpack.c.l.b16 %v61
    %v78 = vunpack.c.l.b16 %v62
    %v79 = vunpack.c.l.b16 %v63
    %v80 = vunpack.c.l.b16 %v64
    %v81 = vpack.c.b16 %v74, %v73
    %v82 = vpack.c.b16 %v76, %v75
    %v83 = vpack.c.b16 %v78, %v77
    %v84 = vpack.c.b16 %v80, %v79
    %vm89 = vcmask 523264
    %v91 = vsel %vm89, %v56, 0
    %93 = vmatprep.subr.bf16.mxu0 0
    %94 = vmatpush1.bf16.msra.mxu0 %v81
    %95 = vmatprep.subr.bf16.mxu0 0
    %96 = vmatpush1.bf16.msra.mxu0 %v82
    %97 = vmatprep.subr.bf16.mxu0 0
    %98 = vmatpush1.bf16.msra.mxu0 %v83
    %99 = vmatprep.subr.bf16.mxu0 0
    %100 = vmatpush1.bf16.msra.mxu0 %v84
    %101 = vmatprep.subr.bf16.mxu0 0
    %102 = vmatpush1.bf16.msra.mxu0 0
    %103 = vmatprep.subr.bf16.mxu0 0
    %104 = vmatpush1.bf16.msra.mxu0 0
    %105 = vmatprep.subr.bf16.mxu0 0
    %106 = vmatpush1.bf16.msra.mxu0 0
    %107 = vmatprep.subr.bf16.mxu0 0
    %108 = vmatpush1.bf16.msra.mxu0 0
    %109 = vmatprep.subr.bf16.mxu0 0
    %110 = vmatpush1.bf16.msra.mxu0 0
    %111 = vmatprep.subr.bf16.mxu0 0
    %112 = vmatpush1.bf16.msra.mxu0 0
    %113 = vmatprep.subr.bf16.mxu0 0
    %114 = vmatpush1.bf16.msra.mxu0 0
    %115 = vmatprep.subr.bf16.mxu0 0
    %116 = vmatpush1.bf16.msra.mxu0 0
    %117 = vmatprep.subr.bf16.mxu0 0
    %118 = vmatpush1.bf16.msra.mxu0 0
    %119 = vmatprep.subr.bf16.mxu0 0
    %120 = vmatpush1.bf16.msra.mxu0 0
    %121 = vmatprep.subr.bf16.mxu0 0
    %122 = vmatpush1.bf16.msra.mxu0 0
    %123 = vmatprep.subr.bf16.mxu0 0
    %124 = vmatpush1.bf16.msra.mxu0 0
    %125 = vmatprep.mubr.bf16.mxu0 0
    %126 = vmatmul.mubr.bf16.gmra.mrb[0].mxu0 %v91
    %v127 = vpop.f32.mrb[0].mxu0
    %v128 = vadd.f32 0.0, %v127
    %v129 = vpop.f32.mrb[0].mxu0
    %v130 = vpop.f32.mrb[0].mxu0
    %v131 = vpop.f32.mrb[0].mxu0
    %132 = vdwg.mxu0
    %v133 = vadd.f32 %v55, %v128
    %v134 = vmul.f32 %v133, 0.666
    %v135 = vtanh.pop %v134
    %v136 = vmul.f32 %v135, 1.7159
    %v137 = vpack.c.bf16 %v136, %v136
    %v138 = vld [vmem:[%s2] sm:$0xff]
    %v139 = vld [vmem:[%s2 + $0x8] sm:$0xff]
    %v140 = vld [vmem:[%s2 + $0x10] sm:$0xff]
    %v141 = vld [vmem:[%s2 + $0x18] sm:$0xff]
    %v142 = vld [vmem:[%s2 + $0x20] sm:$0xff]
    %v143 = vld [vmem:[%s2 + $0x28] sm:$0xff]
    %v144 = vld [vmem:[%s2 + $0x30] sm:$0xff]
    %v145 = vld [vmem:[%s2 + $0x38] sm:$0xff]
    %v146 = vld [vmem:[%s2 + $0x40] sm:$0xff]
    %v147 = vld [vmem:[%s2 + $0x48] sm:$0xff]
    %v148 = vld [vmem:[%s2 + $0x50] sm:$0xff]
    %v149 = vld [vmem:[%s2 + $0x58] sm:$0xff]
    %v150 = vld [vmem:[%s2 + $0x60] sm:$0xff]
    %v151 = vld [vmem:[%s2 + $0x68] sm:$0xff]
    %v152 = vld [vmem:[%s2 + $0x70] sm:$0xff]
    %v153 = vld [vmem:[%s2 + $0x78] sm:$0xff]
    %v155 = vlaneseq
    %v156 = vshrl.u32 %v155, 7
    %v157 = vsub.s32 0, %v156
    %v158 = vrot.slane %v46, %v157
    %v159 = vlaneseq
    %v160 = vshrl.u32 %v159, 7
    %v161 = vsub.s32 1, %v160
    %v162 = vrot.slane %v46, %v161
    %v181 = vunpack.c.l.b16 %v138
    %v182 = vunpack.c.h.b16 %v138
    %v183 = vunpack.c.l.b16 %v139
    %v184 = vunpack.c.h.b16 %v139
    %v185 = vunpack.c.l.b16 %v140
    %v186 = vunpack.c.h.b16 %v140
    %v187 = vunpack.c.l.b16 %v141
    %v188 = vunpack.c.h.b16 %v141
    %v189 = vunpack.c.l.b16 %v142
    %v190 = vunpack.c.h.b16 %v142
    %v191 = vunpack.c.l.b16 %v143
    %v192 = vunpack.c.h.b16 %v143
    %v193 = vunpack.c.l.b16 %v144
    %v194 = vunpack.c.h.b16 %v144
    %v195 = vunpack.c.l.b16 %v145
    %v196 = vunpack.c.h.b16 %v145
    %v197 = vunpack.c.l.b16 %v146
    %v198 = vunpack.c.h.b16 %v146
    %v199 = vunpack.c.l.b16 %v147
    %v200 = vunpack.c.h.b16 %v147
    %v201 = vunpack.c.l.b16 %v148
    %v202 = vunpack.c.h.b16 %v148
    %v203 = vunpack.c.l.b16 %v149
    %v204 = vunpack.c.h.b16 %v149
    %v205 = vunpack.c.l.b16 %v150
    %v206 = vunpack.c.h.b16 %v150
    %v207 = vunpack.c.l.b16 %v151
    %v208 = vunpack.c.h.b16 %v151
    %v209 = vunpack.c.l.b16 %v152
    %v210 = vunpack.c.h.b16 %v152
    %v211 = vunpack.c.l.b16 %v153
    %v212 = vunpack.c.h.b16 %v153
    %v213 = vpack.c.b16 %v183, %v181
    %v214 = vpack.c.b16 %v184, %v182
    %v215 = vpack.c.b16 %v187, %v185
    %v216 = vpack.c.b16 %v188, %v186
    %v217 = vpack.c.b16 %v191, %v189
    %v218 = vpack.c.b16 %v192, %v190
    %v219 = vpack.c.b16 %v195, %v193
    %v220 = vpack.c.b16 %v196, %v194
    %v221 = vpack.c.b16 %v199, %v197
    %v222 = vpack.c.b16 %v200, %v198
    %v223 = vpack.c.b16 %v203, %v201
    %v224 = vpack.c.b16 %v204, %v202
    %v225 = vpack.c.b16 %v207, %v205
    %v226 = vpack.c.b16 %v208, %v206
    %v227 = vpack.c.b16 %v211, %v209
    %v228 = vpack.c.b16 %v212, %v210
    %245 = vmatprep.subr.bf16.mxu0 %v214
    %246 = vmatpush1.bf16.msra.mxu0 %v213
    %247 = vmatprep.subr.bf16.mxu0 %v216
    %248 = vmatpush1.bf16.msra.mxu0 %v215
    %249 = vmatprep.subr.bf16.mxu0 %v218
    %250 = vmatpush1.bf16.msra.mxu0 %v217
    %251 = vmatprep.subr.bf16.mxu0 %v220
    %252 = vmatpush1.bf16.msra.mxu0 %v219
    %253 = vmatprep.subr.bf16.mxu0 %v222
    %254 = vmatpush1.bf16.msra.mxu0 %v221
    %255 = vmatprep.subr.bf16.mxu0 %v224
    %256 = vmatpush1.bf16.msra.mxu0 %v223
    %257 = vmatprep.subr.bf16.mxu0 %v226
    %258 = vmatpush1.bf16.msra.mxu0 %v225
    %259 = vmatprep.subr.bf16.mxu0 %v228
    %260 = vmatpush1.bf16.msra.mxu0 %v227
    %261 = vmatprep.subr.bf16.mxu0 0
    %262 = vmatpush1.bf16.msra.mxu0 0
    %263 = vmatprep.subr.bf16.mxu0 0
    %264 = vmatpush1.bf16.msra.mxu0 0
    %265 = vmatprep.subr.bf16.mxu0 0
    %266 = vmatpush1.bf16.msra.mxu0 0
    %267 = vmatprep.subr.bf16.mxu0 0
    %268 = vmatpush1.bf16.msra.mxu0 0
    %269 = vmatprep.subr.bf16.mxu0 0
    %270 = vmatpush1.bf16.msra.mxu0 0
    %271 = vmatprep.subr.bf16.mxu0 0
    %272 = vmatpush1.bf16.msra.mxu0 0
    %273 = vmatprep.subr.bf16.mxu0 0
    %274 = vmatpush1.bf16.msra.mxu0 0
    %275 = vmatprep.subr.bf16.mxu0 0
    %276 = vmatpush1.bf16.msra.mxu0 0
    %277 = vmatprep.mubr.bf16.mxu0 0
    %278 = vmatmul.mubr.bf16.gmra.mrb[0].mxu0 %v137
    %v279 = vpop.f32.mrb[0].mxu0
    %v280 = vadd.f32 %v158, %v279
    %v281 = vpop.f32.mrb[0].mxu0
    %v282 = vadd.f32 %v162, %v281
    %v283 = vpop.f32.mrb[0].mxu0
    %v284 = vpop.f32.mrb[0].mxu0
    %285 = vdwg.mxu0
    %v286 = vtanh.pop %v280
    %v287 = vxor.u32 %v282, 2147483648
    %v288 = vmul.f32 %v287, 1.442695
    %v289 = vpow.pop %v288
    %v290 = vadd.f32 %v289, 1.0
    %v291 = vrcp.pop %v290
    %v292 = vmul.f32 1.0, %v291
    %294 = vrot.lane.b32.xlu0 %v286, 64
    %v295 = vpop.permute.xlu0 %294
    %v297 = vsub.f32 %v286, %v295
    %299 = vrot.lane.b32.xlu0 %v297, 64
    %v300 = vpop.permute.xlu0 %299
    %v302 = vmul.f32 %v292, %v300
    %v303 = vadd.f32 %v286, %v302
    %305 = vrot.lane.b32.xlu0 %v54, 64
    %v306 = vpop.permute.xlu0 %305
    %v308 = vsel %vm89, %v303, %v306
    %v309 = vpack.c.bf16 %v308, %v308
    %v310 = vld [vmem:[%s4] sm:$0xf]
    %v311 = vld [vmem:[%s4 + $0x4] sm:$0xf]
    %v312 = vld [vmem:[%s4 + $0x8] sm:$0xf]
    %v313 = vld [vmem:[%s4 + $0xc] sm:$0xf]
    %v314 = vld [vmem:[%s4 + $0x10] sm:$0xf]
    %v315 = vld [vmem:[%s4 + $0x14] sm:$0xf]
    %v316 = vld [vmem:[%s4 + $0x18] sm:$0xf]
    %v317 = vld [vmem:[%s4 + $0x1c] sm:$0xf]
    %v318 = vld [vmem:[%s4 + $0x20] sm:$0xf]
    %v319 = vld [vmem:[%s4 + $0x24] sm:$0xf]
    %v320 = vld [vmem:[%s4 + $0x28] sm:$0xf]
    %v321 = vld [vmem:[%s4 + $0x2c] sm:$0xf]
    %v322 = vld [vmem:[%s4 + $0x30] sm:$0xf]
    %v323 = vld [vmem:[%s4 + $0x34] sm:$0xf]
    %v324 = vld [vmem:[%s4 + $0x38] sm:$0xf]
    %v325 = vld [vmem:[%s4 + $0x3c] sm:$0xf]
    %v327 = vlaneseq
    %v328 = vshrl.u32 %v327, 7
    %v329 = vsub.s32 0, %v328
    %v330 = vrot.slane %v47, %v329
    %v348 = vunpack.c.l.b16 %v310
    %v349 = vunpack.c.l.b16 %v311
    %v350 = vunpack.c.l.b16 %v312
    %v351 = vunpack.c.l.b16 %v313
    %v352 = vunpack.c.l.b16 %v314
    %v353 = vunpack.c.l.b16 %v315
    %v354 = vunpack.c.l.b16 %v316
    %v355 = vunpack.c.l.b16 %v317
    %v356 = vunpack.c.l.b16 %v318
    %v357 = vunpack.c.l.b16 %v319
    %v358 = vunpack.c.l.b16 %v320
    %v359 = vunpack.c.l.b16 %v321
    %v360 = vunpack.c.l.b16 %v322
    %v361 = vunpack.c.l.b16 %v323
    %v362 = vunpack.c.l.b16 %v324
    %v363 = vunpack.c.l.b16 %v325
    %v364 = vpack.c.b16 %v349, %v348
    %v365 = vpack.c.b16 %v351, %v350
    %v366 = vpack.c.b16 %v353, %v352
    %v367 = vpack.c.b16 %v355, %v354
    %v368 = vpack.c.b16 %v357, %v356
    %v369 = vpack.c.b16 %v359, %v358
    %v370 = vpack.c.b16 %v361, %v360
    %v371 = vpack.c.b16 %v363, %v362
    %380 = vmatprep.subr.bf16.mxu0 0
    %381 = vmatpush1.bf16.msra.mxu0 %v364
    %382 = vmatprep.subr.bf16.mxu0 0
    %383 = vmatpush1.bf16.msra.mxu0 %v365
    %384 = vmatprep.subr.bf16.mxu0 0
    %385 = vmatpush1.bf16.msra.mxu0 %v366
    %386 = vmatprep.subr.bf16.mxu0 0
    %387 = vmatpush1.bf16.msra.mxu0 %v367
    %388 = vmatprep.subr.bf16.mxu0 0
    %389 = vmatpush1.bf16.msra.mxu0 %v368
    %390 = vmatprep.subr.bf16.mxu0 0
    %391 = vmatpush1.bf16.msra.mxu0 %v369
    %392 = vmatprep.subr.bf16.mxu0 0
    %393 = vmatpush1.bf16.msra.mxu0 %v370
    %394 = vmatprep.subr.bf16.mxu0 0
    %395 = vmatpush1.bf16.msra.mxu0 %v371
    %396 = vmatprep.subr.bf16.mxu0 0
    %397 = vmatpush1.bf16.msra.mxu0 0
    %398 = vmatprep.subr.bf16.mxu0 0
    %399 = vmatpush1.bf16.msra.mxu0 0
    %400 = vmatprep.subr.bf16.mxu0 0
    %401 = vmatpush1.bf16.msra.mxu0 0
    %402 = vmatprep.subr.bf16.mxu0 0
    %403 = vmatpush1.bf16.msra.mxu0 0
    %404 = vmatprep.subr.bf16.mxu0 0
    %405 = vmatpush1.bf16.msra.mxu0 0
    %406 = vmatprep.subr.bf16.mxu0 0
    %407 = vmatpush1.bf16.msra.mxu0 0
    %408 = vmatprep.subr.bf16.mxu0 0
    %409 = vmatpush1.bf16.msra.mxu0 0
    %410 = vmatprep.subr.bf16.mxu0 0
    %411 = vmatpush1.bf16.msra.mxu0 0
    %412 = vmatprep.mubr.bf16.mxu0 0
    %413 = vmatmul.mubr.bf16.gmra.mrb[0].mxu0 %v309
    %v414 = vpop.f32.mrb[0].mxu0
    %v415 = vadd.f32 %v330, %v414
    %v416 = vpop.f32.mrb[0].mxu0
    %v417 = vpop.f32.mrb[0].mxu0
    %v418 = vpop.f32.mrb[0].mxu0
    %419 = vdwg.mxu0
    %v420 = vmul.f32 %v415, 0.666
    %v421 = vtanh.pop %v420
    %v422 = vmul.f32 %v421, 1.7159
    %v423 = vpack.c.bf16 %v422, %v422
    %v424 = vld [vmem:[%s6] sm:$0xff]
    %v425 = vld [vmem:[%s6 + $0x8] sm:$0xff]
    %v426 = vld [vmem:[%s6 + $0x10] sm:$0xff]
    %v427 = vld [vmem:[%s6 + $0x18] sm:$0xff]
    %v428 = vld [vmem:[%s6 + $0x20] sm:$0xff]
    %v429 = vld [vmem:[%s6 + $0x28] sm:$0xff]
    %v430 = vld [vmem:[%s6 + $0x30] sm:$0xff]
    %v431 = vld [vmem:[%s6 + $0x38] sm:$0xff]
    %v432 = vld [vmem:[%s6 + $0x40] sm:$0xff]
    %v433 = vld [vmem:[%s6 + $0x48] sm:$0xff]
    %v434 = vld [vmem:[%s6 + $0x50] sm:$0xff]
    %v435 = vld [vmem:[%s6 + $0x58] sm:$0xff]
    %v436 = vld [vmem:[%s6 + $0x60] sm:$0xff]
    %v437 = vld [vmem:[%s6 + $0x68] sm:$0xff]
    %v438 = vld [vmem:[%s6 + $0x70] sm:$0xff]
    %v439 = vld [vmem:[%s6 + $0x78] sm:$0xff]
    %v441 = vlaneseq
    %v442 = vshrl.u32 %v441, 7
    %v443 = vsub.s32 0, %v442
    %v444 = vrot.slane %v48, %v443
    %v445 = vlaneseq
    %v446 = vshrl.u32 %v445, 7
    %v447 = vsub.s32 1, %v446
    %v448 = vrot.slane %v48, %v447
    %v467 = vunpack.c.l.b16 %v424
    %v468 = vunpack.c.h.b16 %v424
    %v469 = vunpack.c.l.b16 %v425
    %v470 = vunpack.c.h.b16 %v425
    %v471 = vunpack.c.l.b16 %v426
    %v472 = vunpack.c.h.b16 %v426
    %v473 = vunpack.c.l.b16 %v427
    %v474 = vunpack.c.h.b16 %v427
    %v475 = vunpack.c.l.b16 %v428
    %v476 = vunpack.c.h.b16 %v428
    %v477 = vunpack.c.l.b16 %v429
    %v478 = vunpack.c.h.b16 %v429
    %v479 = vunpack.c.l.b16 %v430
    %v480 = vunpack.c.h.b16 %v430
    %v481 = vunpack.c.l.b16 %v431
    %v482 = vunpack.c.h.b16 %v431
    %v483 = vunpack.c.l.b16 %v432
    %v484 = vunpack.c.h.b16 %v432
    %v485 = vunpack.c.l.b16 %v433
    %v486 = vunpack.c.h.b16 %v433
    %v487 = vunpack.c.l.b16 %v434
    %v488 = vunpack.c.h.b16 %v434
    %v489 = vunpack.c.l.b16 %v435
    %v490 = vunpack.c.h.b16 %v435
    %v491 = vunpack.c.l.b16 %v436
    %v492 = vunpack.c.h.b16 %v436
    %v493 = vunpack.c.l.b16 %v437
    %v494 = vunpack.c.h.b16 %v437
    %v495 = vunpack.c.l.b16 %v438
    %v496 = vunpack.c.h.b16 %v438
    %v497 = vunpack.c.l.b16 %v439
    %v498 = vunpack.c.h.b16 %v439
    %v499 = vpack.c.b16 %v469, %v467
    %v500 = vpack.c.b16 %v470, %v468
    %v501 = vpack.c.b16 %v473, %v471
    %v502 = vpack.c.b16 %v474, %v472
    %v503 = vpack.c.b16 %v477, %v475
    %v504 = vpack.c.b16 %v478, %v476
    %v505 = vpack.c.b16 %v481, %v479
    %v506 = vpack.c.b16 %v482, %v480
    %v507 = vpack.c.b16 %v485, %v483
    %v508 = vpack.c.b16 %v486, %v484
    %v509 = vpack.c.b16 %v489, %v487
    %v510 = vpack.c.b16 %v490, %v488
    %v511 = vpack.c.b16 %v493, %v491
    %v512 = vpack.c.b16 %v494, %v492
    %v513 = vpack.c.b16 %v497, %v495
    %v514 = vpack.c.b16 %v498, %v496
    %531 = vmatprep.subr.bf16.mxu0 %v500
    %532 = vmatpush1.bf16.msra.mxu0 %v499
    %533 = vmatprep.subr.bf16.mxu0 %v502
    %534 = vmatpush1.bf16.msra.mxu0 %v501
    %535 = vmatprep.subr.bf16.mxu0 %v504
    %536 = vmatpush1.bf16.msra.mxu0 %v503
    %537 = vmatprep.subr.bf16.mxu0 %v506
    %538 = vmatpush1.bf16.msra.mxu0 %v505
    %539 = vmatprep.subr.bf16.mxu0 %v508
    %540 = vmatpush1.bf16.msra.mxu0 %v507
    %541 = vmatprep.subr.bf16.mxu0 %v510
    %542 = vmatpush1.bf16.msra.mxu0 %v509
    %543 = vmatprep.subr.bf16.mxu0 %v512
    %544 = vmatpush1.bf16.msra.mxu0 %v511
    %545 = vmatprep.subr.bf16.mxu0 %v514
    %546 = vmatpush1.bf16.msra.mxu0 %v513
    %547 = vmatprep.subr.bf16.mxu0 0
    %548 = vmatpush1.bf16.msra.mxu0 0
    %549 = vmatprep.subr.bf16.mxu0 0
    %550 = vmatpush1.bf16.msra.mxu0 0
    %551 = vmatprep.subr.bf16.mxu0 0
    %552 = vmatpush1.bf16.msra.mxu0 0
    %553 = vmatprep.subr.bf16.mxu0 0
    %554 = vmatpush1.bf16.msra.mxu0 0
    %555 = vmatprep.subr.bf16.mxu0 0
    %556 = vmatpush1.bf16.msra.mxu0 0
    %557 = vmatprep.subr.bf16.mxu0 0
    %558 = vmatpush1.bf16.msra.mxu0 0
    %559 = vmatprep.subr.bf16.mxu0 0
    %560 = vmatpush1.bf16.msra.mxu0 0
    %561 = vmatprep.subr.bf16.mxu0 0
    %562 = vmatpush1.bf16.msra.mxu0 0
    %563 = vmatprep.mubr.bf16.mxu0 0
    %564 = vmatmul.mubr.bf16.gmra.mrb[0].mxu0 %v423
    %v565 = vpop.f32.mrb[0].mxu0
    %v566 = vadd.f32 %v444, %v565
    %v567 = vpop.f32.mrb[0].mxu0
    %v568 = vadd.f32 %v448, %v567
    %v569 = vpop.f32.mrb[0].mxu0
    %v570 = vpop.f32.mrb[0].mxu0
    %571 = vdwg.mxu0
    %v572 = vtanh.pop %v566
    %v573 = vxor.u32 %v568, 2147483648
    %v574 = vmul.f32 %v573, 1.442695
    %v575 = vpow.pop %v574
    %v576 = vadd.f32 %v575, 1.0
    %v577 = vrcp.pop %v576
    %v578 = vmul.f32 1.0, %v577
    %580 = vrot.lane.b32.xlu0 %v572, 64
    %v581 = vpop.permute.xlu0 %580
    %v583 = vsub.f32 %v572, %v581
    %585 = vrot.lane.b32.xlu0 %v583, 64
    %v586 = vpop.permute.xlu0 %585
    %v588 = vmul.f32 %v578, %v586
    %v589 = vadd.f32 %v572, %v588
    %v591 = vlaneseq
    %v592 = vshrl.u32 %v591, 7
    %v593 = vsub.s32 0, %v592
    %v594 = vrot.slane %v49, %v593
    %v596 = vmul.f32 %v589, %v594
    %v597 = vsel %vm89, %v596, 0.0
    %598 = vadd.xlane.f32.xlu0 %v597
    %v599 = vpop.xlane.xlu0 %598
    %v601 = vlaneseq
    %v602 = vshrl.u32 %v601, 7
    %v603 = vsub.s32 0, %v602
    %v604 = vrot.slane %v50, %v603
    %v606 = vadd.f32 %v599, %v604
    %vm607 = vcmp.eq.s32.totalorder %v52, 0
    %609 = vset.pattern.permute.xlu0 0
    %610 = vperm.xlu0 %609, %v606
    %v611 = vpop.permute.xlu0 %610
    %v613 = vsel %vm607, %v611, 0.0
    %s614 = scalar_lea.vmem %s0, 8
    %v615 = vld [vmem:[%s614] sm:$0xff]
    %v616 = vpack.c.bf16 %v303, %v303
    %v618 = vsel %vm89, %v616, 0
    %620 = vmatprep.subr.bf16.mxu0 0
    %621 = vmatpush1.bf16.msra.mxu0 %v81
    %622 = vmatprep.subr.bf16.mxu0 0
    %623 = vmatpush1.bf16.msra.mxu0 %v82
    %624 = vmatprep.subr.bf16.mxu0 0
    %625 = vmatpush1.bf16.msra.mxu0 %v83
    %626 = vmatprep.subr.bf16.mxu0 0
    %627 = vmatpush1.bf16.msra.mxu0 %v84
    %628 = vmatprep.subr.bf16.mxu0 0
    %629 = vmatpush1.bf16.msra.mxu0 0
    %630 = vmatprep.subr.bf16.mxu0 0
    %631 = vmatpush1.bf16.msra.mxu0 0
    %632 = vmatprep.subr.bf16.mxu0 0
    %633 = vmatpush1.bf16.msra.mxu0 0
    %634 = vmatprep.subr.bf16.mxu0 0
    %635 = vmatpush1.bf16.msra.mxu0 0
    %636 = vmatprep.subr.bf16.mxu0 0
    %637 = vmatpush1.bf16.msra.mxu0 0
    %638 = vmatprep.subr.bf16.mxu0 0
    %639 = vmatpush1.bf16.msra.mxu0 0
    %640 = vmatprep.subr.bf16.mxu0 0
    %641 = vmatpush1.bf16.msra.mxu0 0
    %642 = vmatprep.subr.bf16.mxu0 0
    %643 = vmatpush1.bf16.msra.mxu0 0
    %644 = vmatprep.subr.bf16.mxu0 0
    %645 = vmatpush1.bf16.msra.mxu0 0
    %646 = vmatprep.subr.bf16.mxu0 0
    %647 = vmatpush1.bf16.msra.mxu0 0
    %648 = vmatprep.subr.bf16.mxu0 0
    %649 = vmatpush1.bf16.msra.mxu0 0
    %650 = vmatprep.subr.bf16.mxu0 0
    %651 = vmatpush1.bf16.msra.mxu0 0
    %652 = vmatprep.mubr.bf16.mxu0 0
    %653 = vmatmul.mubr.bf16.gmra.mrb[0].mxu0 %v618
    %v654 = vpop.f32.mrb[0].mxu0
    %v655 = vadd.f32 0.0, %v654
    %v656 = vpop.f32.mrb[0].mxu0
    %v657 = vpop.f32.mrb[0].mxu0
    %v658 = vpop.f32.mrb[0].mxu0
    %659 = vdwg.mxu0
    %v660 = vadd.f32 %v615, %v655
    %v661 = vmul.f32 %v660, 0.666
    %v662 = vtanh.pop %v661
    %v663 = vmul.f32 %v662, 1.7159
    %v664 = vpack.c.bf16 %v663, %v663
    %665 = vmatprep.subr.bf16.mxu0 %v214
    %666 = vmatpush1.bf16.msra.mxu0 %v213
    %667 = vmatprep.subr.bf16.mxu0 %v216
    %668 = vmatpush1.bf16.msra.mxu0 %v215
    %669 = vmatprep.subr.bf16.mxu0 %v218
    %670 = vmatpush1.bf16.msra.mxu0 %v217
    %671 = vmatprep.subr.bf16.mxu0 %v220
    %672 = vmatpush1.bf16.msra.mxu0 %v219
    %673 = vmatprep.subr.bf16.mxu0 %v222
    %674 = vmatpush1.bf16.msra.mxu0 %v221
    %675 = vmatprep.subr.bf16.mxu0 %v224
    %676 = vmatpush1.bf16.msra.mxu0 %v223
    %677 = vmatprep.subr.bf16.mxu0 %v226
    %678 = vmatpush1.bf16.msra.mxu0 %v225
    %679 = vmatprep.subr.bf16.mxu0 %v228
    %680 = vmatpush1.bf16.msra.mxu0 %v227
    %681 = vmatprep.subr.bf16.mxu0 0
    %682 = vmatpush1.bf16.msra.mxu0 0
    %683 = vmatprep.subr.bf16.mxu0 0
    %684 = vmatpush1.bf16.msra.mxu0 0
    %685 = vmatprep.subr.bf16.mxu0 0
    %686 = vmatpush1.bf16.msra.mxu0 0
    %687 = vmatprep.subr.bf16.mxu0 0
    %688 = vmatpush1.bf16.msra.mxu0 0
    %689 = vmatprep.subr.bf16.mxu0 0
    %690 = vmatpush1.bf16.msra.mxu0 0
    %691 = vmatprep.subr.bf16.mxu0 0
    %692 = vmatpush1.bf16.msra.mxu0 0
    %693 = vmatprep.subr.bf16.mxu0 0
    %694 = vmatpush1.bf16.msra.mxu0 0
    %695 = vmatprep.subr.bf16.mxu0 0
    %696 = vmatpush1.bf16.msra.mxu0 0
    %697 = vmatprep.mubr.bf16.mxu0 0
    %698 = vmatmul.mubr.bf16.gmra.mrb[0].mxu0 %v664
    %v699 = vpop.f32.mrb[0].mxu0
    %v700 = vadd.f32 %v158, %v699
    %v701 = vpop.f32.mrb[0].mxu0
    %v702 = vadd.f32 %v162, %v701
    %v703 = vpop.f32.mrb[0].mxu0
    %v704 = vpop.f32.mrb[0].mxu0
    %705 = vdwg.mxu0
    %v706 = vtanh.pop %v700
    %v707 = vxor.u32 %v702, 2147483648
    %v708 = vmul.f32 %v707, 1.442695
    %v709 = vpow.pop %v708
    %v710 = vadd.f32 %v709, 1.0
    %v711 = vrcp.pop %v710
    %v712 = vmul.f32 1.0, %v711
    %714 = vrot.lane.b32.xlu0 %v706, 64
    %v715 = vpop.permute.xlu0 %714
    %v717 = vsub.f32 %v706, %v715
    %719 = vrot.lane.b32.xlu0 %v717, 64
    %v720 = vpop.permute.xlu0 %719
    %v722 = vmul.f32 %v712, %v720
    %v723 = vadd.f32 %v706, %v722
    %725 = vrot.lane.b32.xlu0 %v589, 64
    %v726 = vpop.permute.xlu0 %725
    %v728 = vsel %vm89, %v723, %v726
    %v729 = vpack.c.bf16 %v728, %v728
    %730 = vmatprep.subr.bf16.mxu0 0
    %731 = vmatpush1.bf16.msra.mxu0 %v364
    %732 = vmatprep.subr.bf16.mxu0 0
    %733 = vmatpush1.bf16.msra.mxu0 %v365
    %734 = vmatprep.subr.bf16.mxu0 0
    %735 = vmatpush1.bf16.msra.mxu0 %v366
    %736 = vmatprep.subr.bf16.mxu0 0
    %737 = vmatpush1.bf16.msra.mxu0 %v367
    %738 = vmatprep.subr.bf16.mxu0 0
    %739 = vmatpush1.bf16.msra.mxu0 %v368
    %740 = vmatprep.subr.bf16.mxu0 0
    %741 = vmatpush1.bf16.msra.mxu0 %v369
    %742 = vmatprep.subr.bf16.mxu0 0
    %743 = vmatpush1.bf16.msra.mxu0 %v370
    %744 = vmatprep.subr.bf16.mxu0 0
    %745 = vmatpush1.bf16.msra.mxu0 %v371
    %746 = vmatprep.subr.bf16.mxu0 0
    %747 = vmatpush1.bf16.msra.mxu0 0
    %748 = vmatprep.subr.bf16.mxu0 0
    %749 = vmatpush1.bf16.msra.mxu0 0
    %750 = vmatprep.subr.bf16.mxu0 0
    %751 = vmatpush1.bf16.msra.mxu0 0
    %752 = vmatprep.subr.bf16.mxu0 0
    %753 = vmatpush1.bf16.msra.mxu0 0
    %754 = vmatprep.subr.bf16.mxu0 0
    %755 = vmatpush1.bf16.msra.mxu0 0
    %756 = vmatprep.subr.bf16.mxu0 0
    %757 = vmatpush1.bf16.msra.mxu0 0
    %758 = vmatprep.subr.bf16.mxu0 0
    %759 = vmatpush1.bf16.msra.mxu0 0
    %760 = vmatprep.subr.bf16.mxu0 0
    %761 = vmatpush1.bf16.msra.mxu0 0
    %762 = vmatprep.mubr.bf16.mxu0 0
    %763 = vmatmul.mubr.bf16.gmra.mrb[0].mxu0 %v729
    %v764 = vpop.f32.mrb[0].mxu0
    %v765 = vadd.f32 %v330, %v764
    %v766 = vpop.f32.mrb[0].mxu0
    %v767 = vpop.f32.mrb[0].mxu0
    %v768 = vpop.f32.mrb[0].mxu0
    %769 = vdwg.mxu0
    %v770 = vmul.f32 %v765, 0.666
    %v771 = vtanh.pop %v770
    %v772 = vmul.f32 %v771, 1.7159
    %v773 = vpack.c.bf16 %v772, %v772
    %774 = vmatprep.subr.bf16.mxu0 %v500
    %775 = vmatpush1.bf16.msra.mxu0 %v499
    %776 = vmatprep.subr.bf16.mxu0 %v502
    %777 = vmatpush1.bf16.msra.mxu0 %v501
    %778 = vmatprep.subr.bf16.mxu0 %v504
    %779 = vmatpush1.bf16.msra.mxu0 %v503
    %780 = vmatprep.subr.bf16.mxu0 %v506
    %781 = vmatpush1.bf16.msra.mxu0 %v505
    %782 = vmatprep.subr.bf16.mxu0 %v508
    %783 = vmatpush1.bf16.msra.mxu0 %v507
    %784 = vmatprep.subr.bf16.mxu0 %v510
    %785 = vmatpush1.bf16.msra.mxu0 %v509
    %786 = vmatprep.subr.bf16.mxu0 %v512
    %787 = vmatpush1.bf16.msra.mxu0 %v511
    %788 = vmatprep.subr.bf16.mxu0 %v514
    %789 = vmatpush1.bf16.msra.mxu0 %v513
    %790 = vmatprep.subr.bf16.mxu0 0
    %791 = vmatpush1.bf16.msra.mxu0 0
    %792 = vmatprep.subr.bf16.mxu0 0
    %793 = vmatpush1.bf16.msra.mxu0 0
    %794 = vmatprep.subr.bf16.mxu0 0
    %795 = vmatpush1.bf16.msra.mxu0 0
    %796 = vmatprep.subr.bf16.mxu0 0
    %797 = vmatpush1.bf16.msra.mxu0 0
    %798 = vmatprep.subr.bf16.mxu0 0
    %799 = vmatpush1.bf16.msra.mxu0 0
    %800 = vmatprep.subr.bf16.mxu0 0
    %801 = vmatpush1.bf16.msra.mxu0 0
    %802 = vmatprep.subr.bf16.mxu0 0
    %803 = vmatpush1.bf16.msra.mxu0 0
    %804 = vmatprep.subr.bf16.mxu0 0
    %805 = vmatpush1.bf16.msra.mxu0 0
    %806 = vmatprep.mubr.bf16.mxu0 0
    %807 = vmatmul.mubr.bf16.gmra.mrb[0].mxu0 %v773
    %v808 = vpop.f32.mrb[0].mxu0
    %v809 = vadd.f32 %v444, %v808
    %v810 = vpop.f32.mrb[0].mxu0
    %v811 = vadd.f32 %v448, %v810
    %v812 = vpop.f32.mrb[0].mxu0
    %v813 = vpop.f32.mrb[0].mxu0
    %814 = vdwg.mxu0
    %v815 = vtanh.pop %v809
    %v816 = vxor.u32 %v811, 2147483648
    %v817 = vmul.f32 %v816, 1.442695
    %v818 = vpow.pop %v817
    %v819 = vadd.f32 %v818, 1.0
    %v820 = vrcp.pop %v819
    %v821 = vmul.f32 1.0, %v820
    %823 = vrot.lane.b32.xlu0 %v815, 64
    %v824 = vpop.permute.xlu0 %823
    %v826 = vsub.f32 %v815, %v824
    %828 = vrot.lane.b32.xlu0 %v826, 64
    %v829 = vpop.permute.xlu0 %828
    %v831 = vmul.f32 %v821, %v829
    %v832 = vadd.f32 %v815, %v831
    %v833 = vmul.f32 %v832, %v594
    %v834 = vsel %vm89, %v833, 0.0
    %835 = vadd.xlane.f32.xlu0 %v834
    %v836 = vpop.xlane.xlu0 %835
    %v837 = vadd.f32 %v836, %v604
    %vm838 = vcmp.eq.s32.totalorder %v52, 1
    %840 = vset.pattern.permute.xlu0 0
    %841 = vperm.xlu0 %840, %v837
    %v842 = vpop.permute.xlu0 %841
    %v844 = vsel %vm838, %v842, %v613
    %s845 = scalar_lea.vmem %s0, 16
    %v846 = vld [vmem:[%s845] sm:$0xff]
    %v847 = vpack.c.bf16 %v723, %v723
    %v849 = vsel %vm89, %v847, 0
    %851 = vmatprep.subr.bf16.mxu0 0
    %852 = vmatpush1.bf16.msra.mxu0 %v81
    %853 = vmatprep.subr.bf16.mxu0 0
    %854 = vmatpush1.bf16.msra.mxu0 %v82
    %855 = vmatprep.subr.bf16.mxu0 0
    %856 = vmatpush1.bf16.msra.mxu0 %v83
    %857 = vmatprep.subr.bf16.mxu0 0
    %858 = vmatpush1.bf16.msra.mxu0 %v84
    %859 = vmatprep.subr.bf16.mxu0 0
    %860 = vmatpush1.bf16.msra.mxu0 0
    %861 = vmatprep.subr.bf16.mxu0 0
    %862 = vmatpush1.bf16.msra.mxu0 0
    %863 = vmatprep.subr.bf16.mxu0 0
    %864 = vmatpush1.bf16.msra.mxu0 0
    %865 = vmatprep.subr.bf16.mxu0 0
    %866 = vmatpush1.bf16.msra.mxu0 0
    %867 = vmatprep.subr.bf16.mxu0 0
    %868 = vmatpush1.bf16.msra.mxu0 0
    %869 = vmatprep.subr.bf16.mxu0 0
    %870 = vmatpush1.bf16.msra.mxu0 0
    %871 = vmatprep.subr.bf16.mxu0 0
    %872 = vmatpush1.bf16.msra.mxu0 0
    %873 = vmatprep.subr.bf16.mxu0 0
    %874 = vmatpush1.bf16.msra.mxu0 0
    %875 = vmatprep.subr.bf16.mxu0 0
    %876 = vmatpush1.bf16.msra.mxu0 0
    %877 = vmatprep.subr.bf16.mxu0 0
    %878 = vmatpush1.bf16.msra.mxu0 0
    %879 = vmatprep.subr.bf16.mxu0 0
    %880 = vmatpush1.bf16.msra.mxu0 0
    %881 = vmatprep.subr.bf16.mxu0 0
    %882 = vmatpush1.bf16.msra.mxu0 0
    %883 = vmatprep.mubr.bf16.mxu0 0
    %884 = vmatmul.mubr.bf16.gmra.mrb[0].mxu0 %v849
    %v885 = vpop.f32.mrb[0].mxu0
    %v886 = vadd.f32 0.0, %v885
    %v887 = vpop.f32.mrb[0].mxu0
    %v888 = vpop.f32.mrb[0].mxu0
    %v889 = vpop.f32.mrb[0].mxu0
    %890 = vdwg.mxu0
    %v891 = vadd.f32 %v846, %v886
    %v892 = vmul.f32 %v891, 0.666
    %v893 = vtanh.pop %v892
    %v894 = vmul.f32 %v893, 1.7159
    %v895 = vpack.c.bf16 %v894, %v894
    %896 = vmatprep.subr.bf16.mxu0 %v214
    %897 = vmatpush1.bf16.msra.mxu0 %v213
    %898 = vmatprep.subr.bf16.mxu0 %v216
    %899 = vmatpush1.bf16.msra.mxu0 %v215
    %900 = vmatprep.subr.bf16.mxu0 %v218
    %901 = vmatpush1.bf16.msra.mxu0 %v217
    %902 = vmatprep.subr.bf16.mxu0 %v220
    %903 = vmatpush1.bf16.msra.mxu0 %v219
    %904 = vmatprep.subr.bf16.mxu0 %v222
    %905 = vmatpush1.bf16.msra.mxu0 %v221
    %906 = vmatprep.subr.bf16.mxu0 %v224
    %907 = vmatpush1.bf16.msra.mxu0 %v223
    %908 = vmatprep.subr.bf16.mxu0 %v226
    %909 = vmatpush1.bf16.msra.mxu0 %v225
    %910 = vmatprep.subr.bf16.mxu0 %v228
    %911 = vmatpush1.bf16.msra.mxu0 %v227
    %912 = vmatprep.subr.bf16.mxu0 0
    %913 = vmatpush1.bf16.msra.mxu0 0
    %914 = vmatprep.subr.bf16.mxu0 0
    %915 = vmatpush1.bf16.msra.mxu0 0
    %916 = vmatprep.subr.bf16.mxu0 0
    %917 = vmatpush1.bf16.msra.mxu0 0
    %918 = vmatprep.subr.bf16.mxu0 0
    %919 = vmatpush1.bf16.msra.mxu0 0
    %920 = vmatprep.subr.bf16.mxu0 0
    %921 = vmatpush1.bf16.msra.mxu0 0
    %922 = vmatprep.subr.bf16.mxu0 0
    %923 = vmatpush1.bf16.msra.mxu0 0
    %924 = vmatprep.subr.bf16.mxu0 0
    %925 = vmatpush1.bf16.msra.mxu0 0
    %926 = vmatprep.subr.bf16.mxu0 0
    %927 = vmatpush1.bf16.msra.mxu0 0
    %928 = vmatprep.mubr.bf16.mxu0 0
    %929 = vmatmul.mubr.bf16.gmra.mrb[0].mxu0 %v895
    %v930 = vpop.f32.mrb[0].mxu0
    %v931 = vadd.f32 %v158, %v930
    %v932 = vpop.f32.mrb[0].mxu0
    %v933 = vadd.f32 %v162, %v932
    %v934 = vpop.f32.mrb[0].mxu0
    %v935 = vpop.f32.mrb[0].mxu0
    %936 = vdwg.mxu0
    %v937 = vtanh.pop %v931
    %v938 = vxor.u32 %v933, 2147483648
    %v939 = vmul.f32 %v938, 1.442695
    %v940 = vpow.pop %v939
    %v941 = vadd.f32 %v940, 1.0
    %v942 = vrcp.pop %v941
    %v943 = vmul.f32 1.0, %v942
    %945 = vrot.lane.b32.xlu0 %v937, 64
    %v946 = vpop.permute.xlu0 %945
    %v948 = vsub.f32 %v937, %v946
    %950 = vrot.lane.b32.xlu0 %v948, 64
    %v951 = vpop.permute.xlu0 %950
    %v953 = vmul.f32 %v943, %v951
    %v954 = vadd.f32 %v937, %v953
    %956 = vrot.lane.b32.xlu0 %v832, 64
    %v957 = vpop.permute.xlu0 %956
    %v959 = vsel %vm89, %v954, %v957
    %v960 = vpack.c.bf16 %v959, %v959
    %961 = vmatprep.subr.bf16.mxu0 0
    %962 = vmatpush1.bf16.msra.mxu0 %v364
    %963 = vmatprep.subr.bf16.mxu0 0
    %964 = vmatpush1.bf16.msra.mxu0 %v365
    %965 = vmatprep.subr.bf16.mxu0 0
    %966 = vmatpush1.bf16.msra.mxu0 %v366
    %967 = vmatprep.subr.bf16.mxu0 0
    %968 = vmatpush1.bf16.msra.mxu0 %v367
    %969 = vmatprep.subr.bf16.mxu0 0
    %970 = vmatpush1.bf16.msra.mxu0 %v368
    %971 = vmatprep.subr.bf16.mxu0 0
    %972 = vmatpush1.bf16.msra.mxu0 %v369
    %973 = vmatprep.subr.bf16.mxu0 0
    %974 = vmatpush1.bf16.msra.mxu0 %v370
    %975 = vmatprep.subr.bf16.mxu0 0
    %976 = vmatpush1.bf16.msra.mxu0 %v371
    %977 = vmatprep.subr.bf16.mxu0 0
    %978 = vmatpush1.bf16.msra.mxu0 0
    %979 = vmatprep.subr.bf16.mxu0 0
    %980 = vmatpush1.bf16.msra.mxu0 0
    %981 = vmatprep.subr.bf16.mxu0 0
    %982 = vmatpush1.bf16.msra.mxu0 0
    %983 = vmatprep.subr.bf16.mxu0 0
    %984 = vmatpush1.bf16.msra.mxu0 0
    %985 = vmatprep.subr.bf16.mxu0 0
    %986 = vmatpush1.bf16.msra.mxu0 0
    %987 = vmatprep.subr.bf16.mxu0 0
    %988 = vmatpush1.bf16.msra.mxu0 0
    %989 = vmatprep.subr.bf16.mxu0 0
    %990 = vmatpush1.bf16.msra.mxu0 0
    %991 = vmatprep.subr.bf16.mxu0 0
    %992 = vmatpush1.bf16.msra.mxu0 0
    %993 = vmatprep.mubr.bf16.mxu0 0
    %994 = vmatmul.mubr.bf16.gmra.mrb[0].mxu0 %v960
    %v995 = vpop.f32.mrb[0].mxu0
    %v996 = vadd.f32 %v330, %v995
    %v997 = vpop.f32.mrb[0].mxu0
    %v998 = vpop.f32.mrb[0].mxu0
    %v999 = vpop.f32.mrb[0].mxu0
    %1000 = vdwg.mxu0
    %v1001 = vmul.f32 %v996, 0.666
    %v1002 = vtanh.pop %v1001
    %v1003 = vmul.f32 %v1002, 1.7159
    %v1004 = vpack.c.bf16 %v1003, %v1003
    %1005 = vmatprep.subr.bf16.mxu0 %v500
    %1006 = vmatpush1.bf16.msra.mxu0 %v499
    %1007 = vmatprep.subr.bf16.mxu0 %v502
    %1008 = vmatpush1.bf16.msra.mxu0 %v501
    %1009 = vmatprep.subr.bf16.mxu0 %v504
    %1010 = vmatpush1.bf16.msra.mxu0 %v503
    %1011 = vmatprep.subr.bf16.mxu0 %v506
    %1012 = vmatpush1.bf16.msra.mxu0 %v505
    %1013 = vmatprep.subr.bf16.mxu0 %v508
    %1014 = vmatpush1.bf16.msra.mxu0 %v507
    %1015 = vmatprep.subr.bf16.mxu0 %v510
    %1016 = vmatpush1.bf16.msra.mxu0 %v509
    %1017 = vmatprep.subr.bf16.mxu0 %v512
    %1018 = vmatpush1.bf16.msra.mxu0 %v511
    %1019 = vmatprep.subr.bf16.mxu0 %v514
    %1020 = vmatpush1.bf16.msra.mxu0 %v513
    %1021 = vmatprep.subr.bf16.mxu0 0
    %1022 = vmatpush1.bf16.msra.mxu0 0
    %1023 = vmatprep.subr.bf16.mxu0 0
    %1024 = vmatpush1.bf16.msra.mxu0 0
    %1025 = vmatprep.subr.bf16.mxu0 0
    %1026 = vmatpush1.bf16.msra.mxu0 0
    %1027 = vmatprep.subr.bf16.mxu0 0
    %1028 = vmatpush1.bf16.msra.mxu0 0
    %1029 = vmatprep.subr.bf16.mxu0 0
    %1030 = vmatpush1.bf16.msra.mxu0 0
    %1031 = vmatprep.subr.bf16.mxu0 0
    %1032 = vmatpush1.bf16.msra.mxu0 0
    %1033 = vmatprep.subr.bf16.mxu0 0
    %1034 = vmatpush1.bf16.msra.mxu0 0
    %1035 = vmatprep.subr.bf16.mxu0 0
    %1036 = vmatpush1.bf16.msra.mxu0 0
    %1037 = vmatprep.mubr.bf16.mxu0 0
    %1038 = vmatmul.mubr.bf16.gmra.mrb[0].mxu0 %v1004
    %v1039 = vpop.f32.mrb[0].mxu0
    %v1040 = vadd.f32 %v444, %v1039
    %v1041 = vpop.f32.mrb[0].mxu0
    %v1042 = vadd.f32 %v448, %v1041
    %v1043 = vpop.f32.mrb[0].mxu0
    %v1044 = vpop.f32.mrb[0].mxu0
    %1045 = vdwg.mxu0
    %v1046 = vtanh.pop %v1040
    %v1047 = vxor.u32 %v1042, 2147483648
    %v1048 = vmul.f32 %v1047, 1.442695
    %v1049 = vpow.pop %v1048
    %v1050 = vadd.f32 %v1049, 1.0
    %v1051 = vrcp.pop %v1050
    %v1052 = vmul.f32 1.0, %v1051
    %1054 = vrot.lane.b32.xlu0 %v1046, 64
    %v1055 = vpop.permute.xlu0 %1054
    %v1057 = vsub.f32 %v1046, %v1055
    %1059 = vrot.lane.b32.xlu0 %v1057, 64
    %v1060 = vpop.permute.xlu0 %1059
    %v1062 = vmul.f32 %v1052, %v1060
    %v1063 = vadd.f32 %v1046, %v1062
    %v1064 = vmul.f32 %v1063, %v594
    %v1065 = vsel %vm89, %v1064, 0.0
    %1066 = vadd.xlane.f32.xlu0 %v1065
    %v1067 = vpop.xlane.xlu0 %1066
    %v1068 = vadd.f32 %v1067, %v604
    %vm1069 = vcmp.eq.s32.totalorder %v52, 2
    %1071 = vset.pattern.permute.xlu0 0
    %1072 = vperm.xlu0 %1071, %v1068
    %v1073 = vpop.permute.xlu0 %1072
    %v1075 = vsel %vm1069, %v1073, %v844
    %s1076 = scalar_lea.vmem %s0, 24
    %v1077 = vld [vmem:[%s1076] sm:$0xff]
    %v1078 = vpack.c.bf16 %v954, %v954
    %v1080 = vsel %vm89, %v1078, 0
    %1082 = vmatprep.subr.bf16.mxu0 0
    %1083 = vmatpush1.bf16.msra.mxu0 %v81
    %1084 = vmatprep.subr.bf16.mxu0 0
    %1085 = vmatpush1.bf16.msra.mxu0 %v82
    %1086 = vmatprep.subr.bf16.mxu0 0
    %1087 = vmatpush1.bf16.msra.mxu0 %v83
    %1088 = vmatprep.subr.bf16.mxu0 0
    %1089 = vmatpush1.bf16.msra.mxu0 %v84
    %1090 = vmatprep.subr.bf16.mxu0 0
    %1091 = vmatpush1.bf16.msra.mxu0 0
    %1092 = vmatprep.subr.bf16.mxu0 0
    %1093 = vmatpush1.bf16.msra.mxu0 0
    %1094 = vmatprep.subr.bf16.mxu0 0
    %1095 = vmatpush1.bf16.msra.mxu0 0
    %1096 = vmatprep.subr.bf16.mxu0 0
    %1097 = vmatpush1.bf16.msra.mxu0 0
    %1098 = vmatprep.subr.bf16.mxu0 0
    %1099 = vmatpush1.bf16.msra.mxu0 0
    %1100 = vmatprep.subr.bf16.mxu0 0
    %1101 = vmatpush1.bf16.msra.mxu0 0
    %1102 = vmatprep.subr.bf16.mxu0 0
    %1103 = vmatpush1.bf16.msra.mxu0 0
    %1104 = vmatprep.subr.bf16.mxu0 0
    %1105 = vmatpush1.bf16.msra.mxu0 0
    %1106 = vmatprep.subr.bf16.mxu0 0
    %1107 = vmatpush1.bf16.msra.mxu0 0
    %1108 = vmatprep.subr.bf16.mxu0 0
    %1109 = vmatpush1.bf16.msra.mxu0 0
    %1110 = vmatprep.subr.bf16.mxu0 0
    %1111 = vmatpush1.bf16.msra.mxu0 0
    %1112 = vmatprep.subr.bf16.mxu0 0
    %1113 = vmatpush1.bf16.msra.mxu0 0
    %1114 = vmatprep.mubr.bf16.mxu0 0
    %1115 = vmatmul.mubr.bf16.gmra.mrb[0].mxu0 %v1080
    %v1116 = vpop.f32.mrb[0].mxu0
    %v1117 = vadd.f32 0.0, %v1116
    %v1118 = vpop.f32.mrb[0].mxu0
    %v1119 = vpop.f32.mrb[0].mxu0
    %v1120 = vpop.f32.mrb[0].mxu0
    %1121 = vdwg.mxu0
    %v1122 = vadd.f32 %v1077, %v1117
    %v1123 = vmul.f32 %v1122, 0.666
    %v1124 = vtanh.pop %v1123
    %v1125 = vmul.f32 %v1124, 1.7159
    %v1126 = vpack.c.bf16 %v1125, %v1125
    %1127 = vmatprep.subr.bf16.mxu0 %v214
    %1128 = vmatpush1.bf16.msra.mxu0 %v213
    %1129 = vmatprep.subr.bf16.mxu0 %v216
    %1130 = vmatpush1.bf16.msra.mxu0 %v215
    %1131 = vmatprep.subr.bf16.mxu0 %v218
    %1132 = vmatpush1.bf16.msra.mxu0 %v217
    %1133 = vmatprep.subr.bf16.mxu0 %v220
    %1134 = vmatpush1.bf16.msra.mxu0 %v219
    %1135 = vmatprep.subr.bf16.mxu0 %v222
    %1136 = vmatpush1.bf16.msra.mxu0 %v221
    %1137 = vmatprep.subr.bf16.mxu0 %v224
    %1138 = vmatpush1.bf16.msra.mxu0 %v223
    %1139 = vmatprep.subr.bf16.mxu0 %v226
    %1140 = vmatpush1.bf16.msra.mxu0 %v225
    %1141 = vmatprep.subr.bf16.mxu0 %v228
    %1142 = vmatpush1.bf16.msra.mxu0 %v227
    %1143 = vmatprep.subr.bf16.mxu0 0
    %1144 = vmatpush1.bf16.msra.mxu0 0
    %1145 = vmatprep.subr.bf16.mxu0 0
    %1146 = vmatpush1.bf16.msra.mxu0 0
    %1147 = vmatprep.subr.bf16.mxu0 0
    %1148 = vmatpush1.bf16.msra.mxu0 0
    %1149 = vmatprep.subr.bf16.mxu0 0
    %1150 = vmatpush1.bf16.msra.mxu0 0
    %1151 = vmatprep.subr.bf16.mxu0 0
    %1152 = vmatpush1.bf16.msra.mxu0 0
    %1153 = vmatprep.subr.bf16.mxu0 0
    %1154 = vmatpush1.bf16.msra.mxu0 0
    %1155 = vmatprep.subr.bf16.mxu0 0
    %1156 = vmatpush1.bf16.msra.mxu0 0
    %1157 = vmatprep.subr.bf16.mxu0 0
    %1158 = vmatpush1.bf16.msra.mxu0 0
    %1159 = vmatprep.mubr.bf16.mxu0 0
    %1160 = vmatmul.mubr.bf16.gmra.mrb[0].mxu0 %v1126
    %v1161 = vpop.f32.mrb[0].mxu0
    %v1162 = vadd.f32 %v158, %v1161
    %v1163 = vpop.f32.mrb[0].mxu0
    %v1164 = vadd.f32 %v162, %v1163
    %v1165 = vpop.f32.mrb[0].mxu0
    %v1166 = vpop.f32.mrb[0].mxu0
    %1167 = vdwg.mxu0
    %v1168 = vtanh.pop %v1162
    %v1169 = vxor.u32 %v1164, 2147483648
    %v1170 = vmul.f32 %v1169, 1.442695
    %v1171 = vpow.pop %v1170
    %v1172 = vadd.f32 %v1171, 1.0
    %v1173 = vrcp.pop %v1172
    %v1174 = vmul.f32 1.0, %v1173
    %1176 = vrot.lane.b32.xlu0 %v1168, 64
    %v1177 = vpop.permute.xlu0 %1176
    %v1179 = vsub.f32 %v1168, %v1177
    %1181 = vrot.lane.b32.xlu0 %v1179, 64
    %v1182 = vpop.permute.xlu0 %1181
    %v1184 = vmul.f32 %v1174, %v1182
    %v1185 = vadd.f32 %v1168, %v1184
    %1187 = vrot.lane.b32.xlu0 %v1063, 64
    %v1188 = vpop.permute.xlu0 %1187
    %v1190 = vsel %vm89, %v1185, %v1188
    %v1191 = vpack.c.bf16 %v1190, %v1190
    %1192 = vmatprep.subr.bf16.mxu0 0
    %1193 = vmatpush1.bf16.msra.mxu0 %v364
    %1194 = vmatprep.subr.bf16.mxu0 0
    %1195 = vmatpush1.bf16.msra.mxu0 %v365
    %1196 = vmatprep.subr.bf16.mxu0 0
    %1197 = vmatpush1.bf16.msra.mxu0 %v366
    %1198 = vmatprep.subr.bf16.mxu0 0
    %1199 = vmatpush1.bf16.msra.mxu0 %v367
    %1200 = vmatprep.subr.bf16.mxu0 0
    %1201 = vmatpush1.bf16.msra.mxu0 %v368
    %1202 = vmatprep.subr.bf16.mxu0 0
    %1203 = vmatpush1.bf16.msra.mxu0 %v369
    %1204 = vmatprep.subr.bf16.mxu0 0
    %1205 = vmatpush1.bf16.msra.mxu0 %v370
    %1206 = vmatprep.subr.bf16.mxu0 0
    %1207 = vmatpush1.bf16.msra.mxu0 %v371
    %1208 = vmatprep.subr.bf16.mxu0 0
    %1209 = vmatpush1.bf16.msra.mxu0 0
    %1210 = vmatprep.subr.bf16.mxu0 0
    %1211 = vmatpush1.bf16.msra.mxu0 0
    %1212 = vmatprep.subr.bf16.mxu0 0
    %1213 = vmatpush1.bf16.msra.mxu0 0
    %1214 = vmatprep.subr.bf16.mxu0 0
    %1215 = vmatpush1.bf16.msra.mxu0 0
    %1216 = vmatprep.subr.bf16.mxu0 0
    %1217 = vmatpush1.bf16.msra.mxu0 0
    %1218 = vmatprep.subr.bf16.mxu0 0
    %1219 = vmatpush1.bf16.msra.mxu0 0
    %1220 = vmatprep.subr.bf16.mxu0 0
    %1221 = vmatpush1.bf16.msra.mxu0 0
    %1222 = vmatprep.subr.bf16.mxu0 0
    %1223 = vmatpush1.bf16.msra.mxu0 0
    %1224 = vmatprep.mubr.bf16.mxu0 0
    %1225 = vmatmul.mubr.bf16.gmra.mrb[0].mxu0 %v1191
    %v1226 = vpop.f32.mrb[0].mxu0
    %v1227 = vadd.f32 %v330, %v1226
    %v1228 = vpop.f32.mrb[0].mxu0
    %v1229 = vpop.f32.mrb[0].mxu0
    %v1230 = vpop.f32.mrb[0].mxu0
    %1231 = vdwg.mxu0
    %v1232 = vmul.f32 %v1227, 0.666
    %v1233 = vtanh.pop %v1232
    %v1234 = vmul.f32 %v1233, 1.7159
    %v1235 = vpack.c.bf16 %v1234, %v1234
    %1236 = vmatprep.subr.bf16.mxu0 %v500
    %1237 = vmatpush1.bf16.msra.mxu0 %v499
    %1238 = vmatprep.subr.bf16.mxu0 %v502
    %1239 = vmatpush1.bf16.msra.mxu0 %v501
    %1240 = vmatprep.subr.bf16.mxu0 %v504
    %1241 = vmatpush1.bf16.msra.mxu0 %v503
    %1242 = vmatprep.subr.bf16.mxu0 %v506
    %1243 = vmatpush1.bf16.msra.mxu0 %v505
    %1244 = vmatprep.subr.bf16.mxu0 %v508
    %1245 = vmatpush1.bf16.msra.mxu0 %v507
    %1246 = vmatprep.subr.bf16.mxu0 %v510
    %1247 = vmatpush1.bf16.msra.mxu0 %v509
    %1248 = vmatprep.subr.bf16.mxu0 %v512
    %1249 = vmatpush1.bf16.msra.mxu0 %v511
    %1250 = vmatprep.subr.bf16.mxu0 %v514
    %1251 = vmatpush1.bf16.msra.mxu0 %v513
    %1252 = vmatprep.subr.bf16.mxu0 0
    %1253 = vmatpush1.bf16.msra.mxu0 0
    %1254 = vmatprep.subr.bf16.mxu0 0
    %1255 = vmatpush1.bf16.msra.mxu0 0
    %1256 = vmatprep.subr.bf16.mxu0 0
    %1257 = vmatpush1.bf16.msra.mxu0 0
    %1258 = vmatprep.subr.bf16.mxu0 0
    %1259 = vmatpush1.bf16.msra.mxu0 0
    %1260 = vmatprep.subr.bf16.mxu0 0
    %1261 = vmatpush1.bf16.msra.mxu0 0
    %1262 = vmatprep.subr.bf16.mxu0 0
    %1263 = vmatpush1.bf16.msra.mxu0 0
    %1264 = vmatprep.subr.bf16.mxu0 0
    %1265 = vmatpush1.bf16.msra.mxu0 0
    %1266 = vmatprep.subr.bf16.mxu0 0
    %1267 = vmatpush1.bf16.msra.mxu0 0
    %1268 = vmatprep.mubr.bf16.mxu0 0
    %1269 = vmatmul.mubr.bf16.gmra.mrb[0].mxu0 %v1235
    %v1270 = vpop.f32.mrb[0].mxu0
    %v1271 = vadd.f32 %v444, %v1270
    %v1272 = vpop.f32.mrb[0].mxu0
    %v1273 = vadd.f32 %v448, %v1272
    %v1274 = vpop.f32.mrb[0].mxu0
    %v1275 = vpop.f32.mrb[0].mxu0
    %1276 = vdwg.mxu0
    %v1277 = vtanh.pop %v1271
    %v1278 = vxor.u32 %v1273, 2147483648
    %v1279 = vmul.f32 %v1278, 1.442695
    %v1280 = vpow.pop %v1279
    %v1281 = vadd.f32 %v1280, 1.0
    %v1282 = vrcp.pop %v1281
    %v1283 = vmul.f32 1.0, %v1282
    %1285 = vrot.lane.b32.xlu0 %v1277, 64
    %v1286 = vpop.permute.xlu0 %1285
    %v1288 = vsub.f32 %v1277, %v1286
    %1290 = vrot.lane.b32.xlu0 %v1288, 64
    %v1291 = vpop.permute.xlu0 %1290
    %v1293 = vmul.f32 %v1283, %v1291
    %v1294 = vadd.f32 %v1277, %v1293
    %v1295 = vmul.f32 %v1294, %v594
    %v1296 = vsel %vm89, %v1295, 0.0
    %1297 = vadd.xlane.f32.xlu0 %v1296
    %v1298 = vpop.xlane.xlu0 %1297
    %v1299 = vadd.f32 %v1298, %v604
    %vm1300 = vcmp.eq.s32.totalorder %v52, 3
    %1302 = vset.pattern.permute.xlu0 0
    %1303 = vperm.xlu0 %1302, %v1299
    %v1304 = vpop.permute.xlu0 %1303
    %v1306 = vsel %vm1300, %v1304, %v1075
    %s1307 = scalar_lea.vmem %s0, 32
    %v1308 = vld [vmem:[%s1307] sm:$0xff]
    %v1309 = vpack.c.bf16 %v1185, %v1185
    %v1311 = vsel %vm89, %v1309, 0
    %1313 = vmatprep.subr.bf16.mxu0 0
    %1314 = vmatpush1.bf16.msra.mxu0 %v81
    %1315 = vmatprep.subr.bf16.mxu0 0
    %1316 = vmatpush1.bf16.msra.mxu0 %v82
    %1317 = vmatprep.subr.bf16.mxu0 0
    %1318 = vmatpush1.bf16.msra.mxu0 %v83
    %1319 = vmatprep.subr.bf16.mxu0 0
    %1320 = vmatpush1.bf16.msra.mxu0 %v84
    %1321 = vmatprep.subr.bf16.mxu0 0
    %1322 = vmatpush1.bf16.msra.mxu0 0
    %1323 = vmatprep.subr.bf16.mxu0 0
    %1324 = vmatpush1.bf16.msra.mxu0 0
    %1325 = vmatprep.subr.bf16.mxu0 0
    %1326 = vmatpush1.bf16.msra.mxu0 0
    %1327 = vmatprep.subr.bf16.mxu0 0
    %1328 = vmatpush1.bf16.msra.mxu0 0
    %1329 = vmatprep.subr.bf16.mxu0 0
    %1330 = vmatpush1.bf16.msra.mxu0 0
    %1331 = vmatprep.subr.bf16.mxu0 0
    %1332 = vmatpush1.bf16.msra.mxu0 0
    %1333 = vmatprep.subr.bf16.mxu0 0
    %1334 = vmatpush1.bf16.msra.mxu0 0
    %1335 = vmatprep.subr.bf16.mxu0 0
    %1336 = vmatpush1.bf16.msra.mxu0 0
    %1337 = vmatprep.subr.bf16.mxu0 0
    %1338 = vmatpush1.bf16.msra.mxu0 0
    %1339 = vmatprep.subr.bf16.mxu0 0
    %1340 = vmatpush1.bf16.msra.mxu0 0
    %1341 = vmatprep.subr.bf16.mxu0 0
    %1342 = vmatpush1.bf16.msra.mxu0 0
    %1343 = vmatprep.subr.bf16.mxu0 0
    %1344 = vmatpush1.bf16.msra.mxu0 0
    %1345 = vmatprep.mubr.bf16.mxu0 0
    %1346 = vmatmul.mubr.bf16.gmra.mrb[0].mxu0 %v1311
    %v1347 = vpop.f32.mrb[0].mxu0
    %v1348 = vadd.f32 0.0, %v1347
    %v1349 = vpop.f32.mrb[0].mxu0
    %v1350 = vpop.f32.mrb[0].mxu0
    %v1351 = vpop.f32.mrb[0].mxu0
    %1352 = vdwg.mxu0
    %v1353 = vadd.f32 %v1308, %v1348
    %v1354 = vmul.f32 %v1353, 0.666
    %v1355 = vtanh.pop %v1354
    %v1356 = vmul.f32 %v1355, 1.7159
    %v1357 = vpack.c.bf16 %v1356, %v1356
    %1358 = vmatprep.subr.bf16.mxu0 %v214
    %1359 = vmatpush1.bf16.msra.mxu0 %v213
    %1360 = vmatprep.subr.bf16.mxu0 %v216
    %1361 = vmatpush1.bf16.msra.mxu0 %v215
    %1362 = vmatprep.subr.bf16.mxu0 %v218
    %1363 = vmatpush1.bf16.msra.mxu0 %v217
    %1364 = vmatprep.subr.bf16.mxu0 %v220
    %1365 = vmatpush1.bf16.msra.mxu0 %v219
    %1366 = vmatprep.subr.bf16.mxu0 %v222
    %1367 = vmatpush1.bf16.msra.mxu0 %v221
    %1368 = vmatprep.subr.bf16.mxu0 %v224
    %1369 = vmatpush1.bf16.msra.mxu0 %v223
    %1370 = vmatprep.subr.bf16.mxu0 %v226
    %1371 = vmatpush1.bf16.msra.mxu0 %v225
    %1372 = vmatprep.subr.bf16.mxu0 %v228
    %1373 = vmatpush1.bf16.msra.mxu0 %v227
    %1374 = vmatprep.subr.bf16.mxu0 0
    %1375 = vmatpush1.bf16.msra.mxu0 0
    %1376 = vmatprep.subr.bf16.mxu0 0
    %1377 = vmatpush1.bf16.msra.mxu0 0
    %1378 = vmatprep.subr.bf16.mxu0 0
    %1379 = vmatpush1.bf16.msra.mxu0 0
    %1380 = vmatprep.subr.bf16.mxu0 0
    %1381 = vmatpush1.bf16.msra.mxu0 0
    %1382 = vmatprep.subr.bf16.mxu0 0
    %1383 = vmatpush1.bf16.msra.mxu0 0
    %1384 = vmatprep.subr.bf16.mxu0 0
    %1385 = vmatpush1.bf16.msra.mxu0 0
    %1386 = vmatprep.subr.bf16.mxu0 0
    %1387 = vmatpush1.bf16.msra.mxu0 0
    %1388 = vmatprep.subr.bf16.mxu0 0
    %1389 = vmatpush1.bf16.msra.mxu0 0
    %1390 = vmatprep.mubr.bf16.mxu0 0
    %1391 = vmatmul.mubr.bf16.gmra.mrb[0].mxu0 %v1357
    %v1392 = vpop.f32.mrb[0].mxu0
    %v1393 = vadd.f32 %v158, %v1392
    %v1394 = vpop.f32.mrb[0].mxu0
    %v1395 = vadd.f32 %v162, %v1394
    %v1396 = vpop.f32.mrb[0].mxu0
    %v1397 = vpop.f32.mrb[0].mxu0
    %1398 = vdwg.mxu0
    %v1399 = vtanh.pop %v1393
    %v1400 = vxor.u32 %v1395, 2147483648
    %v1401 = vmul.f32 %v1400, 1.442695
    %v1402 = vpow.pop %v1401
    %v1403 = vadd.f32 %v1402, 1.0
    %v1404 = vrcp.pop %v1403
    %v1405 = vmul.f32 1.0, %v1404
    %1407 = vrot.lane.b32.xlu0 %v1399, 64
    %v1408 = vpop.permute.xlu0 %1407
    %v1410 = vsub.f32 %v1399, %v1408
    %1412 = vrot.lane.b32.xlu0 %v1410, 64
    %v1413 = vpop.permute.xlu0 %1412
    %v1415 = vmul.f32 %v1405, %v1413
    %v1416 = vadd.f32 %v1399, %v1415
    %1418 = vrot.lane.b32.xlu0 %v1294, 64
    %v1419 = vpop.permute.xlu0 %1418
    %v1421 = vsel %vm89, %v1416, %v1419
    %v1422 = vpack.c.bf16 %v1421, %v1421
    %1423 = vmatprep.subr.bf16.mxu0 0
    %1424 = vmatpush1.bf16.msra.mxu0 %v364
    %1425 = vmatprep.subr.bf16.mxu0 0
    %1426 = vmatpush1.bf16.msra.mxu0 %v365
    %1427 = vmatprep.subr.bf16.mxu0 0
    %1428 = vmatpush1.bf16.msra.mxu0 %v366
    %1429 = vmatprep.subr.bf16.mxu0 0
    %1430 = vmatpush1.bf16.msra.mxu0 %v367
    %1431 = vmatprep.subr.bf16.mxu0 0
    %1432 = vmatpush1.bf16.msra.mxu0 %v368
    %1433 = vmatprep.subr.bf16.mxu0 0
    %1434 = vmatpush1.bf16.msra.mxu0 %v369
    %1435 = vmatprep.subr.bf16.mxu0 0
    %1436 = vmatpush1.bf16.msra.mxu0 %v370
    %1437 = vmatprep.subr.bf16.mxu0 0
    %1438 = vmatpush1.bf16.msra.mxu0 %v371
    %1439 = vmatprep.subr.bf16.mxu0 0
    %1440 = vmatpush1.bf16.msra.mxu0 0
    %1441 = vmatprep.subr.bf16.mxu0 0
    %1442 = vmatpush1.bf16.msra.mxu0 0
    %1443 = vmatprep.subr.bf16.mxu0 0
    %1444 = vmatpush1.bf16.msra.mxu0 0
    %1445 = vmatprep.subr.bf16.mxu0 0
    %1446 = vmatpush1.bf16.msra.mxu0 0
    %1447 = vmatprep.subr.bf16.mxu0 0
    %1448 = vmatpush1.bf16.msra.mxu0 0
    %1449 = vmatprep.subr.bf16.mxu0 0
    %1450 = vmatpush1.bf16.msra.mxu0 0
    %1451 = vmatprep.subr.bf16.mxu0 0
    %1452 = vmatpush1.bf16.msra.mxu0 0
    %1453 = vmatprep.subr.bf16.mxu0 0
    %1454 = vmatpush1.bf16.msra.mxu0 0
    %1455 = vmatprep.mubr.bf16.mxu0 0
    %1456 = vmatmul.mubr.bf16.gmra.mrb[0].mxu0 %v1422
    %v1457 = vpop.f32.mrb[0].mxu0
    %v1458 = vadd.f32 %v330, %v1457
    %v1459 = vpop.f32.mrb[0].mxu0
    %v1460 = vpop.f32.mrb[0].mxu0
    %v1461 = vpop.f32.mrb[0].mxu0
    %1462 = vdwg.mxu0
    %v1463 = vmul.f32 %v1458, 0.666
    %v1464 = vtanh.pop %v1463
    %v1465 = vmul.f32 %v1464, 1.7159
    %v1466 = vpack.c.bf16 %v1465, %v1465
    %1467 = vmatprep.subr.bf16.mxu0 %v500
    %1468 = vmatpush1.bf16.msra.mxu0 %v499
    %1469 = vmatprep.subr.bf16.mxu0 %v502
    %1470 = vmatpush1.bf16.msra.mxu0 %v501
    %1471 = vmatprep.subr.bf16.mxu0 %v504
    %1472 = vmatpush1.bf16.msra.mxu0 %v503
    %1473 = vmatprep.subr.bf16.mxu0 %v506
    %1474 = vmatpush1.bf16.msra.mxu0 %v505
    %1475 = vmatprep.subr.bf16.mxu0 %v508
    %1476 = vmatpush1.bf16.msra.mxu0 %v507
    %1477 = vmatprep.subr.bf16.mxu0 %v510
    %1478 = vmatpush1.bf16.msra.mxu0 %v509
    %1479 = vmatprep.subr.bf16.mxu0 %v512
    %1480 = vmatpush1.bf16.msra.mxu0 %v511
    %1481 = vmatprep.subr.bf16.mxu0 %v514
    %1482 = vmatpush1.bf16.msra.mxu0 %v513
    %1483 = vmatprep.subr.bf16.mxu0 0
    %1484 = vmatpush1.bf16.msra.mxu0 0
    %1485 = vmatprep.subr.bf16.mxu0 0
    %1486 = vmatpush1.bf16.msra.mxu0 0
    %1487 = vmatprep.subr.bf16.mxu0 0
    %1488 = vmatpush1.bf16.msra.mxu0 0
    %1489 = vmatprep.subr.bf16.mxu0 0
    %1490 = vmatpush1.bf16.msra.mxu0 0
    %1491 = vmatprep.subr.bf16.mxu0 0
    %1492 = vmatpush1.bf16.msra.mxu0 0
    %1493 = vmatprep.subr.bf16.mxu0 0
    %1494 = vmatpush1.bf16.msra.mxu0 0
    %1495 = vmatprep.subr.bf16.mxu0 0
    %1496 = vmatpush1.bf16.msra.mxu0 0
    %1497 = vmatprep.subr.bf16.mxu0 0
    %1498 = vmatpush1.bf16.msra.mxu0 0
    %1499 = vmatprep.mubr.bf16.mxu0 0
    %1500 = vmatmul.mubr.bf16.gmra.mrb[0].mxu0 %v1466
    %v1501 = vpop.f32.mrb[0].mxu0
    %v1502 = vadd.f32 %v444, %v1501
    %v1503 = vpop.f32.mrb[0].mxu0
    %v1504 = vadd.f32 %v448, %v1503
    %v1505 = vpop.f32.mrb[0].mxu0
    %v1506 = vpop.f32.mrb[0].mxu0
    %1507 = vdwg.mxu0
    %v1508 = vtanh.pop %v1502
    %v1509 = vxor.u32 %v1504, 2147483648
    %v1510 = vmul.f32 %v1509, 1.442695
    %v1511 = vpow.pop %v1510
    %v1512 = vadd.f32 %v1511, 1.0
    %v1513 = vrcp.pop %v1512
    %v1514 = vmul.f32 1.0, %v1513
    %1516 = vrot.lane.b32.xlu0 %v1508, 64
    %v1517 = vpop.permute.xlu0 %1516
    %v1519 = vsub.f32 %v1508, %v1517
    %1521 = vrot.lane.b32.xlu0 %v1519, 64
    %v1522 = vpop.permute.xlu0 %1521
    %v1524 = vmul.f32 %v1514, %v1522
    %v1525 = vadd.f32 %v1508, %v1524
    %v1526 = vmul.f32 %v1525, %v594
    %v1527 = vsel %vm89, %v1526, 0.0
    %1528 = vadd.xlane.f32.xlu0 %v1527
    %v1529 = vpop.xlane.xlu0 %1528
    %v1530 = vadd.f32 %v1529, %v604
    %vm1531 = vcmp.eq.s32.totalorder %v52, 4
    %1533 = vset.pattern.permute.xlu0 0
    %1534 = vperm.xlu0 %1533, %v1530
    %v1535 = vpop.permute.xlu0 %1534
    %v1537 = vsel %vm1531, %v1535, %v1306
    %s1538 = scalar_lea.vmem %s0, 40
    %v1539 = vld [vmem:[%s1538] sm:$0xff]
    %v1540 = vpack.c.bf16 %v1416, %v1416
    %v1542 = vsel %vm89, %v1540, 0
    %1544 = vmatprep.subr.bf16.mxu0 0
    %1545 = vmatpush1.bf16.msra.mxu0 %v81
    %1546 = vmatprep.subr.bf16.mxu0 0
    %1547 = vmatpush1.bf16.msra.mxu0 %v82
    %1548 = vmatprep.subr.bf16.mxu0 0
    %1549 = vmatpush1.bf16.msra.mxu0 %v83
    %1550 = vmatprep.subr.bf16.mxu0 0
    %1551 = vmatpush1.bf16.msra.mxu0 %v84
    %1552 = vmatprep.subr.bf16.mxu0 0
    %1553 = vmatpush1.bf16.msra.mxu0 0
    %1554 = vmatprep.subr.bf16.mxu0 0
    %1555 = vmatpush1.bf16.msra.mxu0 0
    %1556 = vmatprep.subr.bf16.mxu0 0
    %1557 = vmatpush1.bf16.msra.mxu0 0
    %1558 = vmatprep.subr.bf16.mxu0 0
    %1559 = vmatpush1.bf16.msra.mxu0 0
    %1560 = vmatprep.subr.bf16.mxu0 0
    %1561 = vmatpush1.bf16.msra.mxu0 0
    %1562 = vmatprep.subr.bf16.mxu0 0
    %1563 = vmatpush1.bf16.msra.mxu0 0
    %1564 = vmatprep.subr.bf16.mxu0 0
    %1565 = vmatpush1.bf16.msra.mxu0 0
    %1566 = vmatprep.subr.bf16.mxu0 0
    %1567 = vmatpush1.bf16.msra.mxu0 0
    %1568 = vmatprep.subr.bf16.mxu0 0
    %1569 = vmatpush1.bf16.msra.mxu0 0
    %1570 = vmatprep.subr.bf16.mxu0 0
    %1571 = vmatpush1.bf16.msra.mxu0 0
    %1572 = vmatprep.subr.bf16.mxu0 0
    %1573 = vmatpush1.bf16.msra.mxu0 0
    %1574 = vmatprep.subr.bf16.mxu0 0
    %1575 = vmatpush1.bf16.msra.mxu0 0
    %1576 = vmatprep.mubr.bf16.mxu0 0
    %1577 = vmatmul.mubr.bf16.gmra.mrb[0].mxu0 %v1542
    %v1578 = vpop.f32.mrb[0].mxu0
    %v1579 = vadd.f32 0.0, %v1578
    %v1580 = vpop.f32.mrb[0].mxu0
    %v1581 = vpop.f32.mrb[0].mxu0
    %v1582 = vpop.f32.mrb[0].mxu0
    %1583 = vdwg.mxu0
    %v1584 = vadd.f32 %v1539, %v1579
    %v1585 = vmul.f32 %v1584, 0.666
    %v1586 = vtanh.pop %v1585
    %v1587 = vmul.f32 %v1586, 1.7159
    %v1588 = vpack.c.bf16 %v1587, %v1587
    %1589 = vmatprep.subr.bf16.mxu0 %v214
    %1590 = vmatpush1.bf16.msra.mxu0 %v213
    %1591 = vmatprep.subr.bf16.mxu0 %v216
    %1592 = vmatpush1.bf16.msra.mxu0 %v215
    %1593 = vmatprep.subr.bf16.mxu0 %v218
    %1594 = vmatpush1.bf16.msra.mxu0 %v217
    %1595 = vmatprep.subr.bf16.mxu0 %v220
    %1596 = vmatpush1.bf16.msra.mxu0 %v219
    %1597 = vmatprep.subr.bf16.mxu0 %v222
    %1598 = vmatpush1.bf16.msra.mxu0 %v221
    %1599 = vmatprep.subr.bf16.mxu0 %v224
    %1600 = vmatpush1.bf16.msra.mxu0 %v223
    %1601 = vmatprep.subr.bf16.mxu0 %v226
    %1602 = vmatpush1.bf16.msra.mxu0 %v225
    %1603 = vmatprep.subr.bf16.mxu0 %v228
    %1604 = vmatpush1.bf16.msra.mxu0 %v227
    %1605 = vmatprep.subr.bf16.mxu0 0
    %1606 = vmatpush1.bf16.msra.mxu0 0
    %1607 = vmatprep.subr.bf16.mxu0 0
    %1608 = vmatpush1.bf16.msra.mxu0 0
    %1609 = vmatprep.subr.bf16.mxu0 0
    %1610 = vmatpush1.bf16.msra.mxu0 0
    %1611 = vmatprep.subr.bf16.mxu0 0
    %1612 = vmatpush1.bf16.msra.mxu0 0
    %1613 = vmatprep.subr.bf16.mxu0 0
    %1614 = vmatpush1.bf16.msra.mxu0 0
    %1615 = vmatprep.subr.bf16.mxu0 0
    %1616 = vmatpush1.bf16.msra.mxu0 0
    %1617 = vmatprep.subr.bf16.mxu0 0
    %1618 = vmatpush1.bf16.msra.mxu0 0
    %1619 = vmatprep.subr.bf16.mxu0 0
    %1620 = vmatpush1.bf16.msra.mxu0 0
    %1621 = vmatprep.mubr.bf16.mxu0 0
    %1622 = vmatmul.mubr.bf16.gmra.mrb[0].mxu0 %v1588
    %v1623 = vpop.f32.mrb[0].mxu0
    %v1624 = vadd.f32 %v158, %v1623
    %v1625 = vpop.f32.mrb[0].mxu0
    %v1626 = vadd.f32 %v162, %v1625
    %v1627 = vpop.f32.mrb[0].mxu0
    %v1628 = vpop.f32.mrb[0].mxu0
    %1629 = vdwg.mxu0
    %v1630 = vtanh.pop %v1624
    %v1631 = vxor.u32 %v1626, 2147483648
    %v1632 = vmul.f32 %v1631, 1.442695
    %v1633 = vpow.pop %v1632
    %v1634 = vadd.f32 %v1633, 1.0
    %v1635 = vrcp.pop %v1634
    %v1636 = vmul.f32 1.0, %v1635
    %1638 = vrot.lane.b32.xlu0 %v1630, 64
    %v1639 = vpop.permute.xlu0 %1638
    %v1641 = vsub.f32 %v1630, %v1639
    %1643 = vrot.lane.b32.xlu0 %v1641, 64
    %v1644 = vpop.permute.xlu0 %1643
    %v1646 = vmul.f32 %v1636, %v1644
    %v1647 = vadd.f32 %v1630, %v1646
    %1649 = vrot.lane.b32.xlu0 %v1525, 64
    %v1650 = vpop.permute.xlu0 %1649
    %v1652 = vsel %vm89, %v1647, %v1650
    %v1653 = vpack.c.bf16 %v1652, %v1652
    %1654 = vmatprep.subr.bf16.mxu0 0
    %1655 = vmatpush1.bf16.msra.mxu0 %v364
    %1656 = vmatprep.subr.bf16.mxu0 0
    %1657 = vmatpush1.bf16.msra.mxu0 %v365
    %1658 = vmatprep.subr.bf16.mxu0 0
    %1659 = vmatpush1.bf16.msra.mxu0 %v366
    %1660 = vmatprep.subr.bf16.mxu0 0
    %1661 = vmatpush1.bf16.msra.mxu0 %v367
    %1662 = vmatprep.subr.bf16.mxu0 0
    %1663 = vmatpush1.bf16.msra.mxu0 %v368
    %1664 = vmatprep.subr.bf16.mxu0 0
    %1665 = vmatpush1.bf16.msra.mxu0 %v369
    %1666 = vmatprep.subr.bf16.mxu0 0
    %1667 = vmatpush1.bf16.msra.mxu0 %v370
    %1668 = vmatprep.subr.bf16.mxu0 0
    %1669 = vmatpush1.bf16.msra.mxu0 %v371
    %1670 = vmatprep.subr.bf16.mxu0 0
    %1671 = vmatpush1.bf16.msra.mxu0 0
    %1672 = vmatprep.subr.bf16.mxu0 0
    %1673 = vmatpush1.bf16.msra.mxu0 0
    %1674 = vmatprep.subr.bf16.mxu0 0
    %1675 = vmatpush1.bf16.msra.mxu0 0
    %1676 = vmatprep.subr.bf16.mxu0 0
    %1677 = vmatpush1.bf16.msra.mxu0 0
    %1678 = vmatprep.subr.bf16.mxu0 0
    %1679 = vmatpush1.bf16.msra.mxu0 0
    %1680 = vmatprep.subr.bf16.mxu0 0
    %1681 = vmatpush1.bf16.msra.mxu0 0
    %1682 = vmatprep.subr.bf16.mxu0 0
    %1683 = vmatpush1.bf16.msra.mxu0 0
    %1684 = vmatprep.subr.bf16.mxu0 0
    %1685 = vmatpush1.bf16.msra.mxu0 0
    %1686 = vmatprep.mubr.bf16.mxu0 0
    %1687 = vmatmul.mubr.bf16.gmra.mrb[0].mxu0 %v1653
    %v1688 = vpop.f32.mrb[0].mxu0
    %v1689 = vadd.f32 %v330, %v1688
    %v1690 = vpop.f32.mrb[0].mxu0
    %v1691 = vpop.f32.mrb[0].mxu0
    %v1692 = vpop.f32.mrb[0].mxu0
    %1693 = vdwg.mxu0
    %v1694 = vmul.f32 %v1689, 0.666
    %v1695 = vtanh.pop %v1694
    %v1696 = vmul.f32 %v1695, 1.7159
    %v1697 = vpack.c.bf16 %v1696, %v1696
    %1698 = vmatprep.subr.bf16.mxu0 %v500
    %1699 = vmatpush1.bf16.msra.mxu0 %v499
    %1700 = vmatprep.subr.bf16.mxu0 %v502
    %1701 = vmatpush1.bf16.msra.mxu0 %v501
    %1702 = vmatprep.subr.bf16.mxu0 %v504
    %1703 = vmatpush1.bf16.msra.mxu0 %v503
    %1704 = vmatprep.subr.bf16.mxu0 %v506
    %1705 = vmatpush1.bf16.msra.mxu0 %v505
    %1706 = vmatprep.subr.bf16.mxu0 %v508
    %1707 = vmatpush1.bf16.msra.mxu0 %v507
    %1708 = vmatprep.subr.bf16.mxu0 %v510
    %1709 = vmatpush1.bf16.msra.mxu0 %v509
    %1710 = vmatprep.subr.bf16.mxu0 %v512
    %1711 = vmatpush1.bf16.msra.mxu0 %v511
    %1712 = vmatprep.subr.bf16.mxu0 %v514
    %1713 = vmatpush1.bf16.msra.mxu0 %v513
    %1714 = vmatprep.subr.bf16.mxu0 0
    %1715 = vmatpush1.bf16.msra.mxu0 0
    %1716 = vmatprep.subr.bf16.mxu0 0
    %1717 = vmatpush1.bf16.msra.mxu0 0
    %1718 = vmatprep.subr.bf16.mxu0 0
    %1719 = vmatpush1.bf16.msra.mxu0 0
    %1720 = vmatprep.subr.bf16.mxu0 0
    %1721 = vmatpush1.bf16.msra.mxu0 0
    %1722 = vmatprep.subr.bf16.mxu0 0
    %1723 = vmatpush1.bf16.msra.mxu0 0
    %1724 = vmatprep.subr.bf16.mxu0 0
    %1725 = vmatpush1.bf16.msra.mxu0 0
    %1726 = vmatprep.subr.bf16.mxu0 0
    %1727 = vmatpush1.bf16.msra.mxu0 0
    %1728 = vmatprep.subr.bf16.mxu0 0
    %1729 = vmatpush1.bf16.msra.mxu0 0
    %1730 = vmatprep.mubr.bf16.mxu0 0
    %1731 = vmatmul.mubr.bf16.gmra.mrb[0].mxu0 %v1697
    %v1732 = vpop.f32.mrb[0].mxu0
    %v1733 = vadd.f32 %v444, %v1732
    %v1734 = vpop.f32.mrb[0].mxu0
    %v1735 = vadd.f32 %v448, %v1734
    %v1736 = vpop.f32.mrb[0].mxu0
    %v1737 = vpop.f32.mrb[0].mxu0
    %1738 = vdwg.mxu0
    %v1739 = vtanh.pop %v1733
    %v1740 = vxor.u32 %v1735, 2147483648
    %v1741 = vmul.f32 %v1740, 1.442695
    %v1742 = vpow.pop %v1741
    %v1743 = vadd.f32 %v1742, 1.0
    %v1744 = vrcp.pop %v1743
    %v1745 = vmul.f32 1.0, %v1744
    %1747 = vrot.lane.b32.xlu0 %v1739, 64
    %v1748 = vpop.permute.xlu0 %1747
    %v1750 = vsub.f32 %v1739, %v1748
    %1752 = vrot.lane.b32.xlu0 %v1750, 64
    %v1753 = vpop.permute.xlu0 %1752
    %v1755 = vmul.f32 %v1745, %v1753
    %v1756 = vadd.f32 %v1739, %v1755
    %v1757 = vmul.f32 %v1756, %v594
    %v1758 = vsel %vm89, %v1757, 0.0
    %1759 = vadd.xlane.f32.xlu0 %v1758
    %v1760 = vpop.xlane.xlu0 %1759
    %v1761 = vadd.f32 %v1760, %v604
    %vm1762 = vcmp.eq.s32.totalorder %v52, 5
    %1764 = vset.pattern.permute.xlu0 0
    %1765 = vperm.xlu0 %1764, %v1761
    %v1766 = vpop.permute.xlu0 %1765
    %v1768 = vsel %vm1762, %v1766, %v1537
    %s1769 = scalar_lea.vmem %s0, 48
    %v1770 = vld [vmem:[%s1769] sm:$0xff]
    %v1771 = vpack.c.bf16 %v1647, %v1647
    %v1773 = vsel %vm89, %v1771, 0
    %1775 = vmatprep.subr.bf16.mxu0 0
    %1776 = vmatpush1.bf16.msra.mxu0 %v81
    %1777 = vmatprep.subr.bf16.mxu0 0
    %1778 = vmatpush1.bf16.msra.mxu0 %v82
    %1779 = vmatprep.subr.bf16.mxu0 0
    %1780 = vmatpush1.bf16.msra.mxu0 %v83
    %1781 = vmatprep.subr.bf16.mxu0 0
    %1782 = vmatpush1.bf16.msra.mxu0 %v84
    %1783 = vmatprep.subr.bf16.mxu0 0
    %1784 = vmatpush1.bf16.msra.mxu0 0
    %1785 = vmatprep.subr.bf16.mxu0 0
    %1786 = vmatpush1.bf16.msra.mxu0 0
    %1787 = vmatprep.subr.bf16.mxu0 0
    %1788 = vmatpush1.bf16.msra.mxu0 0
    %1789 = vmatprep.subr.bf16.mxu0 0
    %1790 = vmatpush1.bf16.msra.mxu0 0
    %1791 = vmatprep.subr.bf16.mxu0 0
    %1792 = vmatpush1.bf16.msra.mxu0 0
    %1793 = vmatprep.subr.bf16.mxu0 0
    %1794 = vmatpush1.bf16.msra.mxu0 0
    %1795 = vmatprep.subr.bf16.mxu0 0
    %1796 = vmatpush1.bf16.msra.mxu0 0
    %1797 = vmatprep.subr.bf16.mxu0 0
    %1798 = vmatpush1.bf16.msra.mxu0 0
    %1799 = vmatprep.subr.bf16.mxu0 0
    %1800 = vmatpush1.bf16.msra.mxu0 0
    %1801 = vmatprep.subr.bf16.mxu0 0
    %1802 = vmatpush1.bf16.msra.mxu0 0
    %1803 = vmatprep.subr.bf16.mxu0 0
    %1804 = vmatpush1.bf16.msra.mxu0 0
    %1805 = vmatprep.subr.bf16.mxu0 0
    %1806 = vmatpush1.bf16.msra.mxu0 0
    %1807 = vmatprep.mubr.bf16.mxu0 0
    %1808 = vmatmul.mubr.bf16.gmra.mrb[0].mxu0 %v1773
    %v1809 = vpop.f32.mrb[0].mxu0
    %v1810 = vadd.f32 0.0, %v1809
    %v1811 = vpop.f32.mrb[0].mxu0
    %v1812 = vpop.f32.mrb[0].mxu0
    %v1813 = vpop.f32.mrb[0].mxu0
    %1814 = vdwg.mxu0
    %v1815 = vadd.f32 %v1770, %v1810
    %v1816 = vmul.f32 %v1815, 0.666
    %v1817 = vtanh.pop %v1816
    %v1818 = vmul.f32 %v1817, 1.7159
    %v1819 = vpack.c.bf16 %v1818, %v1818
    %1820 = vmatprep.subr.bf16.mxu0 %v214
    %1821 = vmatpush1.bf16.msra.mxu0 %v213
    %1822 = vmatprep.subr.bf16.mxu0 %v216
    %1823 = vmatpush1.bf16.msra.mxu0 %v215
    %1824 = vmatprep.subr.bf16.mxu0 %v218
    %1825 = vmatpush1.bf16.msra.mxu0 %v217
    %1826 = vmatprep.subr.bf16.mxu0 %v220
    %1827 = vmatpush1.bf16.msra.mxu0 %v219
    %1828 = vmatprep.subr.bf16.mxu0 %v222
    %1829 = vmatpush1.bf16.msra.mxu0 %v221
    %1830 = vmatprep.subr.bf16.mxu0 %v224
    %1831 = vmatpush1.bf16.msra.mxu0 %v223
    %1832 = vmatprep.subr.bf16.mxu0 %v226
    %1833 = vmatpush1.bf16.msra.mxu0 %v225
    %1834 = vmatprep.subr.bf16.mxu0 %v228
    %1835 = vmatpush1.bf16.msra.mxu0 %v227
    %1836 = vmatprep.subr.bf16.mxu0 0
    %1837 = vmatpush1.bf16.msra.mxu0 0
    %1838 = vmatprep.subr.bf16.mxu0 0
    %1839 = vmatpush1.bf16.msra.mxu0 0
    %1840 = vmatprep.subr.bf16.mxu0 0
    %1841 = vmatpush1.bf16.msra.mxu0 0
    %1842 = vmatprep.subr.bf16.mxu0 0
    %1843 = vmatpush1.bf16.msra.mxu0 0
    %1844 = vmatprep.subr.bf16.mxu0 0
    %1845 = vmatpush1.bf16.msra.mxu0 0
    %1846 = vmatprep.subr.bf16.mxu0 0
    %1847 = vmatpush1.bf16.msra.mxu0 0
    %1848 = vmatprep.subr.bf16.mxu0 0
    %1849 = vmatpush1.bf16.msra.mxu0 0
    %1850 = vmatprep.subr.bf16.mxu0 0
    %1851 = vmatpush1.bf16.msra.mxu0 0
    %1852 = vmatprep.mubr.bf16.mxu0 0
    %1853 = vmatmul.mubr.bf16.gmra.mrb[0].mxu0 %v1819
    %v1854 = vpop.f32.mrb[0].mxu0
    %v1855 = vadd.f32 %v158, %v1854
    %v1856 = vpop.f32.mrb[0].mxu0
    %v1857 = vadd.f32 %v162, %v1856
    %v1858 = vpop.f32.mrb[0].mxu0
    %v1859 = vpop.f32.mrb[0].mxu0
    %1860 = vdwg.mxu0
    %v1861 = vtanh.pop %v1855
    %v1862 = vxor.u32 %v1857, 2147483648
    %v1863 = vmul.f32 %v1862, 1.442695
    %v1864 = vpow.pop %v1863
    %v1865 = vadd.f32 %v1864, 1.0
    %v1866 = vrcp.pop %v1865
    %v1867 = vmul.f32 1.0, %v1866
    %1869 = vrot.lane.b32.xlu0 %v1861, 64
    %v1870 = vpop.permute.xlu0 %1869
    %v1872 = vsub.f32 %v1861, %v1870
    %1874 = vrot.lane.b32.xlu0 %v1872, 64
    %v1875 = vpop.permute.xlu0 %1874
    %v1877 = vmul.f32 %v1867, %v1875
    %v1878 = vadd.f32 %v1861, %v1877
    %1880 = vrot.lane.b32.xlu0 %v1756, 64
    %v1881 = vpop.permute.xlu0 %1880
    %v1883 = vsel %vm89, %v1878, %v1881
    %v1884 = vpack.c.bf16 %v1883, %v1883
    %1885 = vmatprep.subr.bf16.mxu0 0
    %1886 = vmatpush1.bf16.msra.mxu0 %v364
    %1887 = vmatprep.subr.bf16.mxu0 0
    %1888 = vmatpush1.bf16.msra.mxu0 %v365
    %1889 = vmatprep.subr.bf16.mxu0 0
    %1890 = vmatpush1.bf16.msra.mxu0 %v366
    %1891 = vmatprep.subr.bf16.mxu0 0
    %1892 = vmatpush1.bf16.msra.mxu0 %v367
    %1893 = vmatprep.subr.bf16.mxu0 0
    %1894 = vmatpush1.bf16.msra.mxu0 %v368
    %1895 = vmatprep.subr.bf16.mxu0 0
    %1896 = vmatpush1.bf16.msra.mxu0 %v369
    %1897 = vmatprep.subr.bf16.mxu0 0
    %1898 = vmatpush1.bf16.msra.mxu0 %v370
    %1899 = vmatprep.subr.bf16.mxu0 0
    %1900 = vmatpush1.bf16.msra.mxu0 %v371
    %1901 = vmatprep.subr.bf16.mxu0 0
    %1902 = vmatpush1.bf16.msra.mxu0 0
    %1903 = vmatprep.subr.bf16.mxu0 0
    %1904 = vmatpush1.bf16.msra.mxu0 0
    %1905 = vmatprep.subr.bf16.mxu0 0
    %1906 = vmatpush1.bf16.msra.mxu0 0
    %1907 = vmatprep.subr.bf16.mxu0 0
    %1908 = vmatpush1.bf16.msra.mxu0 0
    %1909 = vmatprep.subr.bf16.mxu0 0
    %1910 = vmatpush1.bf16.msra.mxu0 0
    %1911 = vmatprep.subr.bf16.mxu0 0
    %1912 = vmatpush1.bf16.msra.mxu0 0
    %1913 = vmatprep.subr.bf16.mxu0 0
    %1914 = vmatpush1.bf16.msra.mxu0 0
    %1915 = vmatprep.subr.bf16.mxu0 0
    %1916 = vmatpush1.bf16.msra.mxu0 0
    %1917 = vmatprep.mubr.bf16.mxu0 0
    %1918 = vmatmul.mubr.bf16.gmra.mrb[0].mxu0 %v1884
    %v1919 = vpop.f32.mrb[0].mxu0
    %v1920 = vadd.f32 %v330, %v1919
    %v1921 = vpop.f32.mrb[0].mxu0
    %v1922 = vpop.f32.mrb[0].mxu0
    %v1923 = vpop.f32.mrb[0].mxu0
    %1924 = vdwg.mxu0
    %v1925 = vmul.f32 %v1920, 0.666
    %v1926 = vtanh.pop %v1925
    %v1927 = vmul.f32 %v1926, 1.7159
    %v1928 = vpack.c.bf16 %v1927, %v1927
    %1929 = vmatprep.subr.bf16.mxu0 %v500
    %1930 = vmatpush1.bf16.msra.mxu0 %v499
    %1931 = vmatprep.subr.bf16.mxu0 %v502
    %1932 = vmatpush1.bf16.msra.mxu0 %v501
    %1933 = vmatprep.subr.bf16.mxu0 %v504
    %1934 = vmatpush1.bf16.msra.mxu0 %v503
    %1935 = vmatprep.subr.bf16.mxu0 %v506
    %1936 = vmatpush1.bf16.msra.mxu0 %v505
    %1937 = vmatprep.subr.bf16.mxu0 %v508
    %1938 = vmatpush1.bf16.msra.mxu0 %v507
    %1939 = vmatprep.subr.bf16.mxu0 %v510
    %1940 = vmatpush1.bf16.msra.mxu0 %v509
    %1941 = vmatprep.subr.bf16.mxu0 %v512
    %1942 = vmatpush1.bf16.msra.mxu0 %v511
    %1943 = vmatprep.subr.bf16.mxu0 %v514
    %1944 = vmatpush1.bf16.msra.mxu0 %v513
    %1945 = vmatprep.subr.bf16.mxu0 0
    %1946 = vmatpush1.bf16.msra.mxu0 0
    %1947 = vmatprep.subr.bf16.mxu0 0
    %1948 = vmatpush1.bf16.msra.mxu0 0
    %1949 = vmatprep.subr.bf16.mxu0 0
    %1950 = vmatpush1.bf16.msra.mxu0 0
    %1951 = vmatprep.subr.bf16.mxu0 0
    %1952 = vmatpush1.bf16.msra.mxu0 0
    %1953 = vmatprep.subr.bf16.mxu0 0
    %1954 = vmatpush1.bf16.msra.mxu0 0
    %1955 = vmatprep.subr.bf16.mxu0 0
    %1956 = vmatpush1.bf16.msra.mxu0 0
    %1957 = vmatprep.subr.bf16.mxu0 0
    %1958 = vmatpush1.bf16.msra.mxu0 0
    %1959 = vmatprep.subr.bf16.mxu0 0
    %1960 = vmatpush1.bf16.msra.mxu0 0
    %1961 = vmatprep.mubr.bf16.mxu0 0
    %1962 = vmatmul.mubr.bf16.gmra.mrb[0].mxu0 %v1928
    %v1963 = vpop.f32.mrb[0].mxu0
    %v1964 = vadd.f32 %v444, %v1963
    %v1965 = vpop.f32.mrb[0].mxu0
    %v1966 = vadd.f32 %v448, %v1965
    %v1967 = vpop.f32.mrb[0].mxu0
    %v1968 = vpop.f32.mrb[0].mxu0
    %1969 = vdwg.mxu0
    %v1970 = vtanh.pop %v1964
    %v1971 = vxor.u32 %v1966, 2147483648
    %v1972 = vmul.f32 %v1971, 1.442695
    %v1973 = vpow.pop %v1972
    %v1974 = vadd.f32 %v1973, 1.0
    %v1975 = vrcp.pop %v1974
    %v1976 = vmul.f32 1.0, %v1975
    %1978 = vrot.lane.b32.xlu0 %v1970, 64
    %v1979 = vpop.permute.xlu0 %1978
    %v1981 = vsub.f32 %v1970, %v1979
    %1983 = vrot.lane.b32.xlu0 %v1981, 64
    %v1984 = vpop.permute.xlu0 %1983
    %v1986 = vmul.f32 %v1976, %v1984
    %v1987 = vadd.f32 %v1970, %v1986
    %v1988 = vmul.f32 %v1987, %v594
    %v1989 = vsel %vm89, %v1988, 0.0
    %1990 = vadd.xlane.f32.xlu0 %v1989
    %v1991 = vpop.xlane.xlu0 %1990
    %v1992 = vadd.f32 %v1991, %v604
    %vm1993 = vcmp.eq.s32.totalorder %v52, 6
    %1995 = vset.pattern.permute.xlu0 0
    %1996 = vperm.xlu0 %1995, %v1992
    %v1997 = vpop.permute.xlu0 %1996
    %v1999 = vsel %vm1993, %v1997, %v1768
    %s2000 = scalar_lea.vmem %s0, 56
    %v2001 = vld [vmem:[%s2000] sm:$0xff]
    %v2002 = vpack.c.bf16 %v1878, %v1878
    %v2004 = vsel %vm89, %v2002, 0
    %2006 = vmatprep.subr.bf16.mxu0 0
    %2007 = vmatpush1.bf16.msra.mxu0 %v81
    %2008 = vmatprep.subr.bf16.mxu0 0
    %2009 = vmatpush1.bf16.msra.mxu0 %v82
    %2010 = vmatprep.subr.bf16.mxu0 0
    %2011 = vmatpush1.bf16.msra.mxu0 %v83
    %2012 = vmatprep.subr.bf16.mxu0 0
    %2013 = vmatpush1.bf16.msra.mxu0 %v84
    %2014 = vmatprep.subr.bf16.mxu0 0
    %2015 = vmatpush1.bf16.msra.mxu0 0
    %2016 = vmatprep.subr.bf16.mxu0 0
    %2017 = vmatpush1.bf16.msra.mxu0 0
    %2018 = vmatprep.subr.bf16.mxu0 0
    %2019 = vmatpush1.bf16.msra.mxu0 0
    %2020 = vmatprep.subr.bf16.mxu0 0
    %2021 = vmatpush1.bf16.msra.mxu0 0
    %2022 = vmatprep.subr.bf16.mxu0 0
    %2023 = vmatpush1.bf16.msra.mxu0 0
    %2024 = vmatprep.subr.bf16.mxu0 0
    %2025 = vmatpush1.bf16.msra.mxu0 0
    %2026 = vmatprep.subr.bf16.mxu0 0
    %2027 = vmatpush1.bf16.msra.mxu0 0
    %2028 = vmatprep.subr.bf16.mxu0 0
    %2029 = vmatpush1.bf16.msra.mxu0 0
    %2030 = vmatprep.subr.bf16.mxu0 0
    %2031 = vmatpush1.bf16.msra.mxu0 0
    %2032 = vmatprep.subr.bf16.mxu0 0
    %2033 = vmatpush1.bf16.msra.mxu0 0
    %2034 = vmatprep.subr.bf16.mxu0 0
    %2035 = vmatpush1.bf16.msra.mxu0 0
    %2036 = vmatprep.subr.bf16.mxu0 0
    %2037 = vmatpush1.bf16.msra.mxu0 0
    %2038 = vmatprep.mubr.bf16.mxu0 0
    %2039 = vmatmul.mubr.bf16.gmra.mrb[0].mxu0 %v2004
    %v2040 = vpop.f32.mrb[0].mxu0
    %v2041 = vadd.f32 0.0, %v2040
    %v2042 = vpop.f32.mrb[0].mxu0
    %v2043 = vpop.f32.mrb[0].mxu0
    %v2044 = vpop.f32.mrb[0].mxu0
    %2045 = vdwg.mxu0
    %v2046 = vadd.f32 %v2001, %v2041
    %v2047 = vmul.f32 %v2046, 0.666
    %v2048 = vtanh.pop %v2047
    %v2049 = vmul.f32 %v2048, 1.7159
    %v2050 = vpack.c.bf16 %v2049, %v2049
    %2051 = vmatprep.subr.bf16.mxu0 %v214
    %2052 = vmatpush1.bf16.msra.mxu0 %v213
    %2053 = vmatprep.subr.bf16.mxu0 %v216
    %2054 = vmatpush1.bf16.msra.mxu0 %v215
    %2055 = vmatprep.subr.bf16.mxu0 %v218
    %2056 = vmatpush1.bf16.msra.mxu0 %v217
    %2057 = vmatprep.subr.bf16.mxu0 %v220
    %2058 = vmatpush1.bf16.msra.mxu0 %v219
    %2059 = vmatprep.subr.bf16.mxu0 %v222
    %2060 = vmatpush1.bf16.msra.mxu0 %v221
    %2061 = vmatprep.subr.bf16.mxu0 %v224
    %2062 = vmatpush1.bf16.msra.mxu0 %v223
    %2063 = vmatprep.subr.bf16.mxu0 %v226
    %2064 = vmatpush1.bf16.msra.mxu0 %v225
    %2065 = vmatprep.subr.bf16.mxu0 %v228
    %2066 = vmatpush1.bf16.msra.mxu0 %v227
    %2067 = vmatprep.subr.bf16.mxu0 0
    %2068 = vmatpush1.bf16.msra.mxu0 0
    %2069 = vmatprep.subr.bf16.mxu0 0
    %2070 = vmatpush1.bf16.msra.mxu0 0
    %2071 = vmatprep.subr.bf16.mxu0 0
    %2072 = vmatpush1.bf16.msra.mxu0 0
    %2073 = vmatprep.subr.bf16.mxu0 0
    %2074 = vmatpush1.bf16.msra.mxu0 0
    %2075 = vmatprep.subr.bf16.mxu0 0
    %2076 = vmatpush1.bf16.msra.mxu0 0
    %2077 = vmatprep.subr.bf16.mxu0 0
    %2078 = vmatpush1.bf16.msra.mxu0 0
    %2079 = vmatprep.subr.bf16.mxu0 0
    %2080 = vmatpush1.bf16.msra.mxu0 0
    %2081 = vmatprep.subr.bf16.mxu0 0
    %2082 = vmatpush1.bf16.msra.mxu0 0
    %2083 = vmatprep.mubr.bf16.mxu0 0
    %2084 = vmatmul.mubr.bf16.gmra.mrb[0].mxu0 %v2050
    %v2085 = vpop.f32.mrb[0].mxu0
    %v2086 = vadd.f32 %v158, %v2085
    %v2087 = vpop.f32.mrb[0].mxu0
    %v2088 = vadd.f32 %v162, %v2087
    %v2089 = vpop.f32.mrb[0].mxu0
    %v2090 = vpop.f32.mrb[0].mxu0
    %2091 = vdwg.mxu0
    %v2092 = vtanh.pop %v2086
    %v2093 = vxor.u32 %v2088, 2147483648
    %v2094 = vmul.f32 %v2093, 1.442695
    %v2095 = vpow.pop %v2094
    %v2096 = vadd.f32 %v2095, 1.0
    %v2097 = vrcp.pop %v2096
    %v2098 = vmul.f32 1.0, %v2097
    %2100 = vrot.lane.b32.xlu0 %v2092, 64
    %v2101 = vpop.permute.xlu0 %2100
    %v2103 = vsub.f32 %v2092, %v2101
    %2105 = vrot.lane.b32.xlu0 %v2103, 64
    %v2106 = vpop.permute.xlu0 %2105
    %v2108 = vmul.f32 %v2098, %v2106
    %v2109 = vadd.f32 %v2092, %v2108
    %2111 = vrot.lane.b32.xlu0 %v1987, 64
    %v2112 = vpop.permute.xlu0 %2111
    %v2114 = vsel %vm89, %v2109, %v2112
    %v2115 = vpack.c.bf16 %v2114, %v2114
    %2116 = vmatprep.subr.bf16.mxu0 0
    %2117 = vmatpush1.bf16.msra.mxu0 %v364
    %2118 = vmatprep.subr.bf16.mxu0 0
    %2119 = vmatpush1.bf16.msra.mxu0 %v365
    %2120 = vmatprep.subr.bf16.mxu0 0
    %2121 = vmatpush1.bf16.msra.mxu0 %v366
    %2122 = vmatprep.subr.bf16.mxu0 0
    %2123 = vmatpush1.bf16.msra.mxu0 %v367
    %2124 = vmatprep.subr.bf16.mxu0 0
    %2125 = vmatpush1.bf16.msra.mxu0 %v368
    %2126 = vmatprep.subr.bf16.mxu0 0
    %2127 = vmatpush1.bf16.msra.mxu0 %v369
    %2128 = vmatprep.subr.bf16.mxu0 0
    %2129 = vmatpush1.bf16.msra.mxu0 %v370
    %2130 = vmatprep.subr.bf16.mxu0 0
    %2131 = vmatpush1.bf16.msra.mxu0 %v371
    %2132 = vmatprep.subr.bf16.mxu0 0
    %2133 = vmatpush1.bf16.msra.mxu0 0
    %2134 = vmatprep.subr.bf16.mxu0 0
    %2135 = vmatpush1.bf16.msra.mxu0 0
    %2136 = vmatprep.subr.bf16.mxu0 0
    %2137 = vmatpush1.bf16.msra.mxu0 0
    %2138 = vmatprep.subr.bf16.mxu0 0
    %2139 = vmatpush1.bf16.msra.mxu0 0
    %2140 = vmatprep.subr.bf16.mxu0 0
    %2141 = vmatpush1.bf16.msra.mxu0 0
    %2142 = vmatprep.subr.bf16.mxu0 0
    %2143 = vmatpush1.bf16.msra.mxu0 0
    %2144 = vmatprep.subr.bf16.mxu0 0
    %2145 = vmatpush1.bf16.msra.mxu0 0
    %2146 = vmatprep.subr.bf16.mxu0 0
    %2147 = vmatpush1.bf16.msra.mxu0 0
    %2148 = vmatprep.mubr.bf16.mxu0 0
    %2149 = vmatmul.mubr.bf16.gmra.mrb[0].mxu0 %v2115
    %v2150 = vpop.f32.mrb[0].mxu0
    %v2151 = vadd.f32 %v330, %v2150
    %v2152 = vpop.f32.mrb[0].mxu0
    %v2153 = vpop.f32.mrb[0].mxu0
    %v2154 = vpop.f32.mrb[0].mxu0
    %2155 = vdwg.mxu0
    %v2156 = vmul.f32 %v2151, 0.666
    %v2157 = vtanh.pop %v2156
    %v2158 = vmul.f32 %v2157, 1.7159
    %v2159 = vpack.c.bf16 %v2158, %v2158
    %2160 = vmatprep.subr.bf16.mxu0 %v500
    %2161 = vmatpush1.bf16.msra.mxu0 %v499
    %2162 = vmatprep.subr.bf16.mxu0 %v502
    %2163 = vmatpush1.bf16.msra.mxu0 %v501
    %2164 = vmatprep.subr.bf16.mxu0 %v504
    %2165 = vmatpush1.bf16.msra.mxu0 %v503
    %2166 = vmatprep.subr.bf16.mxu0 %v506
    %2167 = vmatpush1.bf16.msra.mxu0 %v505
    %2168 = vmatprep.subr.bf16.mxu0 %v508
    %2169 = vmatpush1.bf16.msra.mxu0 %v507
    %2170 = vmatprep.subr.bf16.mxu0 %v510
    %2171 = vmatpush1.bf16.msra.mxu0 %v509
    %2172 = vmatprep.subr.bf16.mxu0 %v512
    %2173 = vmatpush1.bf16.msra.mxu0 %v511
    %2174 = vmatprep.subr.bf16.mxu0 %v514
    %2175 = vmatpush1.bf16.msra.mxu0 %v513
    %2176 = vmatprep.subr.bf16.mxu0 0
    %2177 = vmatpush1.bf16.msra.mxu0 0
    %2178 = vmatprep.subr.bf16.mxu0 0
    %2179 = vmatpush1.bf16.msra.mxu0 0
    %2180 = vmatprep.subr.bf16.mxu0 0
    %2181 = vmatpush1.bf16.msra.mxu0 0
    %2182 = vmatprep.subr.bf16.mxu0 0
    %2183 = vmatpush1.bf16.msra.mxu0 0
    %2184 = vmatprep.subr.bf16.mxu0 0
    %2185 = vmatpush1.bf16.msra.mxu0 0
    %2186 = vmatprep.subr.bf16.mxu0 0
    %2187 = vmatpush1.bf16.msra.mxu0 0
    %2188 = vmatprep.subr.bf16.mxu0 0
    %2189 = vmatpush1.bf16.msra.mxu0 0
    %2190 = vmatprep.subr.bf16.mxu0 0
    %2191 = vmatpush1.bf16.msra.mxu0 0
    %2192 = vmatprep.mubr.bf16.mxu0 0
    %2193 = vmatmul.mubr.bf16.gmra.mrb[0].mxu0 %v2159
    %v2194 = vpop.f32.mrb[0].mxu0
    %v2195 = vadd.f32 %v444, %v2194
    %v2196 = vpop.f32.mrb[0].mxu0
    %v2197 = vadd.f32 %v448, %v2196
    %v2198 = vpop.f32.mrb[0].mxu0
    %v2199 = vpop.f32.mrb[0].mxu0
    %2200 = vdwg.mxu0
    %v2201 = vtanh.pop %v2195
    %v2202 = vxor.u32 %v2197, 2147483648
    %v2203 = vmul.f32 %v2202, 1.442695
    %v2204 = vpow.pop %v2203
    %v2205 = vadd.f32 %v2204, 1.0
    %v2206 = vrcp.pop %v2205
    %v2207 = vmul.f32 1.0, %v2206
    %2209 = vrot.lane.b32.xlu0 %v2201, 64
    %v2210 = vpop.permute.xlu0 %2209
    %v2212 = vsub.f32 %v2201, %v2210
    %2214 = vrot.lane.b32.xlu0 %v2212, 64
    %v2215 = vpop.permute.xlu0 %2214
    %v2217 = vmul.f32 %v2207, %v2215
    %v2218 = vadd.f32 %v2201, %v2217
    %v2219 = vmul.f32 %v2218, %v594
    %v2220 = vsel %vm89, %v2219, 0.0
    %2221 = vadd.xlane.f32.xlu0 %v2220
    %v2222 = vpop.xlane.xlu0 %2221
    %v2223 = vadd.f32 %v2222, %v604
    %vm2224 = vcmp.eq.s32.totalorder %v52, 7
    %2226 = vset.pattern.permute.xlu0 0
    %2227 = vperm.xlu0 %2226, %v2223
    %v2228 = vpop.permute.xlu0 %2227
    %v2230 = vsel %vm2224, %v2228, %v1999
    %2231 = vst.msk [vmem:[#allocation2] sm:$0xff] %vm89, %v2109
    %2232 = vst.msk [vmem:[#allocation3] sm:$0xff] %vm89, %v2218
    %vm2233 = vcmask 64512
    %2234 = vst.msk [vmem:[#allocation5] sm:$0xff] %vm2233, %v2230
    // Predicated region
    $region46: #{tpu_custom_call.1} parent=1 // pred_check
      _
    $region47: #{tpu_custom_call.1} parent=1 // pred_check_branch
      %2236 = sbr.rel (0) target = $region49
    $region48: #{tpu_custom_call.1} parent=1 // pred_region
      %s2238 = ssub.s32 128, 128
      %2239 = vsyncadd [#allocation6], %s2238
      %s2241 = sshll.u32 [#allocation5], 4
      %s2242 = int_to_ptr.vmem [resolvable:$true] %s2241
      %2244 = dma.vmem_to_hbm [thread:$0]  %s2242, 128, %s10, [#allocation6]
    $region49: #{tpu_custom_call.1} parent=1 // pred_fallthru
      _
    // Predicated region
    $region50: #{tpu_custom_call.1} parent=1 // pred_check
      _
    $region51: #{tpu_custom_call.1} parent=1 // pred_check_branch
      %2246 = sbr.rel (0) target = $region53
    $region52: #{tpu_custom_call.1} parent=1 // pred_region
      %2247 = dma.done [#allocation6], 128
    $region53: #{tpu_custom_call.1} parent=1 // pred_fallthru
      _
    %2248 = vsyncpa [#allocation6], 1

</llo_original>
